<compile_context>
chip_gen: v7x
topology: tpu7x:2x2x1
jax: 0.10.0
libtpu: 0.0.40
codegen_flags: <defaults>
</compile_context>

<pallas_src>
import jax
import jax.numpy as jnp
from jax import lax
from jax.experimental import pallas as pl
from jax.experimental.pallas import tpu as pltpu

NUM_STOCKS = 503          # module-level constant from portfolio.py
_LANE = 128
_SUBLANE = 8
_NEG_BIG = -1e30          # pad-bias value -> exp() == 0 exactly in f32 softmax

_VMEM = pl.BlockSpec(memory_space=pltpu.MemorySpace.VMEM)


# ----------------------------------------------------------------------------
# Fused kernel
# ----------------------------------------------------------------------------
def make_fused_kernel(num_layers, T, B_pad, B_real, H, renorm_iters=3):
    """Fused DeepPortfolio forward kernel for static (L, T, B_pad, B_real, H)."""
    four_h = 4 * H

    def kernel(*refs):
        # inputs: x2, (w_ih, w_hh, b) per layer, w_out, b_out
        x2_ref = refs[0]                                   # (T*B_pad, D_pad)
        layer_refs = refs[1:1 + 3 * num_layers]
        w_out_ref = refs[1 + 3 * num_layers]               # (L*H, S_pad)
        b_out_ref = refs[2 + 3 * num_layers]               # (1, S_pad)
        out_ref = refs[3 + 3 * num_layers]                 # (B_pad, S_pad)

        # Lane mask selecting the 'g' (cell-candidate, tanh) gate — hoisted.
        lane = lax.broadcasted_iota(jnp.int32, (B_pad, four_h), 1)
        g_mask = (lane >= 2 * H) & (lane < 3 * H)

        def lstm_cell(gates, c):
            # two full-128-lane transcendental passes + one lane-select instead
            # of four narrow (H-lane) transcendental slices
            act = jnp.where(g_mask, jnp.tanh(gates), jax.nn.sigmoid(gates))
            i_g = act[:, 0 * H:1 * H]
            f_g = act[:, 1 * H:2 * H]
            g_g = act[:, 2 * H:3 * H]
            o_g = act[:, 3 * H:4 * H]
            c_new = f_g * c + i_g * g_g
            h_new = o_g * jnp.tanh(c_new)
            return h_new, c_new

        # ---- hoisted layer-0 input projection: ONE big MXU matmul over the
        #      whole (T*B_pad, D_pad) input, bias (b_ih + b_hh) folded in.
        #      Kept as a traced value (8 vregs) — no VMEM scratch round trip.
        gx0 = (jnp.dot(x2_ref[...], layer_refs[0][...],
                       preferred_element_type=jnp.float32)
               + layer_refs[2][...])                        # (T*B_pad, 4H)

        # loop-invariant weight loads (hoisted out of the recurrence)
        w_hh = [layer_refs[3 * l + 1][...] for l in range(num_layers)]
        w_ih = [None] + [layer_refs[3 * l + 0][...] for l in range(1, num_layers)]
        b_g = [None] + [layer_refs[3 * l + 2][...] for l in range(1, num_layers)]

        h = [jnp.zeros((B_pad, H), jnp.float32) for _ in range(num_layers)]
        c = [jnp.zeros((B_pad, H), jnp.float32) for _ in range(num_layers)]

        # ---- wavefront-interleaved recurrence (fully unrolled, static slices)
        # At wavefront step s, layer l advances to time t = s - l; it consumes
        # layer l-1's time-t output, which was produced at wavefront step s-1.
        # Layers are visited in decreasing order so h[l-1] is read before it is
        # overwritten, keeping num_layers independent dependence chains live.
        for s in range(T + num_layers - 1):
            for l in reversed(range(num_layers)):
                t = s - l
                if not (0 <= t < T):
                    continue
                if l == 0:
                    gates = (gx0[t * B_pad:(t + 1) * B_pad, :]
                             + jnp.dot(h[0], w_hh[0],
                                       preferred_element_type=jnp.float32))
                else:
                    gates = (jnp.dot(h[l - 1], w_ih[l],
                                     preferred_element_type=jnp.float32)
                             + b_g[l]
                             + jnp.dot(h[l], w_hh[l],
                                       preferred_element_type=jnp.float32))
                h[l], c[l] = lstm_cell(gates, c[l])

        # ---- head: Linear(concat_l h_n[l] -> S_pad) as per-layer partial
        #      matmuls against row slices of W_out (no lane concat).  Padded
        #      columns carry bias -1e30 so exp()==0 and never affect
        #      max/sum/output.
        logits = b_out_ref[...]                             # (1, S_pad)
        for l in range(num_layers):
            logits = logits + jnp.dot(
                h[l], w_out_ref[pl.ds(l * H, H), :],
                preferred_element_type=jnp.float32)         # (B_pad, S_pad)

        m = jnp.max(logits, axis=-1, keepdims=True)
        e = jnp.exp(logits - m)
        p = e / jnp.sum(e, axis=-1, keepdims=True)

        # ---- "while p.sum() > 1: p /= p.sum()" — sum restricted to the REAL
        # batch rows (pad rows are sliced off in the wrapper; pad columns are
        # exactly 0).  Guarded divides replicate the while semantics to within
        # an ulp; converges in <= 2 iterations in practice.
        row = lax.broadcasted_iota(jnp.int32, (B_pad, p.shape[1]), 0)
        real_rows = row < B_real
        for _ in range(renorm_iters):
            s_tot = jnp.sum(jnp.where(real_rows, p, 0.0))
            p = p / jnp.where(s_tot > 1.0, s_tot, jnp.float32(1.0))

        out_ref[...] = p

    return kernel


def _cost_estimate(num_layers, T, B, D, H, S_pad):
    four_h = 4 * H
    flops = 2 * T * B * D * four_h                        # hoisted layer-0 input proj
    flops += 2 * T * B * H * four_h * num_layers          # recurrent projections
    flops += 2 * T * B * H * four_h * (num_layers - 1)    # per-step input proj, l > 0
    flops += 2 * B * num_layers * H * S_pad               # head linear
    bytes_accessed = 4 * (T * B * D + B * S_pad)
    bytes_accessed += 4 * (D + H + 1) * four_h
    bytes_accessed += 4 * (num_layers - 1) * (2 * H + 1) * four_h
    bytes_accessed += 4 * (num_layers * H + 1) * S_pad
    transcendentals = num_layers * T * B * (2 * four_h + H) + B * S_pad
    return pl.CostEstimate(flops=flops, transcendentals=transcendentals,
                           bytes_accessed=bytes_accessed)


# ----------------------------------------------------------------------------
# Forward wrapper
# ----------------------------------------------------------------------------
@jax.jit
def deep_portfolio_forward(params, x):
    """x: (batch, window, 2*num_stocks) float32 -> (batch, num_stocks)."""
    B, T, D = x.shape
    lstm = params["lstm"]
    L = len(lstm)
    H = lstm[0]["w_hh"].shape[0]
    S = params["linear"]["w_t"].shape[1]
    S_pad = pl.cdiv(S, _LANE) * _LANE
    D_pad = pl.cdiv(D, _LANE) * _LANE
    B_pad = pl.cdiv(B, _SUBLANE) * _SUBLANE

    # Pad batch to the vreg sublane width (2 -> 8) and features to a lane
    # multiple (1006 -> 1024): all per-timestep tiles become full-sublane and
    # the big matmul K becomes 128-aligned. Zero padding does not change math.
    x_f = jnp.pad(x.astype(jnp.float32),
                  ((0, B_pad - B), (0, 0), (0, D_pad - D)))
    # time-major, flatten (T, B_pad) -> row t*B_pad + b, so the in-kernel
    # layer-0 input projection is one large matmul.
    x2 = jnp.transpose(x_f, (1, 0, 2)).reshape(T * B_pad, D_pad)

    args = [x2]
    for li, lp in enumerate(lstm):
        w_ih = lp["w_ih"].astype(jnp.float32)
        if li == 0 and D_pad != D:
            w_ih = jnp.pad(w_ih, ((0, D_pad - D), (0, 0)))  # zero rows: no-op
        args.extend([w_ih, lp["w_hh"].astype(jnp.float32),
                     lp["b"].astype(jnp.float32)])

    # lane-dense head: pad weight columns with 0, bias columns with -1e30
    w_out = params["linear"]["w_t"].astype(jnp.float32)
    b_out = params["linear"]["b"].astype(jnp.float32)
    if S_pad != S:
        w_out = jnp.pad(w_out, ((0, 0), (0, S_pad - S)))
        b_out = jnp.pad(b_out, ((0, 0), (0, S_pad - S)),
                        constant_values=_NEG_BIG)
    args.extend([w_out, b_out])

    out_pad = pl.pallas_call(
        make_fused_kernel(L, T, B_pad, B, H),
        out_shape=jax.ShapeDtypeStruct((B_pad, S_pad), jnp.float32),
        in_specs=[_VMEM] * len(args),
        out_specs=_VMEM,
        cost_estimate=_cost_estimate(L, T, B_pad, D_pad, H, S_pad),
    )(*args)

    # Renorm ("while sum > 1") already done in-kernel over the real rows;
    # just strip the batch / stock padding.
    return out_pad[:B, :S]


# ----------------------------------------------------------------------------
# Parameters (synthetic, matching nn.LSTM / nn.Linear shapes)
# ----------------------------------------------------------------------------
def init_params(key, num_layers, hidden_size, input_size, num_stocks):
    params = {"lstm": [], "linear": {}}
    k = hidden_size ** -0.5
    for layer in range(num_layers):
        d_in = input_size if layer == 0 else hidden_size
        key, k1, k2, k3, k4 = jax.random.split(key, 5)
        # PyTorch stores weight_ih as (4H, D_in); we keep the transposed layout.
        w_ih = jax.random.uniform(k1, (d_in, 4 * hidden_size), jnp.float32, -k, k)
        w_hh = jax.random.uniform(k2, (hidden_size, 4 * hidden_size), jnp.float32, -k, k)
        b_ih = jax.random.uniform(k3, (4 * hidden_size,), jnp.float32, -k, k)
        b_hh = jax.random.uniform(k4, (4 * hidden_size,), jnp.float32, -k, k)
        params["lstm"].append(
            {"w_ih": w_ih, "w_hh": w_hh, "b": (b_ih + b_hh)[None, :]}
        )
    in_feat = num_layers * hidden_size
    kl = in_feat ** -0.5
    key, k1, k2 = jax.random.split(key, 3)
    params["linear"]["w_t"] = jax.random.uniform(
        k1, (in_feat, num_stocks), jnp.float32, -kl, kl)   # transposed nn.Linear weight
    params["linear"]["b"] = jax.random.uniform(
        k2, (1, num_stocks), jnp.float32, -kl, kl)
    return params


# ----------------------------------------------------------------------------
if __name__ == "__main__":
    # Small but module-consistent configuration.
    num_layers = 2
    hidden_size = 32
    window_size = 8
    batch = 2
    input_size = NUM_STOCKS * 2   # 1006, fixed by the module

    # TODO(synk): nn.LSTM inter-layer dropout is train-time only (dropout=0
    # here / eval forward), so it is intentionally not implemented.

    key = jax.random.PRNGKey(0)
    key, pkey, xkey = jax.random.split(key, 3)

    params = init_params(pkey, num_layers, hidden_size, input_size, NUM_STOCKS)
    x = jax.random.normal(xkey, (batch, window_size, input_size), dtype=jnp.float32)

    out = deep_portfolio_forward(params, x)
    out = jax.block_until_ready(out)

    assert out.shape == (batch, NUM_STOCKS)
    assert bool(jnp.all(jnp.isfinite(out)))
    assert float(jnp.sum(out)) <= 1.0 + 1e-5

    print("KERNEL_OK")
</pallas_src>

<mosaic_0001>
module attributes {stable_mosaic.version = 11 : i64} {
  func.func @kernel(%arg0: memref<64x1024xf32, #tpu.memory_space<vmem>>, %arg1: memref<1024x128xf32, #tpu.memory_space<vmem>>, %arg2: memref<32x128xf32, #tpu.memory_space<vmem>>, %arg3: memref<1x128xf32, #tpu.memory_space<vmem>>, %arg4: memref<32x128xf32, #tpu.memory_space<vmem>>, %arg5: memref<32x128xf32, #tpu.memory_space<vmem>>, %arg6: memref<1x128xf32, #tpu.memory_space<vmem>>, %arg7: memref<64x512xf32, #tpu.memory_space<vmem>>, %arg8: memref<1x512xf32, #tpu.memory_space<vmem>>, %arg9: memref<8x512xf32, #tpu.memory_space<vmem>>) attributes {dimension_semantics = [], scalar_prefetch = 0 : i64, scratch_operands = 0 : i64, tpu.core_type = #tpu.core_type<tc>} {
    %0 = tpu.iota {dimensions = array<i32: 1>} : vector<8x128xi32>
    %c64_i32 = arith.constant 64 : i32
    %1 = vector.broadcast %c64_i32 : i32 to vector<8x128xi32>
    %2 = arith.cmpi sge, %0, %1 : vector<8x128xi32>
    %c96_i32 = arith.constant 96 : i32
    %3 = vector.broadcast %c96_i32 : i32 to vector<8x128xi32>
    %4 = arith.cmpi slt, %0, %3 : vector<8x128xi32>
    %5 = arith.andi %2, %4 : vector<8x128xi1>
    %c0 = arith.constant 0 : index
    %c0_0 = arith.constant 0 : index
    %6 = vector.load %arg0[%c0, %c0_0] : memref<64x1024xf32, #tpu.memory_space<vmem>>, vector<64x1024xf32>
    %c0_1 = arith.constant 0 : index
    %c0_2 = arith.constant 0 : index
    %7 = vector.load %arg1[%c0_1, %c0_2] : memref<1024x128xf32, #tpu.memory_space<vmem>>, vector<1024x128xf32>
    %cst = arith.constant dense<0.000000e+00> : vector<64x128xf32>
    %8 = tpu.matmul %6, %7, %cst {dimension_numbers = #tpu.dot_dimension_numbers<[1], [0], [0], [1], [0, 0, 1, 1], [], []>} : vector<64x1024xf32>, vector<1024x128xf32>, vector<64x128xf32> -> vector<64x128xf32>
    %c0_3 = arith.constant 0 : index
    %c0_4 = arith.constant 0 : index
    %9 = vector.load %arg3[%c0_3, %c0_4] : memref<1x128xf32, #tpu.memory_space<vmem>>, vector<1x128xf32>
    %10 = vector.broadcast %9 : vector<1x128xf32> to vector<64x128xf32>
    %11 = arith.addf %8, %10 : vector<64x128xf32>
    %c0_5 = arith.constant 0 : index
    %c0_6 = arith.constant 0 : index
    %12 = vector.load %arg2[%c0_5, %c0_6] : memref<32x128xf32, #tpu.memory_space<vmem>>, vector<32x128xf32>
    %c0_7 = arith.constant 0 : index
    %c0_8 = arith.constant 0 : index
    %13 = vector.load %arg5[%c0_7, %c0_8] : memref<32x128xf32, #tpu.memory_space<vmem>>, vector<32x128xf32>
    %c0_9 = arith.constant 0 : index
    %c0_10 = arith.constant 0 : index
    %14 = vector.load %arg4[%c0_9, %c0_10] : memref<32x128xf32, #tpu.memory_space<vmem>>, vector<32x128xf32>
    %c0_11 = arith.constant 0 : index
    %c0_12 = arith.constant 0 : index
    %15 = vector.load %arg6[%c0_11, %c0_12] : memref<1x128xf32, #tpu.memory_space<vmem>>, vector<1x128xf32>
    %cst_13 = arith.constant 0.000000e+00 : f32
    %16 = vector.broadcast %cst_13 : f32 to vector<8x32xf32>
    %cst_14 = arith.constant 0.000000e+00 : f32
    %17 = vector.broadcast %cst_14 : f32 to vector<8x32xf32>
    %cst_15 = arith.constant 0.000000e+00 : f32
    %18 = vector.broadcast %cst_15 : f32 to vector<8x32xf32>
    %cst_16 = arith.constant 0.000000e+00 : f32
    %19 = vector.broadcast %cst_16 : f32 to vector<8x32xf32>
    %20 = vector.extract_strided_slice %11 {offsets = [0, 0], sizes = [8, 128], strides = [1, 1]} : vector<64x128xf32> to vector<8x128xf32>
    %cst_17 = arith.constant dense<0.000000e+00> : vector<8x128xf32>
    %21 = tpu.matmul %16, %12, %cst_17 {dimension_numbers = #tpu.dot_dimension_numbers<[1], [0], [0], [1], [0, 0, 1, 1], [], []>} : vector<8x32xf32>, vector<32x128xf32>, vector<8x128xf32> -> vector<8x128xf32>
    %22 = arith.addf %20, %21 : vector<8x128xf32>
    %23 = math.tanh %22 : vector<8x128xf32>
    %24 = arith.negf %22 : vector<8x128xf32>
    %25 = math.exp %24 : vector<8x128xf32>
    %cst_18 = arith.constant 1.000000e+00 : f32
    %26 = vector.broadcast %cst_18 : f32 to vector<8x128xf32>
    %27 = arith.addf %26, %25 : vector<8x128xf32>
    %28 = arith.divf %26, %27 : vector<8x128xf32>
    %29 = arith.select %5, %23, %28 : vector<8x128xi1>, vector<8x128xf32>
    %30 = vector.extract_strided_slice %29 {offsets = [0, 0], sizes = [8, 32], strides = [1, 1]} : vector<8x128xf32> to vector<8x32xf32>
    %31 = vector.extract_strided_slice %29 {offsets = [0, 32], sizes = [8, 32], strides = [1, 1]} : vector<8x128xf32> to vector<8x32xf32>
    %32 = vector.extract_strided_slice %29 {offsets = [0, 64], sizes = [8, 32], strides = [1, 1]} : vector<8x128xf32> to vector<8x32xf32>
    %33 = vector.extract_strided_slice %29 {offsets = [0, 96], sizes = [8, 32], strides = [1, 1]} : vector<8x128xf32> to vector<8x32xf32>
    %34 = arith.mulf %31, %18 : vector<8x32xf32>
    %35 = arith.mulf %30, %32 : vector<8x32xf32>
    %36 = arith.addf %34, %35 : vector<8x32xf32>
    %37 = math.tanh %36 : vector<8x32xf32>
    %38 = arith.mulf %33, %37 : vector<8x32xf32>
    %cst_19 = arith.constant dense<0.000000e+00> : vector<8x128xf32>
    %39 = tpu.matmul %38, %14, %cst_19 {dimension_numbers = #tpu.dot_dimension_numbers<[1], [0], [0], [1], [0, 0, 1, 1], [], []>} : vector<8x32xf32>, vector<32x128xf32>, vector<8x128xf32> -> vector<8x128xf32>
    %40 = vector.broadcast %15 : vector<1x128xf32> to vector<8x128xf32>
    %41 = arith.addf %39, %40 : vector<8x128xf32>
    %cst_20 = arith.constant dense<0.000000e+00> : vector<8x128xf32>
    %42 = tpu.matmul %17, %13, %cst_20 {dimension_numbers = #tpu.dot_dimension_numbers<[1], [0], [0], [1], [0, 0, 1, 1], [], []>} : vector<8x32xf32>, vector<32x128xf32>, vector<8x128xf32> -> vector<8x128xf32>
    %43 = arith.addf %41, %42 : vector<8x128xf32>
    %44 = math.tanh %43 : vector<8x128xf32>
    %45 = arith.negf %43 : vector<8x128xf32>
    %46 = math.exp %45 : vector<8x128xf32>
    %cst_21 = arith.constant 1.000000e+00 : f32
    %47 = vector.broadcast %cst_21 : f32 to vector<8x128xf32>
    %48 = arith.addf %47, %46 : vector<8x128xf32>
    %49 = arith.divf %47, %48 : vector<8x128xf32>
    %50 = arith.select %5, %44, %49 : vector<8x128xi1>, vector<8x128xf32>
    %51 = vector.extract_strided_slice %50 {offsets = [0, 0], sizes = [8, 32], strides = [1, 1]} : vector<8x128xf32> to vector<8x32xf32>
    %52 = vector.extract_strided_slice %50 {offsets = [0, 32], sizes = [8, 32], strides = [1, 1]} : vector<8x128xf32> to vector<8x32xf32>
    %53 = vector.extract_strided_slice %50 {offsets = [0, 64], sizes = [8, 32], strides = [1, 1]} : vector<8x128xf32> to vector<8x32xf32>
    %54 = vector.extract_strided_slice %50 {offsets = [0, 96], sizes = [8, 32], strides = [1, 1]} : vector<8x128xf32> to vector<8x32xf32>
    %55 = arith.mulf %52, %19 : vector<8x32xf32>
    %56 = arith.mulf %51, %53 : vector<8x32xf32>
    %57 = arith.addf %55, %56 : vector<8x32xf32>
    %58 = math.tanh %57 : vector<8x32xf32>
    %59 = arith.mulf %54, %58 : vector<8x32xf32>
    %60 = vector.extract_strided_slice %11 {offsets = [8, 0], sizes = [8, 128], strides = [1, 1]} : vector<64x128xf32> to vector<8x128xf32>
    %cst_22 = arith.constant dense<0.000000e+00> : vector<8x128xf32>
    %61 = tpu.matmul %38, %12, %cst_22 {dimension_numbers = #tpu.dot_dimension_numbers<[1], [0], [0], [1], [0, 0, 1, 1], [], []>} : vector<8x32xf32>, vector<32x128xf32>, vector<8x128xf32> -> vector<8x128xf32>
    %62 = arith.addf %60, %61 : vector<8x128xf32>
    %63 = math.tanh %62 : vector<8x128xf32>
    %64 = arith.negf %62 : vector<8x128xf32>
    %65 = math.exp %64 : vector<8x128xf32>
    %cst_23 = arith.constant 1.000000e+00 : f32
    %66 = vector.broadcast %cst_23 : f32 to vector<8x128xf32>
    %67 = arith.addf %66, %65 : vector<8x128xf32>
    %68 = arith.divf %66, %67 : vector<8x128xf32>
    %69 = arith.select %5, %63, %68 : vector<8x128xi1>, vector<8x128xf32>
    %70 = vector.extract_strided_slice %69 {offsets = [0, 0], sizes = [8, 32], strides = [1, 1]} : vector<8x128xf32> to vector<8x32xf32>
    %71 = vector.extract_strided_slice %69 {offsets = [0, 32], sizes = [8, 32], strides = [1, 1]} : vector<8x128xf32> to vector<8x32xf32>
    %72 = vector.extract_strided_slice %69 {offsets = [0, 64], sizes = [8, 32], strides = [1, 1]} : vector<8x128xf32> to vector<8x32xf32>
    %73 = vector.extract_strided_slice %69 {offsets = [0, 96], sizes = [8, 32], strides = [1, 1]} : vector<8x128xf32> to vector<8x32xf32>
    %74 = arith.mulf %71, %36 : vector<8x32xf32>
    %75 = arith.mulf %70, %72 : vector<8x32xf32>
    %76 = arith.addf %74, %75 : vector<8x32xf32>
    %77 = math.tanh %76 : vector<8x32xf32>
    %78 = arith.mulf %73, %77 : vector<8x32xf32>
    %cst_24 = arith.constant dense<0.000000e+00> : vector<8x128xf32>
    %79 = tpu.matmul %78, %14, %cst_24 {dimension_numbers = #tpu.dot_dimension_numbers<[1], [0], [0], [1], [0, 0, 1, 1], [], []>} : vector<8x32xf32>, vector<32x128xf32>, vector<8x128xf32> -> vector<8x128xf32>
    %80 = vector.broadcast %15 : vector<1x128xf32> to vector<8x128xf32>
    %81 = arith.addf %79, %80 : vector<8x128xf32>
    %cst_25 = arith.constant dense<0.000000e+00> : vector<8x128xf32>
    %82 = tpu.matmul %59, %13, %cst_25 {dimension_numbers = #tpu.dot_dimension_numbers<[1], [0], [0], [1], [0, 0, 1, 1], [], []>} : vector<8x32xf32>, vector<32x128xf32>, vector<8x128xf32> -> vector<8x128xf32>
    %83 = arith.addf %81, %82 : vector<8x128xf32>
    %84 = math.tanh %83 : vector<8x128xf32>
    %85 = arith.negf %83 : vector<8x128xf32>
    %86 = math.exp %85 : vector<8x128xf32>
    %cst_26 = arith.constant 1.000000e+00 : f32
    %87 = vector.broadcast %cst_26 : f32 to vector<8x128xf32>
    %88 = arith.addf %87, %86 : vector<8x128xf32>
    %89 = arith.divf %87, %88 : vector<8x128xf32>
    %90 = arith.select %5, %84, %89 : vector<8x128xi1>, vector<8x128xf32>
    %91 = vector.extract_strided_slice %90 {offsets = [0, 0], sizes = [8, 32], strides = [1, 1]} : vector<8x128xf32> to vector<8x32xf32>
    %92 = vector.extract_strided_slice %90 {offsets = [0, 32], sizes = [8, 32], strides = [1, 1]} : vector<8x128xf32> to vector<8x32xf32>
    %93 = vector.extract_strided_slice %90 {offsets = [0, 64], sizes = [8, 32], strides = [1, 1]} : vector<8x128xf32> to vector<8x32xf32>
    %94 = vector.extract_strided_slice %90 {offsets = [0, 96], sizes = [8, 32], strides = [1, 1]} : vector<8x128xf32> to vector<8x32xf32>
    %95 = arith.mulf %92, %57 : vector<8x32xf32>
    %96 = arith.mulf %91, %93 : vector<8x32xf32>
    %97 = arith.addf %95, %96 : vector<8x32xf32>
    %98 = math.tanh %97 : vector<8x32xf32>
    %99 = arith.mulf %94, %98 : vector<8x32xf32>
    %100 = vector.extract_strided_slice %11 {offsets = [16, 0], sizes = [8, 128], strides = [1, 1]} : vector<64x128xf32> to vector<8x128xf32>
    %cst_27 = arith.constant dense<0.000000e+00> : vector<8x128xf32>
    %101 = tpu.matmul %78, %12, %cst_27 {dimension_numbers = #tpu.dot_dimension_numbers<[1], [0], [0], [1], [0, 0, 1, 1], [], []>} : vector<8x32xf32>, vector<32x128xf32>, vector<8x128xf32> -> vector<8x128xf32>
    %102 = arith.addf %100, %101 : vector<8x128xf32>
    %103 = math.tanh %102 : vector<8x128xf32>
    %104 = arith.negf %102 : vector<8x128xf32>
    %105 = math.exp %104 : vector<8x128xf32>
    %cst_28 = arith.constant 1.000000e+00 : f32
    %106 = vector.broadcast %cst_28 : f32 to vector<8x128xf32>
    %107 = arith.addf %106, %105 : vector<8x128xf32>
    %108 = arith.divf %106, %107 : vector<8x128xf32>
    %109 = arith.select %5, %103, %108 : vector<8x128xi1>, vector<8x128xf32>
    %110 = vector.extract_strided_slice %109 {offsets = [0, 0], sizes = [8, 32], strides = [1, 1]} : vector<8x128xf32> to vector<8x32xf32>
    %111 = vector.extract_strided_slice %109 {offsets = [0, 32], sizes = [8, 32], strides = [1, 1]} : vector<8x128xf32> to vector<8x32xf32>
    %112 = vector.extract_strided_slice %109 {offsets = [0, 64], sizes = [8, 32], strides = [1, 1]} : vector<8x128xf32> to vector<8x32xf32>
    %113 = vector.extract_strided_slice %109 {offsets = [0, 96], sizes = [8, 32], strides = [1, 1]} : vector<8x128xf32> to vector<8x32xf32>
    %114 = arith.mulf %111, %76 : vector<8x32xf32>
    %115 = arith.mulf %110, %112 : vector<8x32xf32>
    %116 = arith.addf %114, %115 : vector<8x32xf32>
    %117 = math.tanh %116 : vector<8x32xf32>
    %118 = arith.mulf %113, %117 : vector<8x32xf32>
    %cst_29 = arith.constant dense<0.000000e+00> : vector<8x128xf32>
    %119 = tpu.matmul %118, %14, %cst_29 {dimension_numbers = #tpu.dot_dimension_numbers<[1], [0], [0], [1], [0, 0, 1, 1], [], []>} : vector<8x32xf32>, vector<32x128xf32>, vector<8x128xf32> -> vector<8x128xf32>
    %120 = vector.broadcast %15 : vector<1x128xf32> to vector<8x128xf32>
    %121 = arith.addf %119, %120 : vector<8x128xf32>
    %cst_30 = arith.constant dense<0.000000e+00> : vector<8x128xf32>
    %122 = tpu.matmul %99, %13, %cst_30 {dimension_numbers = #tpu.dot_dimension_numbers<[1], [0], [0], [1], [0, 0, 1, 1], [], []>} : vector<8x32xf32>, vector<32x128xf32>, vector<8x128xf32> -> vector<8x128xf32>
    %123 = arith.addf %121, %122 : vector<8x128xf32>
    %124 = math.tanh %123 : vector<8x128xf32>
    %125 = arith.negf %123 : vector<8x128xf32>
    %126 = math.exp %125 : vector<8x128xf32>
    %cst_31 = arith.constant 1.000000e+00 : f32
    %127 = vector.broadcast %cst_31 : f32 to vector<8x128xf32>
    %128 = arith.addf %127, %126 : vector<8x128xf32>
    %129 = arith.divf %127, %128 : vector<8x128xf32>
    %130 = arith.select %5, %124, %129 : vector<8x128xi1>, vector<8x128xf32>
    %131 = vector.extract_strided_slice %130 {offsets = [0, 0], sizes = [8, 32], strides = [1, 1]} : vector<8x128xf32> to vector<8x32xf32>
    %132 = vector.extract_strided_slice %130 {offsets = [0, 32], sizes = [8, 32], strides = [1, 1]} : vector<8x128xf32> to vector<8x32xf32>
    %133 = vector.extract_strided_slice %130 {offsets = [0, 64], sizes = [8, 32], strides = [1, 1]} : vector<8x128xf32> to vector<8x32xf32>
    %134 = vector.extract_strided_slice %130 {offsets = [0, 96], sizes = [8, 32], strides = [1, 1]} : vector<8x128xf32> to vector<8x32xf32>
    %135 = arith.mulf %132, %97 : vector<8x32xf32>
    %136 = arith.mulf %131, %133 : vector<8x32xf32>
    %137 = arith.addf %135, %136 : vector<8x32xf32>
    %138 = math.tanh %137 : vector<8x32xf32>
    %139 = arith.mulf %134, %138 : vector<8x32xf32>
    %140 = vector.extract_strided_slice %11 {offsets = [24, 0], sizes = [8, 128], strides = [1, 1]} : vector<64x128xf32> to vector<8x128xf32>
    %cst_32 = arith.constant dense<0.000000e+00> : vector<8x128xf32>
    %141 = tpu.matmul %118, %12, %cst_32 {dimension_numbers = #tpu.dot_dimension_numbers<[1], [0], [0], [1], [0, 0, 1, 1], [], []>} : vector<8x32xf32>, vector<32x128xf32>, vector<8x128xf32> -> vector<8x128xf32>
    %142 = arith.addf %140, %141 : vector<8x128xf32>
    %143 = math.tanh %142 : vector<8x128xf32>
    %144 = arith.negf %142 : vector<8x128xf32>
    %145 = math.exp %144 : vector<8x128xf32>
    %cst_33 = arith.constant 1.000000e+00 : f32
    %146 = vector.broadcast %cst_33 : f32 to vector<8x128xf32>
    %147 = arith.addf %146, %145 : vector<8x128xf32>
    %148 = arith.divf %146, %147 : vector<8x128xf32>
    %149 = arith.select %5, %143, %148 : vector<8x128xi1>, vector<8x128xf32>
    %150 = vector.extract_strided_slice %149 {offsets = [0, 0], sizes = [8, 32], strides = [1, 1]} : vector<8x128xf32> to vector<8x32xf32>
    %151 = vector.extract_strided_slice %149 {offsets = [0, 32], sizes = [8, 32], strides = [1, 1]} : vector<8x128xf32> to vector<8x32xf32>
    %152 = vector.extract_strided_slice %149 {offsets = [0, 64], sizes = [8, 32], strides = [1, 1]} : vector<8x128xf32> to vector<8x32xf32>
    %153 = vector.extract_strided_slice %149 {offsets = [0, 96], sizes = [8, 32], strides = [1, 1]} : vector<8x128xf32> to vector<8x32xf32>
    %154 = arith.mulf %151, %116 : vector<8x32xf32>
    %155 = arith.mulf %150, %152 : vector<8x32xf32>
    %156 = arith.addf %154, %155 : vector<8x32xf32>
    %157 = math.tanh %156 : vector<8x32xf32>
    %158 = arith.mulf %153, %157 : vector<8x32xf32>
    %cst_34 = arith.constant dense<0.000000e+00> : vector<8x128xf32>
    %159 = tpu.matmul %158, %14, %cst_34 {dimension_numbers = #tpu.dot_dimension_numbers<[1], [0], [0], [1], [0, 0, 1, 1], [], []>} : vector<8x32xf32>, vector<32x128xf32>, vector<8x128xf32> -> vector<8x128xf32>
    %160 = vector.broadcast %15 : vector<1x128xf32> to vector<8x128xf32>
    %161 = arith.addf %159, %160 : vector<8x128xf32>
    %cst_35 = arith.constant dense<0.000000e+00> : vector<8x128xf32>
    %162 = tpu.matmul %139, %13, %cst_35 {dimension_numbers = #tpu.dot_dimension_numbers<[1], [0], [0], [1], [0, 0, 1, 1], [], []>} : vector<8x32xf32>, vector<32x128xf32>, vector<8x128xf32> -> vector<8x128xf32>
    %163 = arith.addf %161, %162 : vector<8x128xf32>
    %164 = math.tanh %163 : vector<8x128xf32>
    %165 = arith.negf %163 : vector<8x128xf32>
    %166 = math.exp %165 : vector<8x128xf32>
    %cst_36 = arith.constant 1.000000e+00 : f32
    %167 = vector.broadcast %cst_36 : f32 to vector<8x128xf32>
    %168 = arith.addf %167, %166 : vector<8x128xf32>
    %169 = arith.divf %167, %168 : vector<8x128xf32>
    %170 = arith.select %5, %164, %169 : vector<8x128xi1>, vector<8x128xf32>
    %171 = vector.extract_strided_slice %170 {offsets = [0, 0], sizes = [8, 32], strides = [1, 1]} : vector<8x128xf32> to vector<8x32xf32>
    %172 = vector.extract_strided_slice %170 {offsets = [0, 32], sizes = [8, 32], strides = [1, 1]} : vector<8x128xf32> to vector<8x32xf32>
    %173 = vector.extract_strided_slice %170 {offsets = [0, 64], sizes = [8, 32], strides = [1, 1]} : vector<8x128xf32> to vector<8x32xf32>
    %174 = vector.extract_strided_slice %170 {offsets = [0, 96], sizes = [8, 32], strides = [1, 1]} : vector<8x128xf32> to vector<8x32xf32>
    %175 = arith.mulf %172, %137 : vector<8x32xf32>
    %176 = arith.mulf %171, %173 : vector<8x32xf32>
    %177 = arith.addf %175, %176 : vector<8x32xf32>
    %178 = math.tanh %177 : vector<8x32xf32>
    %179 = arith.mulf %174, %178 : vector<8x32xf32>
    %180 = vector.extract_strided_slice %11 {offsets = [32, 0], sizes = [8, 128], strides = [1, 1]} : vector<64x128xf32> to vector<8x128xf32>
    %cst_37 = arith.constant dense<0.000000e+00> : vector<8x128xf32>
    %181 = tpu.matmul %158, %12, %cst_37 {dimension_numbers = #tpu.dot_dimension_numbers<[1], [0], [0], [1], [0, 0, 1, 1], [], []>} : vector<8x32xf32>, vector<32x128xf32>, vector<8x128xf32> -> vector<8x128xf32>
    %182 = arith.addf %180, %181 : vector<8x128xf32>
    %183 = math.tanh %182 : vector<8x128xf32>
    %184 = arith.negf %182 : vector<8x128xf32>
    %185 = math.exp %184 : vector<8x128xf32>
    %cst_38 = arith.constant 1.000000e+00 : f32
    %186 = vector.broadcast %cst_38 : f32 to vector<8x128xf32>
    %187 = arith.addf %186, %185 : vector<8x128xf32>
    %188 = arith.divf %186, %187 : vector<8x128xf32>
    %189 = arith.select %5, %183, %188 : vector<8x128xi1>, vector<8x128xf32>
    %190 = vector.extract_strided_slice %189 {offsets = [0, 0], sizes = [8, 32], strides = [1, 1]} : vector<8x128xf32> to vector<8x32xf32>
    %191 = vector.extract_strided_slice %189 {offsets = [0, 32], sizes = [8, 32], strides = [1, 1]} : vector<8x128xf32> to vector<8x32xf32>
    %192 = vector.extract_strided_slice %189 {offsets = [0, 64], sizes = [8, 32], strides = [1, 1]} : vector<8x128xf32> to vector<8x32xf32>
    %193 = vector.extract_strided_slice %189 {offsets = [0, 96], sizes = [8, 32], strides = [1, 1]} : vector<8x128xf32> to vector<8x32xf32>
    %194 = arith.mulf %191, %156 : vector<8x32xf32>
    %195 = arith.mulf %190, %192 : vector<8x32xf32>
    %196 = arith.addf %194, %195 : vector<8x32xf32>
    %197 = math.tanh %196 : vector<8x32xf32>
    %198 = arith.mulf %193, %197 : vector<8x32xf32>
    %cst_39 = arith.constant dense<0.000000e+00> : vector<8x128xf32>
    %199 = tpu.matmul %198, %14, %cst_39 {dimension_numbers = #tpu.dot_dimension_numbers<[1], [0], [0], [1], [0, 0, 1, 1], [], []>} : vector<8x32xf32>, vector<32x128xf32>, vector<8x128xf32> -> vector<8x128xf32>
    %200 = vector.broadcast %15 : vector<1x128xf32> to vector<8x128xf32>
    %201 = arith.addf %199, %200 : vector<8x128xf32>
    %cst_40 = arith.constant dense<0.000000e+00> : vector<8x128xf32>
    %202 = tpu.matmul %179, %13, %cst_40 {dimension_numbers = #tpu.dot_dimension_numbers<[1], [0], [0], [1], [0, 0, 1, 1], [], []>} : vector<8x32xf32>, vector<32x128xf32>, vector<8x128xf32> -> vector<8x128xf32>
    %203 = arith.addf %201, %202 : vector<8x128xf32>
    %204 = math.tanh %203 : vector<8x128xf32>
    %205 = arith.negf %203 : vector<8x128xf32>
    %206 = math.exp %205 : vector<8x128xf32>
    %cst_41 = arith.constant 1.000000e+00 : f32
    %207 = vector.broadcast %cst_41 : f32 to vector<8x128xf32>
    %208 = arith.addf %207, %206 : vector<8x128xf32>
    %209 = arith.divf %207, %208 : vector<8x128xf32>
    %210 = arith.select %5, %204, %209 : vector<8x128xi1>, vector<8x128xf32>
    %211 = vector.extract_strided_slice %210 {offsets = [0, 0], sizes = [8, 32], strides = [1, 1]} : vector<8x128xf32> to vector<8x32xf32>
    %212 = vector.extract_strided_slice %210 {offsets = [0, 32], sizes = [8, 32], strides = [1, 1]} : vector<8x128xf32> to vector<8x32xf32>
    %213 = vector.extract_strided_slice %210 {offsets = [0, 64], sizes = [8, 32], strides = [1, 1]} : vector<8x128xf32> to vector<8x32xf32>
    %214 = vector.extract_strided_slice %210 {offsets = [0, 96], sizes = [8, 32], strides = [1, 1]} : vector<8x128xf32> to vector<8x32xf32>
    %215 = arith.mulf %212, %177 : vector<8x32xf32>
    %216 = arith.mulf %211, %213 : vector<8x32xf32>
    %217 = arith.addf %215, %216 : vector<8x32xf32>
    %218 = math.tanh %217 : vector<8x32xf32>
    %219 = arith.mulf %214, %218 : vector<8x32xf32>
    %220 = vector.extract_strided_slice %11 {offsets = [40, 0], sizes = [8, 128], strides = [1, 1]} : vector<64x128xf32> to vector<8x128xf32>
    %cst_42 = arith.constant dense<0.000000e+00> : vector<8x128xf32>
    %221 = tpu.matmul %198, %12, %cst_42 {dimension_numbers = #tpu.dot_dimension_numbers<[1], [0], [0], [1], [0, 0, 1, 1], [], []>} : vector<8x32xf32>, vector<32x128xf32>, vector<8x128xf32> -> vector<8x128xf32>
    %222 = arith.addf %220, %221 : vector<8x128xf32>
    %223 = math.tanh %222 : vector<8x128xf32>
    %224 = arith.negf %222 : vector<8x128xf32>
    %225 = math.exp %224 : vector<8x128xf32>
    %cst_43 = arith.constant 1.000000e+00 : f32
    %226 = vector.broadcast %cst_43 : f32 to vector<8x128xf32>
    %227 = arith.addf %226, %225 : vector<8x128xf32>
    %228 = arith.divf %226, %227 : vector<8x128xf32>
    %229 = arith.select %5, %223, %228 : vector<8x128xi1>, vector<8x128xf32>
    %230 = vector.extract_strided_slice %229 {offsets = [0, 0], sizes = [8, 32], strides = [1, 1]} : vector<8x128xf32> to vector<8x32xf32>
    %231 = vector.extract_strided_slice %229 {offsets = [0, 32], sizes = [8, 32], strides = [1, 1]} : vector<8x128xf32> to vector<8x32xf32>
    %232 = vector.extract_strided_slice %229 {offsets = [0, 64], sizes = [8, 32], strides = [1, 1]} : vector<8x128xf32> to vector<8x32xf32>
    %233 = vector.extract_strided_slice %229 {offsets = [0, 96], sizes = [8, 32], strides = [1, 1]} : vector<8x128xf32> to vector<8x32xf32>
    %234 = arith.mulf %231, %196 : vector<8x32xf32>
    %235 = arith.mulf %230, %232 : vector<8x32xf32>
    %236 = arith.addf %234, %235 : vector<8x32xf32>
    %237 = math.tanh %236 : vector<8x32xf32>
    %238 = arith.mulf %233, %237 : vector<8x32xf32>
    %cst_44 = arith.constant dense<0.000000e+00> : vector<8x128xf32>
    %239 = tpu.matmul %238, %14, %cst_44 {dimension_numbers = #tpu.dot_dimension_numbers<[1], [0], [0], [1], [0, 0, 1, 1], [], []>} : vector<8x32xf32>, vector<32x128xf32>, vector<8x128xf32> -> vector<8x128xf32>
    %240 = vector.broadcast %15 : vector<1x128xf32> to vector<8x128xf32>
    %241 = arith.addf %239, %240 : vector<8x128xf32>
    %cst_45 = arith.constant dense<0.000000e+00> : vector<8x128xf32>
    %242 = tpu.matmul %219, %13, %cst_45 {dimension_numbers = #tpu.dot_dimension_numbers<[1], [0], [0], [1], [0, 0, 1, 1], [], []>} : vector<8x32xf32>, vector<32x128xf32>, vector<8x128xf32> -> vector<8x128xf32>
    %243 = arith.addf %241, %242 : vector<8x128xf32>
    %244 = math.tanh %243 : vector<8x128xf32>
    %245 = arith.negf %243 : vector<8x128xf32>
    %246 = math.exp %245 : vector<8x128xf32>
    %cst_46 = arith.constant 1.000000e+00 : f32
    %247 = vector.broadcast %cst_46 : f32 to vector<8x128xf32>
    %248 = arith.addf %247, %246 : vector<8x128xf32>
    %249 = arith.divf %247, %248 : vector<8x128xf32>
    %250 = arith.select %5, %244, %249 : vector<8x128xi1>, vector<8x128xf32>
    %251 = vector.extract_strided_slice %250 {offsets = [0, 0], sizes = [8, 32], strides = [1, 1]} : vector<8x128xf32> to vector<8x32xf32>
    %252 = vector.extract_strided_slice %250 {offsets = [0, 32], sizes = [8, 32], strides = [1, 1]} : vector<8x128xf32> to vector<8x32xf32>
    %253 = vector.extract_strided_slice %250 {offsets = [0, 64], sizes = [8, 32], strides = [1, 1]} : vector<8x128xf32> to vector<8x32xf32>
    %254 = vector.extract_strided_slice %250 {offsets = [0, 96], sizes = [8, 32], strides = [1, 1]} : vector<8x128xf32> to vector<8x32xf32>
    %255 = arith.mulf %252, %217 : vector<8x32xf32>
    %256 = arith.mulf %251, %253 : vector<8x32xf32>
    %257 = arith.addf %255, %256 : vector<8x32xf32>
    %258 = math.tanh %257 : vector<8x32xf32>
    %259 = arith.mulf %254, %258 : vector<8x32xf32>
    %260 = vector.extract_strided_slice %11 {offsets = [48, 0], sizes = [8, 128], strides = [1, 1]} : vector<64x128xf32> to vector<8x128xf32>
    %cst_47 = arith.constant dense<0.000000e+00> : vector<8x128xf32>
    %261 = tpu.matmul %238, %12, %cst_47 {dimension_numbers = #tpu.dot_dimension_numbers<[1], [0], [0], [1], [0, 0, 1, 1], [], []>} : vector<8x32xf32>, vector<32x128xf32>, vector<8x128xf32> -> vector<8x128xf32>
    %262 = arith.addf %260, %261 : vector<8x128xf32>
    %263 = math.tanh %262 : vector<8x128xf32>
    %264 = arith.negf %262 : vector<8x128xf32>
    %265 = math.exp %264 : vector<8x128xf32>
    %cst_48 = arith.constant 1.000000e+00 : f32
    %266 = vector.broadcast %cst_48 : f32 to vector<8x128xf32>
    %267 = arith.addf %266, %265 : vector<8x128xf32>
    %268 = arith.divf %266, %267 : vector<8x128xf32>
    %269 = arith.select %5, %263, %268 : vector<8x128xi1>, vector<8x128xf32>
    %270 = vector.extract_strided_slice %269 {offsets = [0, 0], sizes = [8, 32], strides = [1, 1]} : vector<8x128xf32> to vector<8x32xf32>
    %271 = vector.extract_strided_slice %269 {offsets = [0, 32], sizes = [8, 32], strides = [1, 1]} : vector<8x128xf32> to vector<8x32xf32>
    %272 = vector.extract_strided_slice %269 {offsets = [0, 64], sizes = [8, 32], strides = [1, 1]} : vector<8x128xf32> to vector<8x32xf32>
    %273 = vector.extract_strided_slice %269 {offsets = [0, 96], sizes = [8, 32], strides = [1, 1]} : vector<8x128xf32> to vector<8x32xf32>
    %274 = arith.mulf %271, %236 : vector<8x32xf32>
    %275 = arith.mulf %270, %272 : vector<8x32xf32>
    %276 = arith.addf %274, %275 : vector<8x32xf32>
    %277 = math.tanh %276 : vector<8x32xf32>
    %278 = arith.mulf %273, %277 : vector<8x32xf32>
    %cst_49 = arith.constant dense<0.000000e+00> : vector<8x128xf32>
    %279 = tpu.matmul %278, %14, %cst_49 {dimension_numbers = #tpu.dot_dimension_numbers<[1], [0], [0], [1], [0, 0, 1, 1], [], []>} : vector<8x32xf32>, vector<32x128xf32>, vector<8x128xf32> -> vector<8x128xf32>
    %280 = vector.broadcast %15 : vector<1x128xf32> to vector<8x128xf32>
    %281 = arith.addf %279, %280 : vector<8x128xf32>
    %cst_50 = arith.constant dense<0.000000e+00> : vector<8x128xf32>
    %282 = tpu.matmul %259, %13, %cst_50 {dimension_numbers = #tpu.dot_dimension_numbers<[1], [0], [0], [1], [0, 0, 1, 1], [], []>} : vector<8x32xf32>, vector<32x128xf32>, vector<8x128xf32> -> vector<8x128xf32>
    %283 = arith.addf %281, %282 : vector<8x128xf32>
    %284 = math.tanh %283 : vector<8x128xf32>
    %285 = arith.negf %283 : vector<8x128xf32>
    %286 = math.exp %285 : vector<8x128xf32>
    %cst_51 = arith.constant 1.000000e+00 : f32
    %287 = vector.broadcast %cst_51 : f32 to vector<8x128xf32>
    %288 = arith.addf %287, %286 : vector<8x128xf32>
    %289 = arith.divf %287, %288 : vector<8x128xf32>
    %290 = arith.select %5, %284, %289 : vector<8x128xi1>, vector<8x128xf32>
    %291 = vector.extract_strided_slice %290 {offsets = [0, 0], sizes = [8, 32], strides = [1, 1]} : vector<8x128xf32> to vector<8x32xf32>
    %292 = vector.extract_strided_slice %290 {offsets = [0, 32], sizes = [8, 32], strides = [1, 1]} : vector<8x128xf32> to vector<8x32xf32>
    %293 = vector.extract_strided_slice %290 {offsets = [0, 64], sizes = [8, 32], strides = [1, 1]} : vector<8x128xf32> to vector<8x32xf32>
    %294 = vector.extract_strided_slice %290 {offsets = [0, 96], sizes = [8, 32], strides = [1, 1]} : vector<8x128xf32> to vector<8x32xf32>
    %295 = arith.mulf %292, %257 : vector<8x32xf32>
    %296 = arith.mulf %291, %293 : vector<8x32xf32>
    %297 = arith.addf %295, %296 : vector<8x32xf32>
    %298 = math.tanh %297 : vector<8x32xf32>
    %299 = arith.mulf %294, %298 : vector<8x32xf32>
    %300 = vector.extract_strided_slice %11 {offsets = [56, 0], sizes = [8, 128], strides = [1, 1]} : vector<64x128xf32> to vector<8x128xf32>
    %cst_52 = arith.constant dense<0.000000e+00> : vector<8x128xf32>
    %301 = tpu.matmul %278, %12, %cst_52 {dimension_numbers = #tpu.dot_dimension_numbers<[1], [0], [0], [1], [0, 0, 1, 1], [], []>} : vector<8x32xf32>, vector<32x128xf32>, vector<8x128xf32> -> vector<8x128xf32>
    %302 = arith.addf %300, %301 : vector<8x128xf32>
    %303 = math.tanh %302 : vector<8x128xf32>
    %304 = arith.negf %302 : vector<8x128xf32>
    %305 = math.exp %304 : vector<8x128xf32>
    %cst_53 = arith.constant 1.000000e+00 : f32
    %306 = vector.broadcast %cst_53 : f32 to vector<8x128xf32>
    %307 = arith.addf %306, %305 : vector<8x128xf32>
    %308 = arith.divf %306, %307 : vector<8x128xf32>
    %309 = arith.select %5, %303, %308 : vector<8x128xi1>, vector<8x128xf32>
    %310 = vector.extract_strided_slice %309 {offsets = [0, 0], sizes = [8, 32], strides = [1, 1]} : vector<8x128xf32> to vector<8x32xf32>
    %311 = vector.extract_strided_slice %309 {offsets = [0, 32], sizes = [8, 32], strides = [1, 1]} : vector<8x128xf32> to vector<8x32xf32>
    %312 = vector.extract_strided_slice %309 {offsets = [0, 64], sizes = [8, 32], strides = [1, 1]} : vector<8x128xf32> to vector<8x32xf32>
    %313 = vector.extract_strided_slice %309 {offsets = [0, 96], sizes = [8, 32], strides = [1, 1]} : vector<8x128xf32> to vector<8x32xf32>
    %314 = arith.mulf %311, %276 : vector<8x32xf32>
    %315 = arith.mulf %310, %312 : vector<8x32xf32>
    %316 = arith.addf %314, %315 : vector<8x32xf32>
    %317 = math.tanh %316 : vector<8x32xf32>
    %318 = arith.mulf %313, %317 : vector<8x32xf32>
    %cst_54 = arith.constant dense<0.000000e+00> : vector<8x128xf32>
    %319 = tpu.matmul %318, %14, %cst_54 {dimension_numbers = #tpu.dot_dimension_numbers<[1], [0], [0], [1], [0, 0, 1, 1], [], []>} : vector<8x32xf32>, vector<32x128xf32>, vector<8x128xf32> -> vector<8x128xf32>
    %320 = vector.broadcast %15 : vector<1x128xf32> to vector<8x128xf32>
    %321 = arith.addf %319, %320 : vector<8x128xf32>
    %cst_55 = arith.constant dense<0.000000e+00> : vector<8x128xf32>
    %322 = tpu.matmul %299, %13, %cst_55 {dimension_numbers = #tpu.dot_dimension_numbers<[1], [0], [0], [1], [0, 0, 1, 1], [], []>} : vector<8x32xf32>, vector<32x128xf32>, vector<8x128xf32> -> vector<8x128xf32>
    %323 = arith.addf %321, %322 : vector<8x128xf32>
    %324 = math.tanh %323 : vector<8x128xf32>
    %325 = arith.negf %323 : vector<8x128xf32>
    %326 = math.exp %325 : vector<8x128xf32>
    %cst_56 = arith.constant 1.000000e+00 : f32
    %327 = vector.broadcast %cst_56 : f32 to vector<8x128xf32>
    %328 = arith.addf %327, %326 : vector<8x128xf32>
    %329 = arith.divf %327, %328 : vector<8x128xf32>
    %330 = arith.select %5, %324, %329 : vector<8x128xi1>, vector<8x128xf32>
    %331 = vector.extract_strided_slice %330 {offsets = [0, 0], sizes = [8, 32], strides = [1, 1]} : vector<8x128xf32> to vector<8x32xf32>
    %332 = vector.extract_strided_slice %330 {offsets = [0, 32], sizes = [8, 32], strides = [1, 1]} : vector<8x128xf32> to vector<8x32xf32>
    %333 = vector.extract_strided_slice %330 {offsets = [0, 64], sizes = [8, 32], strides = [1, 1]} : vector<8x128xf32> to vector<8x32xf32>
    %334 = vector.extract_strided_slice %330 {offsets = [0, 96], sizes = [8, 32], strides = [1, 1]} : vector<8x128xf32> to vector<8x32xf32>
    %335 = arith.mulf %332, %297 : vector<8x32xf32>
    %336 = arith.mulf %331, %333 : vector<8x32xf32>
    %337 = arith.addf %335, %336 : vector<8x32xf32>
    %338 = math.tanh %337 : vector<8x32xf32>
    %339 = arith.mulf %334, %338 : vector<8x32xf32>
    %c0_57 = arith.constant 0 : index
    %c0_58 = arith.constant 0 : index
    %340 = vector.load %arg8[%c0_57, %c0_58] : memref<1x512xf32, #tpu.memory_space<vmem>>, vector<1x512xf32>
    %c0_59 = arith.constant 0 : index
    %c0_60 = arith.constant 0 : index
    %341 = vector.load %arg7[%c0_59, %c0_60] : memref<64x512xf32, #tpu.memory_space<vmem>>, vector<32x512xf32>
    %cst_61 = arith.constant dense<0.000000e+00> : vector<8x512xf32>
    %342 = tpu.matmul %318, %341, %cst_61 {dimension_numbers = #tpu.dot_dimension_numbers<[1], [0], [0], [1], [0, 0, 1, 1], [], []>} : vector<8x32xf32>, vector<32x512xf32>, vector<8x512xf32> -> vector<8x512xf32>
    %343 = vector.broadcast %340 : vector<1x512xf32> to vector<8x512xf32>
    %344 = arith.addf %343, %342 : vector<8x512xf32>
    %c32 = arith.constant 32 : index
    %c0_62 = arith.constant 0 : index
    %345 = vector.load %arg7[%c32, %c0_62] : memref<64x512xf32, #tpu.memory_space<vmem>>, vector<32x512xf32>
    %cst_63 = arith.constant dense<0.000000e+00> : vector<8x512xf32>
    %346 = tpu.matmul %339, %345, %cst_63 {dimension_numbers = #tpu.dot_dimension_numbers<[1], [0], [0], [1], [0, 0, 1, 1], [], []>} : vector<8x32xf32>, vector<32x512xf32>, vector<8x512xf32> -> vector<8x512xf32>
    %347 = arith.addf %344, %346 : vector<8x512xf32>
    %cst_64 = arith.constant dense<0xFF800000> : vector<8xf32>
    %348 = vector.multi_reduction <maximumf>, %347, %cst_64 [1] : vector<8x512xf32> to vector<8xf32>
    %349 = vector.shape_cast %348 : vector<8xf32> to vector<8x1xf32>
    %350 = vector.broadcast %349 : vector<8x1xf32> to vector<8x512xf32>
    %351 = arith.subf %347, %350 : vector<8x512xf32>
    %352 = math.exp %351 : vector<8x512xf32>
    %cst_65 = arith.constant dense<0.000000e+00> : vector<8xf32>
    %353 = vector.multi_reduction <add>, %352, %cst_65 [1] : vector<8x512xf32> to vector<8xf32>
    %354 = vector.shape_cast %353 : vector<8xf32> to vector<8x1xf32>
    %355 = vector.broadcast %354 : vector<8x1xf32> to vector<8x512xf32>
    %356 = arith.divf %352, %355 : vector<8x512xf32>
    %357 = tpu.iota {dimensions = array<i32: 0>} : vector<8x512xi32>
    %c2_i32 = arith.constant 2 : i32
    %358 = vector.broadcast %c2_i32 : i32 to vector<8x512xi32>
    %359 = arith.cmpi slt, %357, %358 : vector<8x512xi32>
    %cst_66 = arith.constant 0.000000e+00 : f32
    %360 = vector.broadcast %cst_66 : f32 to vector<8x512xf32>
    %361 = arith.select %359, %356, %360 : vector<8x512xi1>, vector<8x512xf32>
    %362 = vector.shape_cast %361 : vector<8x512xf32> to vector<1x8x512xf32>
    %cst_67 = arith.constant dense<0.000000e+00> : vector<1xf32>
    %363 = vector.multi_reduction <add>, %362, %cst_67 [1, 2] : vector<1x8x512xf32> to vector<1xf32>
    %364 = vector.shape_cast %363 : vector<1xf32> to vector<1x1x1xf32>
    %365 = vector.extract %364[0, 0, 0] : f32 from vector<1x1x1xf32>
    %cst_68 = arith.constant 1.000000e+00 : f32
    %366 = arith.cmpf ogt, %365, %cst_68 : f32
    %cst_69 = arith.constant 1.000000e+00 : f32
    %367 = arith.select %366, %365, %cst_69 : f32
    %368 = vector.broadcast %367 : f32 to vector<8x512xf32>
    %369 = arith.divf %356, %368 : vector<8x512xf32>
    %cst_70 = arith.constant 0.000000e+00 : f32
    %370 = vector.broadcast %cst_70 : f32 to vector<8x512xf32>
    %371 = arith.select %359, %369, %370 : vector<8x512xi1>, vector<8x512xf32>
    %372 = vector.shape_cast %371 : vector<8x512xf32> to vector<1x8x512xf32>
    %cst_71 = arith.constant dense<0.000000e+00> : vector<1xf32>
    %373 = vector.multi_reduction <add>, %372, %cst_71 [1, 2] : vector<1x8x512xf32> to vector<1xf32>
    %374 = vector.shape_cast %373 : vector<1xf32> to vector<1x1x1xf32>
    %375 = vector.extract %374[0, 0, 0] : f32 from vector<1x1x1xf32>
    %cst_72 = arith.constant 1.000000e+00 : f32
    %376 = arith.cmpf ogt, %375, %cst_72 : f32
    %cst_73 = arith.constant 1.000000e+00 : f32
    %377 = arith.select %376, %375, %cst_73 : f32
    %378 = vector.broadcast %377 : f32 to vector<8x512xf32>
    %379 = arith.divf %369, %378 : vector<8x512xf32>
    %cst_74 = arith.constant 0.000000e+00 : f32
    %380 = vector.broadcast %cst_74 : f32 to vector<8x512xf32>
    %381 = arith.select %359, %379, %380 : vector<8x512xi1>, vector<8x512xf32>
    %382 = vector.shape_cast %381 : vector<8x512xf32> to vector<1x8x512xf32>
    %cst_75 = arith.constant dense<0.000000e+00> : vector<1xf32>
    %383 = vector.multi_reduction <add>, %382, %cst_75 [1, 2] : vector<1x8x512xf32> to vector<1xf32>
    %384 = vector.shape_cast %383 : vector<1xf32> to vector<1x1x1xf32>
    %385 = vector.extract %384[0, 0, 0] : f32 from vector<1x1x1xf32>
    %cst_76 = arith.constant 1.000000e+00 : f32
    %386 = arith.cmpf ogt, %385, %cst_76 : f32
    %cst_77 = arith.constant 1.000000e+00 : f32
    %387 = arith.select %386, %385, %cst_77 : f32
    %388 = vector.broadcast %387 : f32 to vector<8x512xf32>
    %389 = arith.divf %379, %388 : vector<8x512xf32>
    %c0_78 = arith.constant 0 : index
    %c0_79 = arith.constant 0 : index
    %390 = vector.load %arg9[%c0_78, %c0_79] : memref<8x512xf32, #tpu.memory_space<vmem>>, vector<8x512xf32>
    tpu.vector_store %arg9[%c0_78, %c0_79], %389 {strides = array<i32>} : memref<8x512xf32, #tpu.memory_space<vmem>>, vector<8x512xf32>,
    return
  }
}

</mosaic_0001>

<llo_original>
// kernel: deep_portfolio_forward.1
$region0: #{deep_portfolio_forward.1}
  #allocation0 [shape = 'u32[]', space=smem, size = 0x4, offset = 0x4, fixed_abs, tag = 'smem constant byte address 0x4 - core index']
  #allocation1 [shape = 'u32[144,128]{1,0:T(1,128)}', space=vmem, size = 0x12000, scoped, tag = 'internal scratch']
  %s0 = inlined_call_operand.vmem [shape: f32[64,1024], index: 0, kind: input, shape index: {}]
  %s1 = inlined_call_operand.vmem [shape: f32[1024,128], index: 1, kind: input, shape index: {}]
  %s2 = inlined_call_operand.vmem [shape: f32[32,128], index: 2, kind: input, shape index: {}]
  %s3 = inlined_call_operand.vmem [shape: f32[1,128], index: 3, kind: input, shape index: {}]
  %s4 = inlined_call_operand.vmem [shape: f32[32,128], index: 4, kind: input, shape index: {}]
  %s5 = inlined_call_operand.vmem [shape: f32[32,128], index: 5, kind: input, shape index: {}]
  %s6 = inlined_call_operand.vmem [shape: f32[1,128], index: 6, kind: input, shape index: {}]
  %s7 = inlined_call_operand.vmem [shape: f32[64,512], index: 7, kind: input, shape index: {}]
  %s8 = inlined_call_operand.vmem [shape: f32[1,512], index: 8, kind: input, shape index: {}]
  %s9 = inlined_call_operand.vmem [shape: f32[8,512], index: 9, kind: output, shape index: {}]
  %s10 = sld [smem:[#allocation0]]
  $region46: #{deep_portfolio_forward.1} parent=0
    _
  %s12 = ssub.s32 1, %s10
  %s13 = scalar_select 0, %s12, %s10
  // Predicated region
  $region2: #{deep_portfolio_forward.1} parent=0 // pred_check
    _
  $region3: #{deep_portfolio_forward.1} parent=0 // pred_check_branch
    %15 = sbr.rel (0) target = $region5
  $region4: #{deep_portfolio_forward.1} parent=0 // pred_region
    _
  $region5: #{deep_portfolio_forward.1} parent=0 // pred_fallthru
    _
  // Predicated region
  $region6: #{deep_portfolio_forward.1} parent=0 // pred_check
    _
  $region7: #{deep_portfolio_forward.1} parent=0 // pred_check_branch
    %17 = sbr.rel (0) target = $region9
  $region8: #{deep_portfolio_forward.1} parent=0 // pred_region
    _
  $region9: #{deep_portfolio_forward.1} parent=0 // pred_fallthru
    _
  // Predicated region
  $region10: #{deep_portfolio_forward.1} parent=0 // pred_check
    _
  $region11: #{deep_portfolio_forward.1} parent=0 // pred_check_branch
    %19 = sbr.rel (0) target = $region13
  $region12: #{deep_portfolio_forward.1} parent=0 // pred_region
    _
  $region13: #{deep_portfolio_forward.1} parent=0 // pred_fallthru
    _
  // Predicated region
  $region14: #{deep_portfolio_forward.1} parent=0 // pred_check
    _
  $region15: #{deep_portfolio_forward.1} parent=0 // pred_check_branch
    %21 = sbr.rel (0) target = $region17
  $region16: #{deep_portfolio_forward.1} parent=0 // pred_region
    _
  $region17: #{deep_portfolio_forward.1} parent=0 // pred_fallthru
    _
  // Predicated region
  $region18: #{deep_portfolio_forward.1} parent=0 // pred_check
    _
  $region19: #{deep_portfolio_forward.1} parent=0 // pred_check_branch
    %23 = sbr.rel (0) target = $region21
  $region20: #{deep_portfolio_forward.1} parent=0 // pred_region
    _
  $region21: #{deep_portfolio_forward.1} parent=0 // pred_fallthru
    _
  // Predicated region
  $region22: #{deep_portfolio_forward.1} parent=0 // pred_check
    _
  $region23: #{deep_portfolio_forward.1} parent=0 // pred_check_branch
    %25 = sbr.rel (0) target = $region25
  $region24: #{deep_portfolio_forward.1} parent=0 // pred_region
    _
  $region25: #{deep_portfolio_forward.1} parent=0 // pred_fallthru
    _
  // Predicated region
  $region26: #{deep_portfolio_forward.1} parent=0 // pred_check
    _
  $region27: #{deep_portfolio_forward.1} parent=0 // pred_check_branch
    %27 = sbr.rel (0) target = $region29
  $region28: #{deep_portfolio_forward.1} parent=0 // pred_region
    _
  $region29: #{deep_portfolio_forward.1} parent=0 // pred_fallthru
    _
  // Predicated region
  $region30: #{deep_portfolio_forward.1} parent=0 // pred_check
    _
  $region31: #{deep_portfolio_forward.1} parent=0 // pred_check_branch
    %29 = sbr.rel (0) target = $region33
  $region32: #{deep_portfolio_forward.1} parent=0 // pred_region
    _
  $region33: #{deep_portfolio_forward.1} parent=0 // pred_fallthru
    _
  // Predicated region
  $region34: #{deep_portfolio_forward.1} parent=0 // pred_check
    _
  $region35: #{deep_portfolio_forward.1} parent=0 // pred_check_branch
    %31 = sbr.rel (0) target = $region37
  $region36: #{deep_portfolio_forward.1} parent=0 // pred_region
    _
  $region37: #{deep_portfolio_forward.1} parent=0 // pred_fallthru
    _
  %v32 = vlaneseq
  %v33 = vand.u32 %v32, 127
  %vm34 = vcmp.ge.s32.totalorder %v33, 64
  %vm35 = vcmp.lt.s32.totalorder %v33, 96
  %vm36 = vmand %vm34, %vm35
  %v37 = vld [vmem:[%s0] sm:$0xff]
  %v38 = vld [vmem:[%s0 + $0x8] sm:$0xff]
  %v39 = vld [vmem:[%s0 + $0x10] sm:$0xff]
  %v40 = vld [vmem:[%s0 + $0x18] sm:$0xff]
  %v41 = vld [vmem:[%s0 + $0x20] sm:$0xff]
  %v42 = vld [vmem:[%s0 + $0x28] sm:$0xff]
  %v43 = vld [vmem:[%s0 + $0x30] sm:$0xff]
  %v44 = vld [vmem:[%s0 + $0x38] sm:$0xff]
  %v45 = vld [vmem:[%s0 + $0x40] sm:$0xff]
  %v46 = vld [vmem:[%s0 + $0x48] sm:$0xff]
  %v47 = vld [vmem:[%s0 + $0x50] sm:$0xff]
  %v48 = vld [vmem:[%s0 + $0x58] sm:$0xff]
  %v49 = vld [vmem:[%s0 + $0x60] sm:$0xff]
  %v50 = vld [vmem:[%s0 + $0x68] sm:$0xff]
  %v51 = vld [vmem:[%s0 + $0x70] sm:$0xff]
  %v52 = vld [vmem:[%s0 + $0x78] sm:$0xff]
  %v53 = vld [vmem:[%s0 + $0x80] sm:$0xff]
  %v54 = vld [vmem:[%s0 + $0x88] sm:$0xff]
  %v55 = vld [vmem:[%s0 + $0x90] sm:$0xff]
  %v56 = vld [vmem:[%s0 + $0x98] sm:$0xff]
  %v57 = vld [vmem:[%s0 + $0xa0] sm:$0xff]
  %v58 = vld [vmem:[%s0 + $0xa8] sm:$0xff]
  %v59 = vld [vmem:[%s0 + $0xb0] sm:$0xff]
  %v60 = vld [vmem:[%s0 + $0xb8] sm:$0xff]
  %v61 = vld [vmem:[%s0 + $0xc0] sm:$0xff]
  %v62 = vld [vmem:[%s0 + $0xc8] sm:$0xff]
  %v63 = vld [vmem:[%s0 + $0xd0] sm:$0xff]
  %v64 = vld [vmem:[%s0 + $0xd8] sm:$0xff]
  %v65 = vld [vmem:[%s0 + $0xe0] sm:$0xff]
  %v66 = vld [vmem:[%s0 + $0xe8] sm:$0xff]
  %v67 = vld [vmem:[%s0 + $0xf0] sm:$0xff]
  %v68 = vld [vmem:[%s0 + $0xf8] sm:$0xff]
  %v69 = vld [vmem:[%s0 + $0x100] sm:$0xff]
  %v70 = vld [vmem:[%s0 + $0x108] sm:$0xff]
  %v71 = vld [vmem:[%s0 + $0x110] sm:$0xff]
  %v72 = vld [vmem:[%s0 + $0x118] sm:$0xff]
  %v73 = vld [vmem:[%s0 + $0x120] sm:$0xff]
  %v74 = vld [vmem:[%s0 + $0x128] sm:$0xff]
  %v75 = vld [vmem:[%s0 + $0x130] sm:$0xff]
  %v76 = vld [vmem:[%s0 + $0x138] sm:$0xff]
  %v77 = vld [vmem:[%s0 + $0x140] sm:$0xff]
  %v78 = vld [vmem:[%s0 + $0x148] sm:$0xff]
  %v79 = vld [vmem:[%s0 + $0x150] sm:$0xff]
  %v80 = vld [vmem:[%s0 + $0x158] sm:$0xff]
  %v81 = vld [vmem:[%s0 + $0x160] sm:$0xff]
  %v82 = vld [vmem:[%s0 + $0x168] sm:$0xff]
  %v83 = vld [vmem:[%s0 + $0x170] sm:$0xff]
  %v84 = vld [vmem:[%s0 + $0x178] sm:$0xff]
  %v85 = vld [vmem:[%s0 + $0x180] sm:$0xff]
  %v86 = vld [vmem:[%s0 + $0x188] sm:$0xff]
  %v87 = vld [vmem:[%s0 + $0x190] sm:$0xff]
  %v88 = vld [vmem:[%s0 + $0x198] sm:$0xff]
  %v89 = vld [vmem:[%s0 + $0x1a0] sm:$0xff]
  %v90 = vld [vmem:[%s0 + $0x1a8] sm:$0xff]
  %v91 = vld [vmem:[%s0 + $0x1b0] sm:$0xff]
  %v92 = vld [vmem:[%s0 + $0x1b8] sm:$0xff]
  %v93 = vld [vmem:[%s0 + $0x1c0] sm:$0xff]
  %v94 = vld [vmem:[%s0 + $0x1c8] sm:$0xff]
  %v95 = vld [vmem:[%s0 + $0x1d0] sm:$0xff]
  %v96 = vld [vmem:[%s0 + $0x1d8] sm:$0xff]
  %v97 = vld [vmem:[%s0 + $0x1e0] sm:$0xff]
  %v98 = vld [vmem:[%s0 + $0x1e8] sm:$0xff]
  %v99 = vld [vmem:[%s0 + $0x1f0] sm:$0xff]
  %v100 = vld [vmem:[%s0 + $0x1f8] sm:$0xff]
  %v101 = vld [vmem:[%s1] sm:$0xff]
  %v102 = vld [vmem:[%s1 + $0x8] sm:$0xff]
  %v103 = vld [vmem:[%s1 + $0x10] sm:$0xff]
  %v104 = vld [vmem:[%s1 + $0x18] sm:$0xff]
  %v105 = vld [vmem:[%s1 + $0x20] sm:$0xff]
  %v106 = vld [vmem:[%s1 + $0x28] sm:$0xff]
  %v107 = vld [vmem:[%s1 + $0x30] sm:$0xff]
  %v108 = vld [vmem:[%s1 + $0x38] sm:$0xff]
  %v109 = vld [vmem:[%s1 + $0x40] sm:$0xff]
  %v110 = vld [vmem:[%s1 + $0x48] sm:$0xff]
  %v111 = vld [vmem:[%s1 + $0x50] sm:$0xff]
  %v112 = vld [vmem:[%s1 + $0x58] sm:$0xff]
  %v113 = vld [vmem:[%s1 + $0x60] sm:$0xff]
  %v114 = vld [vmem:[%s1 + $0x68] sm:$0xff]
  %v115 = vld [vmem:[%s1 + $0x70] sm:$0xff]
  %v116 = vld [vmem:[%s1 + $0x78] sm:$0xff]
  %v117 = vld [vmem:[%s1 + $0x80] sm:$0xff]
  %v118 = vld [vmem:[%s1 + $0x88] sm:$0xff]
  %v119 = vld [vmem:[%s1 + $0x90] sm:$0xff]
  %v120 = vld [vmem:[%s1 + $0x98] sm:$0xff]
  %v121 = vld [vmem:[%s1 + $0xa0] sm:$0xff]
  %v122 = vld [vmem:[%s1 + $0xa8] sm:$0xff]
  %v123 = vld [vmem:[%s1 + $0xb0] sm:$0xff]
  %v124 = vld [vmem:[%s1 + $0xb8] sm:$0xff]
  %v125 = vld [vmem:[%s1 + $0xc0] sm:$0xff]
  %v126 = vld [vmem:[%s1 + $0xc8] sm:$0xff]
  %v127 = vld [vmem:[%s1 + $0xd0] sm:$0xff]
  %v128 = vld [vmem:[%s1 + $0xd8] sm:$0xff]
  %v129 = vld [vmem:[%s1 + $0xe0] sm:$0xff]
  %v130 = vld [vmem:[%s1 + $0xe8] sm:$0xff]
  %v131 = vld [vmem:[%s1 + $0xf0] sm:$0xff]
  %v132 = vld [vmem:[%s1 + $0xf8] sm:$0xff]
  %v133 = vld [vmem:[%s1 + $0x100] sm:$0xff]
  %v134 = vld [vmem:[%s1 + $0x108] sm:$0xff]
  %v135 = vld [vmem:[%s1 + $0x110] sm:$0xff]
  %v136 = vld [vmem:[%s1 + $0x118] sm:$0xff]
  %v137 = vld [vmem:[%s1 + $0x120] sm:$0xff]
  %v138 = vld [vmem:[%s1 + $0x128] sm:$0xff]
  %v139 = vld [vmem:[%s1 + $0x130] sm:$0xff]
  %v140 = vld [vmem:[%s1 + $0x138] sm:$0xff]
  %v141 = vld [vmem:[%s1 + $0x140] sm:$0xff]
  %v142 = vld [vmem:[%s1 + $0x148] sm:$0xff]
  %v143 = vld [vmem:[%s1 + $0x150] sm:$0xff]
  %v144 = vld [vmem:[%s1 + $0x158] sm:$0xff]
  %v145 = vld [vmem:[%s1 + $0x160] sm:$0xff]
  %v146 = vld [vmem:[%s1 + $0x168] sm:$0xff]
  %v147 = vld [vmem:[%s1 + $0x170] sm:$0xff]
  %v148 = vld [vmem:[%s1 + $0x178] sm:$0xff]
  %v149 = vld [vmem:[%s1 + $0x180] sm:$0xff]
  %v150 = vld [vmem:[%s1 + $0x188] sm:$0xff]
  %v151 = vld [vmem:[%s1 + $0x190] sm:$0xff]
  %v152 = vld [vmem:[%s1 + $0x198] sm:$0xff]
  %v153 = vld [vmem:[%s1 + $0x1a0] sm:$0xff]
  %v154 = vld [vmem:[%s1 + $0x1a8] sm:$0xff]
  %v155 = vld [vmem:[%s1 + $0x1b0] sm:$0xff]
  %v156 = vld [vmem:[%s1 + $0x1b8] sm:$0xff]
  %v157 = vld [vmem:[%s1 + $0x1c0] sm:$0xff]
  %v158 = vld [vmem:[%s1 + $0x1c8] sm:$0xff]
  %v159 = vld [vmem:[%s1 + $0x1d0] sm:$0xff]
  %v160 = vld [vmem:[%s1 + $0x1d8] sm:$0xff]
  %v161 = vld [vmem:[%s1 + $0x1e0] sm:$0xff]
  %v162 = vld [vmem:[%s1 + $0x1e8] sm:$0xff]
  %v163 = vld [vmem:[%s1 + $0x1f0] sm:$0xff]
  %v164 = vld [vmem:[%s1 + $0x1f8] sm:$0xff]
  %v165 = vld [vmem:[%s1 + $0x200] sm:$0xff]
  %v166 = vld [vmem:[%s1 + $0x208] sm:$0xff]
  %v167 = vld [vmem:[%s1 + $0x210] sm:$0xff]
  %v168 = vld [vmem:[%s1 + $0x218] sm:$0xff]
  %v169 = vld [vmem:[%s1 + $0x220] sm:$0xff]
  %v170 = vld [vmem:[%s1 + $0x228] sm:$0xff]
  %v171 = vld [vmem:[%s1 + $0x230] sm:$0xff]
  %v172 = vld [vmem:[%s1 + $0x238] sm:$0xff]
  %v173 = vld [vmem:[%s1 + $0x240] sm:$0xff]
  %v174 = vld [vmem:[%s1 + $0x248] sm:$0xff]
  %v175 = vld [vmem:[%s1 + $0x250] sm:$0xff]
  %v176 = vld [vmem:[%s1 + $0x258] sm:$0xff]
  %v177 = vld [vmem:[%s1 + $0x260] sm:$0xff]
  %v178 = vld [vmem:[%s1 + $0x268] sm:$0xff]
  %v179 = vld [vmem:[%s1 + $0x270] sm:$0xff]
  %v180 = vld [vmem:[%s1 + $0x278] sm:$0xff]
  %v181 = vld [vmem:[%s1 + $0x280] sm:$0xff]
  %v182 = vld [vmem:[%s1 + $0x288] sm:$0xff]
  %v183 = vld [vmem:[%s1 + $0x290] sm:$0xff]
  %v184 = vld [vmem:[%s1 + $0x298] sm:$0xff]
  %v185 = vld [vmem:[%s1 + $0x2a0] sm:$0xff]
  %v186 = vld [vmem:[%s1 + $0x2a8] sm:$0xff]
  %v187 = vld [vmem:[%s1 + $0x2b0] sm:$0xff]
  %v188 = vld [vmem:[%s1 + $0x2b8] sm:$0xff]
  %v189 = vld [vmem:[%s1 + $0x2c0] sm:$0xff]
  %v190 = vld [vmem:[%s1 + $0x2c8] sm:$0xff]
  %v191 = vld [vmem:[%s1 + $0x2d0] sm:$0xff]
  %v192 = vld [vmem:[%s1 + $0x2d8] sm:$0xff]
  %v193 = vld [vmem:[%s1 + $0x2e0] sm:$0xff]
  %v194 = vld [vmem:[%s1 + $0x2e8] sm:$0xff]
  %v195 = vld [vmem:[%s1 + $0x2f0] sm:$0xff]
  %v196 = vld [vmem:[%s1 + $0x2f8] sm:$0xff]
  %v197 = vld [vmem:[%s1 + $0x300] sm:$0xff]
  %v198 = vld [vmem:[%s1 + $0x308] sm:$0xff]
  %v199 = vld [vmem:[%s1 + $0x310] sm:$0xff]
  %v200 = vld [vmem:[%s1 + $0x318] sm:$0xff]
  %v201 = vld [vmem:[%s1 + $0x320] sm:$0xff]
  %v202 = vld [vmem:[%s1 + $0x328] sm:$0xff]
  %v203 = vld [vmem:[%s1 + $0x330] sm:$0xff]
  %v204 = vld [vmem:[%s1 + $0x338] sm:$0xff]
  %v205 = vld [vmem:[%s1 + $0x340] sm:$0xff]
  %v206 = vld [vmem:[%s1 + $0x348] sm:$0xff]
  %v207 = vld [vmem:[%s1 + $0x350] sm:$0xff]
  %v208 = vld [vmem:[%s1 + $0x358] sm:$0xff]
  %v209 = vld [vmem:[%s1 + $0x360] sm:$0xff]
  %v210 = vld [vmem:[%s1 + $0x368] sm:$0xff]
  %v211 = vld [vmem:[%s1 + $0x370] sm:$0xff]
  %v212 = vld [vmem:[%s1 + $0x378] sm:$0xff]
  %v213 = vld [vmem:[%s1 + $0x380] sm:$0xff]
  %v214 = vld [vmem:[%s1 + $0x388] sm:$0xff]
  %v215 = vld [vmem:[%s1 + $0x390] sm:$0xff]
  %v216 = vld [vmem:[%s1 + $0x398] sm:$0xff]
  %v217 = vld [vmem:[%s1 + $0x3a0] sm:$0xff]
  %v218 = vld [vmem:[%s1 + $0x3a8] sm:$0xff]
  %v219 = vld [vmem:[%s1 + $0x3b0] sm:$0xff]
  %v220 = vld [vmem:[%s1 + $0x3b8] sm:$0xff]
  %v221 = vld [vmem:[%s1 + $0x3c0] sm:$0xff]
  %v222 = vld [vmem:[%s1 + $0x3c8] sm:$0xff]
  %v223 = vld [vmem:[%s1 + $0x3d0] sm:$0xff]
  %v224 = vld [vmem:[%s1 + $0x3d8] sm:$0xff]
  %v225 = vld [vmem:[%s1 + $0x3e0] sm:$0xff]
  %v226 = vld [vmem:[%s1 + $0x3e8] sm:$0xff]
  %v227 = vld [vmem:[%s1 + $0x3f0] sm:$0xff]
  %v228 = vld [vmem:[%s1 + $0x3f8] sm:$0xff]
  %v229 = vld [vmem:[%s3] sm:$0x1]
  %v231 = vlaneseq
  %v232 = vshrl.u32 %v231, 7
  %v233 = vsub.s32 0, %v232
  %v234 = vrot.slane %v229, %v233
  %236 = vmatprep.subr.mxu0 0.0
  %237 = vmatpush1.msra.mxu0 %v101
  %238 = vmatprep.subr.mxu0 0.0
  %239 = vmatpush1.msra.mxu0 %v102
  %240 = vmatprep.subr.mxu0 0.0
  %241 = vmatpush1.msra.mxu0 %v103
  %242 = vmatprep.subr.mxu0 0.0
  %243 = vmatpush1.msra.mxu0 %v104
  %244 = vmatprep.subr.mxu0 0.0
  %245 = vmatpush1.msra.mxu0 %v105
  %246 = vmatprep.subr.mxu0 0.0
  %247 = vmatpush1.msra.mxu0 %v106
  %248 = vmatprep.subr.mxu0 0.0
  %249 = vmatpush1.msra.mxu0 %v107
  %250 = vmatprep.subr.mxu0 0.0
  %251 = vmatpush1.msra.mxu0 %v108
  %252 = vmatprep.subr.mxu0 0.0
  %253 = vmatpush1.msra.mxu0 %v109
  %254 = vmatprep.subr.mxu0 0.0
  %255 = vmatpush1.msra.mxu0 %v110
  %256 = vmatprep.subr.mxu0 0.0
  %257 = vmatpush1.msra.mxu0 %v111
  %258 = vmatprep.subr.mxu0 0.0
  %259 = vmatpush1.msra.mxu0 %v112
  %260 = vmatprep.subr.mxu0 0.0
  %261 = vmatpush1.msra.mxu0 %v113
  %262 = vmatprep.subr.mxu0 0.0
  %263 = vmatpush1.msra.mxu0 %v114
  %264 = vmatprep.subr.mxu0 0.0
  %265 = vmatpush1.msra.mxu0 %v115
  %266 = vmatprep.subr.mxu0 0.0
  %267 = vmatpush1.msra.mxu0 %v116
  %268 = vmatprep.subr.mxu0 0.0
  %269 = vmatpush1.msra.mxu0 %v117
  %270 = vmatprep.subr.mxu0 0.0
  %271 = vmatpush1.msra.mxu0 %v118
  %272 = vmatprep.subr.mxu0 0.0
  %273 = vmatpush1.msra.mxu0 %v119
  %274 = vmatprep.subr.mxu0 0.0
  %275 = vmatpush1.msra.mxu0 %v120
  %276 = vmatprep.subr.mxu0 0.0
  %277 = vmatpush1.msra.mxu0 %v121
  %278 = vmatprep.subr.mxu0 0.0
  %279 = vmatpush1.msra.mxu0 %v122
  %280 = vmatprep.subr.mxu0 0.0
  %281 = vmatpush1.msra.mxu0 %v123
  %282 = vmatprep.subr.mxu0 0.0
  %283 = vmatpush1.msra.mxu0 %v124
  %284 = vmatprep.subr.mxu0 0.0
  %285 = vmatpush1.msra.mxu0 %v125
  %286 = vmatprep.subr.mxu0 0.0
  %287 = vmatpush1.msra.mxu0 %v126
  %288 = vmatprep.subr.mxu0 0.0
  %289 = vmatpush1.msra.mxu0 %v127
  %290 = vmatprep.subr.mxu0 0.0
  %291 = vmatpush1.msra.mxu0 %v128
  %292 = vmatprep.subr.mxu0 0.0
  %293 = vmatpush1.msra.mxu0 %v129
  %294 = vmatprep.subr.mxu0 0.0
  %295 = vmatpush1.msra.mxu0 %v130
  %296 = vmatprep.subr.mxu0 0.0
  %297 = vmatpush1.msra.mxu0 %v131
  %298 = vmatprep.subr.mxu0 0.0
  %299 = vmatpush1.msra.mxu0 %v132
  %300 = vmatprep.mubr.f32.mxu0 %v38
  %301 = vmatmul.mubr.f32.gmra.mrb[0].mxu0 %v37
  %v302 = vpop.f32.mrb[0].mxu0
  %v303 = vadd.f32 %v234, %v302
  %v304 = vpop.f32.mrb[0].mxu0
  %305 = vmatprep.mubr.f32.mxu0 %v46
  %306 = vmatmul.mubr.f32.gmra.mrb[0].mxu0 %v45
  %v307 = vpop.f32.mrb[0].mxu0
  %v308 = vadd.f32 %v234, %v307
  %v309 = vpop.f32.mrb[0].mxu0
  %310 = vmatprep.mubr.f32.mxu0 %v54
  %311 = vmatmul.mubr.f32.gmra.mrb[0].mxu0 %v53
  %v312 = vpop.f32.mrb[0].mxu0
  %v313 = vadd.f32 %v234, %v312
  %v314 = vpop.f32.mrb[0].mxu0
  %315 = vmatprep.mubr.f32.mxu0 %v62
  %316 = vmatmul.mubr.f32.gmra.mrb[0].mxu0 %v61
  %v317 = vpop.f32.mrb[0].mxu0
  %v318 = vadd.f32 %v234, %v317
  %v319 = vpop.f32.mrb[0].mxu0
  %320 = vmatprep.mubr.f32.mxu0 %v70
  %321 = vmatmul.mubr.f32.gmra.mrb[0].mxu0 %v69
  %v322 = vpop.f32.mrb[0].mxu0
  %v323 = vadd.f32 %v234, %v322
  %v324 = vpop.f32.mrb[0].mxu0
  %325 = vmatprep.mubr.f32.mxu0 %v78
  %326 = vmatmul.mubr.f32.gmra.mrb[0].mxu0 %v77
  %v327 = vpop.f32.mrb[0].mxu0
  %v328 = vadd.f32 %v234, %v327
  %v329 = vpop.f32.mrb[0].mxu0
  %330 = vmatprep.mubr.f32.mxu0 %v86
  %331 = vmatmul.mubr.f32.gmra.mrb[0].mxu0 %v85
  %v332 = vpop.f32.mrb[0].mxu0
  %v333 = vadd.f32 %v234, %v332
  %v334 = vpop.f32.mrb[0].mxu0
  %335 = vmatprep.mubr.f32.mxu0 %v94
  %336 = vmatmul.mubr.f32.gmra.mrb[0].mxu0 %v93
  %v337 = vpop.f32.mrb[0].mxu0
  %v338 = vadd.f32 %v234, %v337
  %v339 = vpop.f32.mrb[0].mxu0
  %340 = vdwg.mxu0
  %341 = vmatprep.subr.mxu0 0.0
  %342 = vmatpush1.msra.mxu0 %v133
  %343 = vmatprep.subr.mxu0 0.0
  %344 = vmatpush1.msra.mxu0 %v134
  %345 = vmatprep.subr.mxu0 0.0
  %346 = vmatpush1.msra.mxu0 %v135
  %347 = vmatprep.subr.mxu0 0.0
  %348 = vmatpush1.msra.mxu0 %v136
  %349 = vmatprep.subr.mxu0 0.0
  %350 = vmatpush1.msra.mxu0 %v137
  %351 = vmatprep.subr.mxu0 0.0
  %352 = vmatpush1.msra.mxu0 %v138
  %353 = vmatprep.subr.mxu0 0.0
  %354 = vmatpush1.msra.mxu0 %v139
  %355 = vmatprep.subr.mxu0 0.0
  %356 = vmatpush1.msra.mxu0 %v140
  %357 = vmatprep.subr.mxu0 0.0
  %358 = vmatpush1.msra.mxu0 %v141
  %359 = vmatprep.subr.mxu0 0.0
  %360 = vmatpush1.msra.mxu0 %v142
  %361 = vmatprep.subr.mxu0 0.0
  %362 = vmatpush1.msra.mxu0 %v143
  %363 = vmatprep.subr.mxu0 0.0
  %364 = vmatpush1.msra.mxu0 %v144
  %365 = vmatprep.subr.mxu0 0.0
  %366 = vmatpush1.msra.mxu0 %v145
  %367 = vmatprep.subr.mxu0 0.0
  %368 = vmatpush1.msra.mxu0 %v146
  %369 = vmatprep.subr.mxu0 0.0
  %370 = vmatpush1.msra.mxu0 %v147
  %371 = vmatprep.subr.mxu0 0.0
  %372 = vmatpush1.msra.mxu0 %v148
  %373 = vmatprep.subr.mxu0 0.0
  %374 = vmatpush1.msra.mxu0 %v149
  %375 = vmatprep.subr.mxu0 0.0
  %376 = vmatpush1.msra.mxu0 %v150
  %377 = vmatprep.subr.mxu0 0.0
  %378 = vmatpush1.msra.mxu0 %v151
  %379 = vmatprep.subr.mxu0 0.0
  %380 = vmatpush1.msra.mxu0 %v152
  %381 = vmatprep.subr.mxu0 0.0
  %382 = vmatpush1.msra.mxu0 %v153
  %383 = vmatprep.subr.mxu0 0.0
  %384 = vmatpush1.msra.mxu0 %v154
  %385 = vmatprep.subr.mxu0 0.0
  %386 = vmatpush1.msra.mxu0 %v155
  %387 = vmatprep.subr.mxu0 0.0
  %388 = vmatpush1.msra.mxu0 %v156
  %389 = vmatprep.subr.mxu0 0.0
  %390 = vmatpush1.msra.mxu0 %v157
  %391 = vmatprep.subr.mxu0 0.0
  %392 = vmatpush1.msra.mxu0 %v158
  %393 = vmatprep.subr.mxu0 0.0
  %394 = vmatpush1.msra.mxu0 %v159
  %395 = vmatprep.subr.mxu0 0.0
  %396 = vmatpush1.msra.mxu0 %v160
  %397 = vmatprep.subr.mxu0 0.0
  %398 = vmatpush1.msra.mxu0 %v161
  %399 = vmatprep.subr.mxu0 0.0
  %400 = vmatpush1.msra.mxu0 %v162
  %401 = vmatprep.subr.mxu0 0.0
  %402 = vmatpush1.msra.mxu0 %v163
  %403 = vmatprep.subr.mxu0 0.0
  %404 = vmatpush1.msra.mxu0 %v164
  %405 = vmatprep.mubr.f32.mxu0 %v40
  %406 = vmatmul.mubr.f32.gmra.mrb[0].mxu0 %v39
  %v407 = vpop.f32.mrb[0].mxu0
  %v408 = vadd.f32 %v303, %v407
  %v409 = vpop.f32.mrb[0].mxu0
  %410 = vmatprep.mubr.f32.mxu0 %v48
  %411 = vmatmul.mubr.f32.gmra.mrb[0].mxu0 %v47
  %v412 = vpop.f32.mrb[0].mxu0
  %v413 = vadd.f32 %v308, %v412
  %v414 = vpop.f32.mrb[0].mxu0
  %415 = vmatprep.mubr.f32.mxu0 %v56
  %416 = vmatmul.mubr.f32.gmra.mrb[0].mxu0 %v55
  %v417 = vpop.f32.mrb[0].mxu0
  %v418 = vadd.f32 %v313, %v417
  %v419 = vpop.f32.mrb[0].mxu0
  %420 = vmatprep.mubr.f32.mxu0 %v64
  %421 = vmatmul.mubr.f32.gmra.mrb[0].mxu0 %v63
  %v422 = vpop.f32.mrb[0].mxu0
  %v423 = vadd.f32 %v318, %v422
  %v424 = vpop.f32.mrb[0].mxu0
  %425 = vmatprep.mubr.f32.mxu0 %v72
  %426 = vmatmul.mubr.f32.gmra.mrb[0].mxu0 %v71
  %v427 = vpop.f32.mrb[0].mxu0
  %v428 = vadd.f32 %v323, %v427
  %v429 = vpop.f32.mrb[0].mxu0
  %430 = vmatprep.mubr.f32.mxu0 %v80
  %431 = vmatmul.mubr.f32.gmra.mrb[0].mxu0 %v79
  %v432 = vpop.f32.mrb[0].mxu0
  %v433 = vadd.f32 %v328, %v432
  %v434 = vpop.f32.mrb[0].mxu0
  %435 = vmatprep.mubr.f32.mxu0 %v88
  %436 = vmatmul.mubr.f32.gmra.mrb[0].mxu0 %v87
  %v437 = vpop.f32.mrb[0].mxu0
  %v438 = vadd.f32 %v333, %v437
  %v439 = vpop.f32.mrb[0].mxu0
  %440 = vmatprep.mubr.f32.mxu0 %v96
  %441 = vmatmul.mubr.f32.gmra.mrb[0].mxu0 %v95
  %v442 = vpop.f32.mrb[0].mxu0
  %v443 = vadd.f32 %v338, %v442
  %v444 = vpop.f32.mrb[0].mxu0
  %445 = vdwg.mxu0
  %446 = vmatprep.subr.mxu0 0.0
  %447 = vmatpush1.msra.mxu0 %v165
  %448 = vmatprep.subr.mxu0 0.0
  %449 = vmatpush1.msra.mxu0 %v166
  %450 = vmatprep.subr.mxu0 0.0
  %451 = vmatpush1.msra.mxu0 %v167
  %452 = vmatprep.subr.mxu0 0.0
  %453 = vmatpush1.msra.mxu0 %v168
  %454 = vmatprep.subr.mxu0 0.0
  %455 = vmatpush1.msra.mxu0 %v169
  %456 = vmatprep.subr.mxu0 0.0
  %457 = vmatpush1.msra.mxu0 %v170
  %458 = vmatprep.subr.mxu0 0.0
  %459 = vmatpush1.msra.mxu0 %v171
  %460 = vmatprep.subr.mxu0 0.0
  %461 = vmatpush1.msra.mxu0 %v172
  %462 = vmatprep.subr.mxu0 0.0
  %463 = vmatpush1.msra.mxu0 %v173
  %464 = vmatprep.subr.mxu0 0.0
  %465 = vmatpush1.msra.mxu0 %v174
  %466 = vmatprep.subr.mxu0 0.0
  %467 = vmatpush1.msra.mxu0 %v175
  %468 = vmatprep.subr.mxu0 0.0
  %469 = vmatpush1.msra.mxu0 %v176
  %470 = vmatprep.subr.mxu0 0.0
  %471 = vmatpush1.msra.mxu0 %v177
  %472 = vmatprep.subr.mxu0 0.0
  %473 = vmatpush1.msra.mxu0 %v178
  %474 = vmatprep.subr.mxu0 0.0
  %475 = vmatpush1.msra.mxu0 %v179
  %476 = vmatprep.subr.mxu0 0.0
  %477 = vmatpush1.msra.mxu0 %v180
  %478 = vmatprep.subr.mxu0 0.0
  %479 = vmatpush1.msra.mxu0 %v181
  %480 = vmatprep.subr.mxu0 0.0
  %481 = vmatpush1.msra.mxu0 %v182
  %482 = vmatprep.subr.mxu0 0.0
  %483 = vmatpush1.msra.mxu0 %v183
  %484 = vmatprep.subr.mxu0 0.0
  %485 = vmatpush1.msra.mxu0 %v184
  %486 = vmatprep.subr.mxu0 0.0
  %487 = vmatpush1.msra.mxu0 %v185
  %488 = vmatprep.subr.mxu0 0.0
  %489 = vmatpush1.msra.mxu0 %v186
  %490 = vmatprep.subr.mxu0 0.0
  %491 = vmatpush1.msra.mxu0 %v187
  %492 = vmatprep.subr.mxu0 0.0
  %493 = vmatpush1.msra.mxu0 %v188
  %494 = vmatprep.subr.mxu0 0.0
  %495 = vmatpush1.msra.mxu0 %v189
  %496 = vmatprep.subr.mxu0 0.0
  %497 = vmatpush1.msra.mxu0 %v190
  %498 = vmatprep.subr.mxu0 0.0
  %499 = vmatpush1.msra.mxu0 %v191
  %500 = vmatprep.subr.mxu0 0.0
  %501 = vmatpush1.msra.mxu0 %v192
  %502 = vmatprep.subr.mxu0 0.0
  %503 = vmatpush1.msra.mxu0 %v193
  %504 = vmatprep.subr.mxu0 0.0
  %505 = vmatpush1.msra.mxu0 %v194
  %506 = vmatprep.subr.mxu0 0.0
  %507 = vmatpush1.msra.mxu0 %v195
  %508 = vmatprep.subr.mxu0 0.0
  %509 = vmatpush1.msra.mxu0 %v196
  %510 = vmatprep.mubr.f32.mxu0 %v42
  %511 = vmatmul.mubr.f32.gmra.mrb[0].mxu0 %v41
  %v512 = vpop.f32.mrb[0].mxu0
  %v513 = vadd.f32 %v408, %v512
  %v514 = vpop.f32.mrb[0].mxu0
  %515 = vmatprep.mubr.f32.mxu0 %v50
  %516 = vmatmul.mubr.f32.gmra.mrb[0].mxu0 %v49
  %v517 = vpop.f32.mrb[0].mxu0
  %v518 = vadd.f32 %v413, %v517
  %v519 = vpop.f32.mrb[0].mxu0
  %520 = vmatprep.mubr.f32.mxu0 %v58
  %521 = vmatmul.mubr.f32.gmra.mrb[0].mxu0 %v57
  %v522 = vpop.f32.mrb[0].mxu0
  %v523 = vadd.f32 %v418, %v522
  %v524 = vpop.f32.mrb[0].mxu0
  %525 = vmatprep.mubr.f32.mxu0 %v66
  %526 = vmatmul.mubr.f32.gmra.mrb[0].mxu0 %v65
  %v527 = vpop.f32.mrb[0].mxu0
  %v528 = vadd.f32 %v423, %v527
  %v529 = vpop.f32.mrb[0].mxu0
  %530 = vmatprep.mubr.f32.mxu0 %v74
  %531 = vmatmul.mubr.f32.gmra.mrb[0].mxu0 %v73
  %v532 = vpop.f32.mrb[0].mxu0
  %v533 = vadd.f32 %v428, %v532
  %v534 = vpop.f32.mrb[0].mxu0
  %535 = vmatprep.mubr.f32.mxu0 %v82
  %536 = vmatmul.mubr.f32.gmra.mrb[0].mxu0 %v81
  %v537 = vpop.f32.mrb[0].mxu0
  %v538 = vadd.f32 %v433, %v537
  %v539 = vpop.f32.mrb[0].mxu0
  %540 = vmatprep.mubr.f32.mxu0 %v90
  %541 = vmatmul.mubr.f32.gmra.mrb[0].mxu0 %v89
  %v542 = vpop.f32.mrb[0].mxu0
  %v543 = vadd.f32 %v438, %v542
  %v544 = vpop.f32.mrb[0].mxu0
  %545 = vmatprep.mubr.f32.mxu0 %v98
  %546 = vmatmul.mubr.f32.gmra.mrb[0].mxu0 %v97
  %v547 = vpop.f32.mrb[0].mxu0
  %v548 = vadd.f32 %v443, %v547
  %v549 = vpop.f32.mrb[0].mxu0
  %550 = vdwg.mxu0
  %551 = vmatprep.subr.mxu0 0.0
  %552 = vmatpush1.msra.mxu0 %v197
  %553 = vmatprep.subr.mxu0 0.0
  %554 = vmatpush1.msra.mxu0 %v198
  %555 = vmatprep.subr.mxu0 0.0
  %556 = vmatpush1.msra.mxu0 %v199
  %557 = vmatprep.subr.mxu0 0.0
  %558 = vmatpush1.msra.mxu0 %v200
  %559 = vmatprep.subr.mxu0 0.0
  %560 = vmatpush1.msra.mxu0 %v201
  %561 = vmatprep.subr.mxu0 0.0
  %562 = vmatpush1.msra.mxu0 %v202
  %563 = vmatprep.subr.mxu0 0.0
  %564 = vmatpush1.msra.mxu0 %v203
  %565 = vmatprep.subr.mxu0 0.0
  %566 = vmatpush1.msra.mxu0 %v204
  %567 = vmatprep.subr.mxu0 0.0
  %568 = vmatpush1.msra.mxu0 %v205
  %569 = vmatprep.subr.mxu0 0.0
  %570 = vmatpush1.msra.mxu0 %v206
  %571 = vmatprep.subr.mxu0 0.0
  %572 = vmatpush1.msra.mxu0 %v207
  %573 = vmatprep.subr.mxu0 0.0
  %574 = vmatpush1.msra.mxu0 %v208
  %575 = vmatprep.subr.mxu0 0.0
  %576 = vmatpush1.msra.mxu0 %v209
  %577 = vmatprep.subr.mxu0 0.0
  %578 = vmatpush1.msra.mxu0 %v210
  %579 = vmatprep.subr.mxu0 0.0
  %580 = vmatpush1.msra.mxu0 %v211
  %581 = vmatprep.subr.mxu0 0.0
  %582 = vmatpush1.msra.mxu0 %v212
  %583 = vmatprep.subr.mxu0 0.0
  %584 = vmatpush1.msra.mxu0 %v213
  %585 = vmatprep.subr.mxu0 0.0
  %586 = vmatpush1.msra.mxu0 %v214
  %587 = vmatprep.subr.mxu0 0.0
  %588 = vmatpush1.msra.mxu0 %v215
  %589 = vmatprep.subr.mxu0 0.0
  %590 = vmatpush1.msra.mxu0 %v216
  %591 = vmatprep.subr.mxu0 0.0
  %592 = vmatpush1.msra.mxu0 %v217
  %593 = vmatprep.subr.mxu0 0.0
  %594 = vmatpush1.msra.mxu0 %v218
  %595 = vmatprep.subr.mxu0 0.0
  %596 = vmatpush1.msra.mxu0 %v219
  %597 = vmatprep.subr.mxu0 0.0
  %598 = vmatpush1.msra.mxu0 %v220
  %599 = vmatprep.subr.mxu0 0.0
  %600 = vmatpush1.msra.mxu0 %v221
  %601 = vmatprep.subr.mxu0 0.0
  %602 = vmatpush1.msra.mxu0 %v222
  %603 = vmatprep.subr.mxu0 0.0
  %604 = vmatpush1.msra.mxu0 %v223
  %605 = vmatprep.subr.mxu0 0.0
  %606 = vmatpush1.msra.mxu0 %v224
  %607 = vmatprep.subr.mxu0 0.0
  %608 = vmatpush1.msra.mxu0 %v225
  %609 = vmatprep.subr.mxu0 0.0
  %610 = vmatpush1.msra.mxu0 %v226
  %611 = vmatprep.subr.mxu0 0.0
  %612 = vmatpush1.msra.mxu0 %v227
  %613 = vmatprep.subr.mxu0 0.0
  %614 = vmatpush1.msra.mxu0 %v228
  %615 = vmatprep.mubr.f32.mxu0 %v44
  %616 = vmatmul.mubr.f32.gmra.mrb[0].mxu0 %v43
  %v617 = vpop.f32.mrb[0].mxu0
  %v618 = vadd.f32 %v513, %v617
  %v619 = vpop.f32.mrb[0].mxu0
  %620 = vmatprep.mubr.f32.mxu0 %v52
  %621 = vmatmul.mubr.f32.gmra.mrb[0].mxu0 %v51
  %v622 = vpop.f32.mrb[0].mxu0
  %v623 = vadd.f32 %v518, %v622
  %v624 = vpop.f32.mrb[0].mxu0
  %625 = vmatprep.mubr.f32.mxu0 %v60
  %626 = vmatmul.mubr.f32.gmra.mrb[0].mxu0 %v59
  %v627 = vpop.f32.mrb[0].mxu0
  %v628 = vadd.f32 %v523, %v627
  %v629 = vpop.f32.mrb[0].mxu0
  %630 = vmatprep.mubr.f32.mxu0 %v68
  %631 = vmatmul.mubr.f32.gmra.mrb[0].mxu0 %v67
  %v632 = vpop.f32.mrb[0].mxu0
  %v633 = vadd.f32 %v528, %v632
  %v634 = vpop.f32.mrb[0].mxu0
  %635 = vmatprep.mubr.f32.mxu0 %v76
  %636 = vmatmul.mubr.f32.gmra.mrb[0].mxu0 %v75
  %v637 = vpop.f32.mrb[0].mxu0
  %v638 = vadd.f32 %v533, %v637
  %v639 = vpop.f32.mrb[0].mxu0
  %640 = vmatprep.mubr.f32.mxu0 %v84
  %641 = vmatmul.mubr.f32.gmra.mrb[0].mxu0 %v83
  %v642 = vpop.f32.mrb[0].mxu0
  %v643 = vadd.f32 %v538, %v642
  %v644 = vpop.f32.mrb[0].mxu0
  %645 = vmatprep.mubr.f32.mxu0 %v92
  %646 = vmatmul.mubr.f32.gmra.mrb[0].mxu0 %v91
  %v647 = vpop.f32.mrb[0].mxu0
  %v648 = vadd.f32 %v543, %v647
  %v649 = vpop.f32.mrb[0].mxu0
  %650 = vmatprep.mubr.f32.mxu0 %v100
  %651 = vmatmul.mubr.f32.gmra.mrb[0].mxu0 %v99
  %v652 = vpop.f32.mrb[0].mxu0
  %v653 = vadd.f32 %v548, %v652
  %v654 = vpop.f32.mrb[0].mxu0
  %655 = vdwg.mxu0
  %v656 = vld [vmem:[%s2] sm:$0xff]
  %v657 = vld [vmem:[%s2 + $0x8] sm:$0xff]
  %v658 = vld [vmem:[%s2 + $0x10] sm:$0xff]
  %v659 = vld [vmem:[%s2 + $0x18] sm:$0xff]
  %v660 = vld [vmem:[%s5] sm:$0xff]
  %v661 = vld [vmem:[%s5 + $0x8] sm:$0xff]
  %v662 = vld [vmem:[%s5 + $0x10] sm:$0xff]
  %v663 = vld [vmem:[%s5 + $0x18] sm:$0xff]
  %v664 = vld [vmem:[%s4] sm:$0xff]
  %v665 = vld [vmem:[%s4 + $0x8] sm:$0xff]
  %v666 = vld [vmem:[%s4 + $0x10] sm:$0xff]
  %v667 = vld [vmem:[%s4 + $0x18] sm:$0xff]
  %v668 = vld [vmem:[%s6] sm:$0x1]
  %vm669 = vcmask 261120
  %v671 = vsel %vm669, 0.0, 0
  %673 = vmatprep.subr.mxu0 0.0
  %674 = vmatpush1.msra.mxu0 %v656
  %675 = vmatprep.subr.mxu0 0.0
  %676 = vmatpush1.msra.mxu0 %v657
  %677 = vmatprep.subr.mxu0 0.0
  %678 = vmatpush1.msra.mxu0 %v658
  %679 = vmatprep.subr.mxu0 0.0
  %680 = vmatpush1.msra.mxu0 %v659
  %681 = vmatprep.subr.mxu0 0.0
  %682 = vmatpush1.msra.mxu0 0.0
  %683 = vmatprep.subr.mxu0 0.0
  %684 = vmatpush1.msra.mxu0 0.0
  %685 = vmatprep.subr.mxu0 0.0
  %686 = vmatpush1.msra.mxu0 0.0
  %687 = vmatprep.subr.mxu0 0.0
  %688 = vmatpush1.msra.mxu0 0.0
  %689 = vmatprep.subr.mxu0 0.0
  %690 = vmatpush1.msra.mxu0 0.0
  %691 = vmatprep.subr.mxu0 0.0
  %692 = vmatpush1.msra.mxu0 0.0
  %693 = vmatprep.subr.mxu0 0.0
  %694 = vmatpush1.msra.mxu0 0.0
  %695 = vmatprep.subr.mxu0 0.0
  %696 = vmatpush1.msra.mxu0 0.0
  %697 = vmatprep.subr.mxu0 0.0
  %698 = vmatpush1.msra.mxu0 0.0
  %699 = vmatprep.subr.mxu0 0.0
  %700 = vmatpush1.msra.mxu0 0.0
  %701 = vmatprep.subr.mxu0 0.0
  %702 = vmatpush1.msra.mxu0 0.0
  %703 = vmatprep.subr.mxu0 0.0
  %704 = vmatpush1.msra.mxu0 0.0
  %705 = vmatprep.subr.mxu0 0.0
  %706 = vmatpush1.msra.mxu0 0.0
  %707 = vmatprep.subr.mxu0 0.0
  %708 = vmatpush1.msra.mxu0 0.0
  %709 = vmatprep.subr.mxu0 0.0
  %710 = vmatpush1.msra.mxu0 0.0
  %711 = vmatprep.subr.mxu0 0.0
  %712 = vmatpush1.msra.mxu0 0.0
  %713 = vmatprep.subr.mxu0 0.0
  %714 = vmatpush1.msra.mxu0 0.0
  %715 = vmatprep.subr.mxu0 0.0
  %716 = vmatpush1.msra.mxu0 0.0
  %717 = vmatprep.subr.mxu0 0.0
  %718 = vmatpush1.msra.mxu0 0.0
  %719 = vmatprep.subr.mxu0 0.0
  %720 = vmatpush1.msra.mxu0 0.0
  %721 = vmatprep.subr.mxu0 0.0
  %722 = vmatpush1.msra.mxu0 0.0
  %723 = vmatprep.subr.mxu0 0.0
  %724 = vmatpush1.msra.mxu0 0.0
  %725 = vmatprep.subr.mxu0 0.0
  %726 = vmatpush1.msra.mxu0 0.0
  %727 = vmatprep.subr.mxu0 0.0
  %728 = vmatpush1.msra.mxu0 0.0
  %729 = vmatprep.subr.mxu0 0.0
  %730 = vmatpush1.msra.mxu0 0.0
  %731 = vmatprep.subr.mxu0 0.0
  %732 = vmatpush1.msra.mxu0 0.0
  %733 = vmatprep.subr.mxu0 0.0
  %734 = vmatpush1.msra.mxu0 0.0
  %735 = vmatprep.subr.mxu0 0.0
  %736 = vmatpush1.msra.mxu0 0.0
  %737 = vmatprep.mubr.f32.mxu0 0.0
  %738 = vmatmul.mubr.f32.gmra.mrb[0].mxu0 %v671
  %v739 = vpop.f32.mrb[0].mxu0
  %v740 = vadd.f32 0.0, %v739
  %v741 = vpop.f32.mrb[0].mxu0
  %742 = vdwg.mxu0
  %v743 = vadd.f32 %v618, %v740
  %v744 = vtanh.pop %v743
  %v745 = vxor.u32 %v743, 2147483648
  %v746 = vmul.f32 %v745, 1.442695
  %v747 = vpow.pop %v746
  %v748 = vadd.f32 %v747, 1.0
  %v749 = vrcp.pop %v748
  %v750 = vmul.f32 1.0, %v749
  %v751 = vsel %vm36, %v744, %v750
  %v752 = vmul.f32 %v751, 0.0
  %754 = vrot.lane.b32.xlu0 %v751, 64
  %v755 = vpop.permute.xlu0 %754
  %v757 = vmul.f32 %v751, %v755
  %759 = vrot.lane.b32.xlu0 %v757, 32
  %v760 = vpop.permute.xlu0 %759
  %v762 = vadd.f32 %v752, %v760
  %v763 = vtanh.pop %v762
  %765 = vrot.lane.b32.xlu0 %v763, 64
  %v766 = vpop.permute.xlu0 %765
  %v768 = vmul.f32 %v751, %v766
  %v770 = vlaneseq
  %v771 = vshrl.u32 %v770, 7
  %v772 = vsub.s32 0, %v771
  %v773 = vrot.slane %v668, %v772
  %776 = vrot.lane.b32.xlu0 %v768, 32
  %v777 = vpop.permute.xlu0 %776
  %v778 = vsel %vm669, %v777, 0
  %780 = vmatprep.subr.mxu0 0.0
  %781 = vmatpush1.msra.mxu0 %v664
  %782 = vmatprep.subr.mxu0 0.0
  %783 = vmatpush1.msra.mxu0 %v665
  %784 = vmatprep.subr.mxu0 0.0
  %785 = vmatpush1.msra.mxu0 %v666
  %786 = vmatprep.subr.mxu0 0.0
  %787 = vmatpush1.msra.mxu0 %v667
  %788 = vmatprep.subr.mxu0 0.0
  %789 = vmatpush1.msra.mxu0 0.0
  %790 = vmatprep.subr.mxu0 0.0
  %791 = vmatpush1.msra.mxu0 0.0
  %792 = vmatprep.subr.mxu0 0.0
  %793 = vmatpush1.msra.mxu0 0.0
  %794 = vmatprep.subr.mxu0 0.0
  %795 = vmatpush1.msra.mxu0 0.0
  %796 = vmatprep.subr.mxu0 0.0
  %797 = vmatpush1.msra.mxu0 0.0
  %798 = vmatprep.subr.mxu0 0.0
  %799 = vmatpush1.msra.mxu0 0.0
  %800 = vmatprep.subr.mxu0 0.0
  %801 = vmatpush1.msra.mxu0 0.0
  %802 = vmatprep.subr.mxu0 0.0
  %803 = vmatpush1.msra.mxu0 0.0
  %804 = vmatprep.subr.mxu0 0.0
  %805 = vmatpush1.msra.mxu0 0.0
  %806 = vmatprep.subr.mxu0 0.0
  %807 = vmatpush1.msra.mxu0 0.0
  %808 = vmatprep.subr.mxu0 0.0
  %809 = vmatpush1.msra.mxu0 0.0
  %810 = vmatprep.subr.mxu0 0.0
  %811 = vmatpush1.msra.mxu0 0.0
  %812 = vmatprep.subr.mxu0 0.0
  %813 = vmatpush1.msra.mxu0 0.0
  %814 = vmatprep.subr.mxu0 0.0
  %815 = vmatpush1.msra.mxu0 0.0
  %816 = vmatprep.subr.mxu0 0.0
  %817 = vmatpush1.msra.mxu0 0.0
  %818 = vmatprep.subr.mxu0 0.0
  %819 = vmatpush1.msra.mxu0 0.0
  %820 = vmatprep.subr.mxu0 0.0
  %821 = vmatpush1.msra.mxu0 0.0
  %822 = vmatprep.subr.mxu0 0.0
  %823 = vmatpush1.msra.mxu0 0.0
  %824 = vmatprep.subr.mxu0 0.0
  %825 = vmatpush1.msra.mxu0 0.0
  %826 = vmatprep.subr.mxu0 0.0
  %827 = vmatpush1.msra.mxu0 0.0
  %828 = vmatprep.subr.mxu0 0.0
  %829 = vmatpush1.msra.mxu0 0.0
  %830 = vmatprep.subr.mxu0 0.0
  %831 = vmatpush1.msra.mxu0 0.0
  %832 = vmatprep.subr.mxu0 0.0
  %833 = vmatpush1.msra.mxu0 0.0
  %834 = vmatprep.subr.mxu0 0.0
  %835 = vmatpush1.msra.mxu0 0.0
  %836 = vmatprep.subr.mxu0 0.0
  %837 = vmatpush1.msra.mxu0 0.0
  %838 = vmatprep.subr.mxu0 0.0
  %839 = vmatpush1.msra.mxu0 0.0
  %840 = vmatprep.subr.mxu0 0.0
  %841 = vmatpush1.msra.mxu0 0.0
  %842 = vmatprep.subr.mxu0 0.0
  %843 = vmatpush1.msra.mxu0 0.0
  %844 = vmatprep.mubr.f32.mxu0 0.0
  %845 = vmatmul.mubr.f32.gmra.mrb[0].mxu0 %v778
  %v846 = vpop.f32.mrb[0].mxu0
  %v847 = vadd.f32 %v773, %v846
  %v848 = vpop.f32.mrb[0].mxu0
  %849 = vdwg.mxu0
  %850 = vmatprep.subr.mxu0 0.0
  %851 = vmatpush1.msra.mxu0 %v660
  %852 = vmatprep.subr.mxu0 0.0
  %853 = vmatpush1.msra.mxu0 %v661
  %854 = vmatprep.subr.mxu0 0.0
  %855 = vmatpush1.msra.mxu0 %v662
  %856 = vmatprep.subr.mxu0 0.0
  %857 = vmatpush1.msra.mxu0 %v663
  %858 = vmatprep.subr.mxu0 0.0
  %859 = vmatpush1.msra.mxu0 0.0
  %860 = vmatprep.subr.mxu0 0.0
  %861 = vmatpush1.msra.mxu0 0.0
  %862 = vmatprep.subr.mxu0 0.0
  %863 = vmatpush1.msra.mxu0 0.0
  %864 = vmatprep.subr.mxu0 0.0
  %865 = vmatpush1.msra.mxu0 0.0
  %866 = vmatprep.subr.mxu0 0.0
  %867 = vmatpush1.msra.mxu0 0.0
  %868 = vmatprep.subr.mxu0 0.0
  %869 = vmatpush1.msra.mxu0 0.0
  %870 = vmatprep.subr.mxu0 0.0
  %871 = vmatpush1.msra.mxu0 0.0
  %872 = vmatprep.subr.mxu0 0.0
  %873 = vmatpush1.msra.mxu0 0.0
  %874 = vmatprep.subr.mxu0 0.0
  %875 = vmatpush1.msra.mxu0 0.0
  %876 = vmatprep.subr.mxu0 0.0
  %877 = vmatpush1.msra.mxu0 0.0
  %878 = vmatprep.subr.mxu0 0.0
  %879 = vmatpush1.msra.mxu0 0.0
  %880 = vmatprep.subr.mxu0 0.0
  %881 = vmatpush1.msra.mxu0 0.0
  %882 = vmatprep.subr.mxu0 0.0
  %883 = vmatpush1.msra.mxu0 0.0
  %884 = vmatprep.subr.mxu0 0.0
  %885 = vmatpush1.msra.mxu0 0.0
  %886 = vmatprep.subr.mxu0 0.0
  %887 = vmatpush1.msra.mxu0 0.0
  %888 = vmatprep.subr.mxu0 0.0
  %889 = vmatpush1.msra.mxu0 0.0
  %890 = vmatprep.subr.mxu0 0.0
  %891 = vmatpush1.msra.mxu0 0.0
  %892 = vmatprep.subr.mxu0 0.0
  %893 = vmatpush1.msra.mxu0 0.0
  %894 = vmatprep.subr.mxu0 0.0
  %895 = vmatpush1.msra.mxu0 0.0
  %896 = vmatprep.subr.mxu0 0.0
  %897 = vmatpush1.msra.mxu0 0.0
  %898 = vmatprep.subr.mxu0 0.0
  %899 = vmatpush1.msra.mxu0 0.0
  %900 = vmatprep.subr.mxu0 0.0
  %901 = vmatpush1.msra.mxu0 0.0
  %902 = vmatprep.subr.mxu0 0.0
  %903 = vmatpush1.msra.mxu0 0.0
  %904 = vmatprep.subr.mxu0 0.0
  %905 = vmatpush1.msra.mxu0 0.0
  %906 = vmatprep.subr.mxu0 0.0
  %907 = vmatpush1.msra.mxu0 0.0
  %908 = vmatprep.subr.mxu0 0.0
  %909 = vmatpush1.msra.mxu0 0.0
  %910 = vmatprep.subr.mxu0 0.0
  %911 = vmatpush1.msra.mxu0 0.0
  %912 = vmatprep.subr.mxu0 0.0
  %913 = vmatpush1.msra.mxu0 0.0
  %914 = vmatprep.mubr.f32.mxu0 0.0
  %915 = vmatmul.mubr.f32.gmra.mrb[0].mxu0 %v671
  %v916 = vpop.f32.mrb[0].mxu0
  %v917 = vadd.f32 0.0, %v916
  %v918 = vpop.f32.mrb[0].mxu0
  %919 = vdwg.mxu0
  %v920 = vadd.f32 %v847, %v917
  %v921 = vtanh.pop %v920
  %v922 = vxor.u32 %v920, 2147483648
  %v923 = vmul.f32 %v922, 1.442695
  %v924 = vpow.pop %v923
  %v925 = vadd.f32 %v924, 1.0
  %v926 = vrcp.pop %v925
  %v927 = vmul.f32 1.0, %v926
  %v928 = vsel %vm36, %v921, %v927
  %v929 = vmul.f32 %v928, 0.0
  %931 = vrot.lane.b32.xlu0 %v928, 64
  %v932 = vpop.permute.xlu0 %931
  %v934 = vmul.f32 %v928, %v932
  %936 = vrot.lane.b32.xlu0 %v934, 32
  %v937 = vpop.permute.xlu0 %936
  %v939 = vadd.f32 %v929, %v937
  %v940 = vtanh.pop %v939
  %942 = vrot.lane.b32.xlu0 %v940, 64
  %v943 = vpop.permute.xlu0 %942
  %v945 = vmul.f32 %v928, %v943
  %946 = vmatprep.subr.mxu0 0.0
  %947 = vmatpush1.msra.mxu0 %v656
  %948 = vmatprep.subr.mxu0 0.0
  %949 = vmatpush1.msra.mxu0 %v657
  %950 = vmatprep.subr.mxu0 0.0
  %951 = vmatpush1.msra.mxu0 %v658
  %952 = vmatprep.subr.mxu0 0.0
  %953 = vmatpush1.msra.mxu0 %v659
  %954 = vmatprep.subr.mxu0 0.0
  %955 = vmatpush1.msra.mxu0 0.0
  %956 = vmatprep.subr.mxu0 0.0
  %957 = vmatpush1.msra.mxu0 0.0
  %958 = vmatprep.subr.mxu0 0.0
  %959 = vmatpush1.msra.mxu0 0.0
  %960 = vmatprep.subr.mxu0 0.0
  %961 = vmatpush1.msra.mxu0 0.0
  %962 = vmatprep.subr.mxu0 0.0
  %963 = vmatpush1.msra.mxu0 0.0
  %964 = vmatprep.subr.mxu0 0.0
  %965 = vmatpush1.msra.mxu0 0.0
  %966 = vmatprep.subr.mxu0 0.0
  %967 = vmatpush1.msra.mxu0 0.0
  %968 = vmatprep.subr.mxu0 0.0
  %969 = vmatpush1.msra.mxu0 0.0
  %970 = vmatprep.subr.mxu0 0.0
  %971 = vmatpush1.msra.mxu0 0.0
  %972 = vmatprep.subr.mxu0 0.0
  %973 = vmatpush1.msra.mxu0 0.0
  %974 = vmatprep.subr.mxu0 0.0
  %975 = vmatpush1.msra.mxu0 0.0
  %976 = vmatprep.subr.mxu0 0.0
  %977 = vmatpush1.msra.mxu0 0.0
  %978 = vmatprep.subr.mxu0 0.0
  %979 = vmatpush1.msra.mxu0 0.0
  %980 = vmatprep.subr.mxu0 0.0
  %981 = vmatpush1.msra.mxu0 0.0
  %982 = vmatprep.subr.mxu0 0.0
  %983 = vmatpush1.msra.mxu0 0.0
  %984 = vmatprep.subr.mxu0 0.0
  %985 = vmatpush1.msra.mxu0 0.0
  %986 = vmatprep.subr.mxu0 0.0
  %987 = vmatpush1.msra.mxu0 0.0
  %988 = vmatprep.subr.mxu0 0.0
  %989 = vmatpush1.msra.mxu0 0.0
  %990 = vmatprep.subr.mxu0 0.0
  %991 = vmatpush1.msra.mxu0 0.0
  %992 = vmatprep.subr.mxu0 0.0
  %993 = vmatpush1.msra.mxu0 0.0
  %994 = vmatprep.subr.mxu0 0.0
  %995 = vmatpush1.msra.mxu0 0.0
  %996 = vmatprep.subr.mxu0 0.0
  %997 = vmatpush1.msra.mxu0 0.0
  %998 = vmatprep.subr.mxu0 0.0
  %999 = vmatpush1.msra.mxu0 0.0
  %1000 = vmatprep.subr.mxu0 0.0
  %1001 = vmatpush1.msra.mxu0 0.0
  %1002 = vmatprep.subr.mxu0 0.0
  %1003 = vmatpush1.msra.mxu0 0.0
  %1004 = vmatprep.subr.mxu0 0.0
  %1005 = vmatpush1.msra.mxu0 0.0
  %1006 = vmatprep.subr.mxu0 0.0
  %1007 = vmatpush1.msra.mxu0 0.0
  %1008 = vmatprep.subr.mxu0 0.0
  %1009 = vmatpush1.msra.mxu0 0.0
  %1010 = vmatprep.mubr.f32.mxu0 0.0
  %1011 = vmatmul.mubr.f32.gmra.mrb[0].mxu0 %v778
  %v1012 = vpop.f32.mrb[0].mxu0
  %v1013 = vadd.f32 0.0, %v1012
  %v1014 = vpop.f32.mrb[0].mxu0
  %1015 = vdwg.mxu0
  %v1016 = vadd.f32 %v623, %v1013
  %v1017 = vtanh.pop %v1016
  %v1018 = vxor.u32 %v1016, 2147483648
  %v1019 = vmul.f32 %v1018, 1.442695
  %v1020 = vpow.pop %v1019
  %v1021 = vadd.f32 %v1020, 1.0
  %v1022 = vrcp.pop %v1021
  %v1023 = vmul.f32 1.0, %v1022
  %v1024 = vsel %vm36, %v1017, %v1023
  %v1025 = vmul.f32 %v1024, %v762
  %1027 = vrot.lane.b32.xlu0 %v1024, 64
  %v1028 = vpop.permute.xlu0 %1027
  %v1030 = vmul.f32 %v1024, %v1028
  %1032 = vrot.lane.b32.xlu0 %v1030, 32
  %v1033 = vpop.permute.xlu0 %1032
  %v1035 = vadd.f32 %v1025, %v1033
  %v1036 = vtanh.pop %v1035
  %1038 = vrot.lane.b32.xlu0 %v1036, 64
  %v1039 = vpop.permute.xlu0 %1038
  %v1041 = vmul.f32 %v1024, %v1039
  %1043 = vrot.lane.b32.xlu0 %v1041, 32
  %v1044 = vpop.permute.xlu0 %1043
  %v1045 = vsel %vm669, %v1044, 0
  %1047 = vmatprep.subr.mxu0 0.0
  %1048 = vmatpush1.msra.mxu0 %v664
  %1049 = vmatprep.subr.mxu0 0.0
  %1050 = vmatpush1.msra.mxu0 %v665
  %1051 = vmatprep.subr.mxu0 0.0
  %1052 = vmatpush1.msra.mxu0 %v666
  %1053 = vmatprep.subr.mxu0 0.0
  %1054 = vmatpush1.msra.mxu0 %v667
  %1055 = vmatprep.subr.mxu0 0.0
  %1056 = vmatpush1.msra.mxu0 0.0
  %1057 = vmatprep.subr.mxu0 0.0
  %1058 = vmatpush1.msra.mxu0 0.0
  %1059 = vmatprep.subr.mxu0 0.0
  %1060 = vmatpush1.msra.mxu0 0.0
  %1061 = vmatprep.subr.mxu0 0.0
  %1062 = vmatpush1.msra.mxu0 0.0
  %1063 = vmatprep.subr.mxu0 0.0
  %1064 = vmatpush1.msra.mxu0 0.0
  %1065 = vmatprep.subr.mxu0 0.0
  %1066 = vmatpush1.msra.mxu0 0.0
  %1067 = vmatprep.subr.mxu0 0.0
  %1068 = vmatpush1.msra.mxu0 0.0
  %1069 = vmatprep.subr.mxu0 0.0
  %1070 = vmatpush1.msra.mxu0 0.0
  %1071 = vmatprep.subr.mxu0 0.0
  %1072 = vmatpush1.msra.mxu0 0.0
  %1073 = vmatprep.subr.mxu0 0.0
  %1074 = vmatpush1.msra.mxu0 0.0
  %1075 = vmatprep.subr.mxu0 0.0
  %1076 = vmatpush1.msra.mxu0 0.0
  %1077 = vmatprep.subr.mxu0 0.0
  %1078 = vmatpush1.msra.mxu0 0.0
  %1079 = vmatprep.subr.mxu0 0.0
  %1080 = vmatpush1.msra.mxu0 0.0
  %1081 = vmatprep.subr.mxu0 0.0
  %1082 = vmatpush1.msra.mxu0 0.0
  %1083 = vmatprep.subr.mxu0 0.0
  %1084 = vmatpush1.msra.mxu0 0.0
  %1085 = vmatprep.subr.mxu0 0.0
  %1086 = vmatpush1.msra.mxu0 0.0
  %1087 = vmatprep.subr.mxu0 0.0
  %1088 = vmatpush1.msra.mxu0 0.0
  %1089 = vmatprep.subr.mxu0 0.0
  %1090 = vmatpush1.msra.mxu0 0.0
  %1091 = vmatprep.subr.mxu0 0.0
  %1092 = vmatpush1.msra.mxu0 0.0
  %1093 = vmatprep.subr.mxu0 0.0
  %1094 = vmatpush1.msra.mxu0 0.0
  %1095 = vmatprep.subr.mxu0 0.0
  %1096 = vmatpush1.msra.mxu0 0.0
  %1097 = vmatprep.subr.mxu0 0.0
  %1098 = vmatpush1.msra.mxu0 0.0
  %1099 = vmatprep.subr.mxu0 0.0
  %1100 = vmatpush1.msra.mxu0 0.0
  %1101 = vmatprep.subr.mxu0 0.0
  %1102 = vmatpush1.msra.mxu0 0.0
  %1103 = vmatprep.subr.mxu0 0.0
  %1104 = vmatpush1.msra.mxu0 0.0
  %1105 = vmatprep.subr.mxu0 0.0
  %1106 = vmatpush1.msra.mxu0 0.0
  %1107 = vmatprep.subr.mxu0 0.0
  %1108 = vmatpush1.msra.mxu0 0.0
  %1109 = vmatprep.subr.mxu0 0.0
  %1110 = vmatpush1.msra.mxu0 0.0
  %1111 = vmatprep.mubr.f32.mxu0 0.0
  %1112 = vmatmul.mubr.f32.gmra.mrb[0].mxu0 %v1045
  %v1113 = vpop.f32.mrb[0].mxu0
  %v1114 = vadd.f32 %v773, %v1113
  %v1115 = vpop.f32.mrb[0].mxu0
  %1116 = vdwg.mxu0
  %1118 = vrot.lane.b32.xlu0 %v945, 32
  %v1119 = vpop.permute.xlu0 %1118
  %v1120 = vsel %vm669, %v1119, 0
  %1122 = vmatprep.subr.mxu0 0.0
  %1123 = vmatpush1.msra.mxu0 %v660
  %1124 = vmatprep.subr.mxu0 0.0
  %1125 = vmatpush1.msra.mxu0 %v661
  %1126 = vmatprep.subr.mxu0 0.0
  %1127 = vmatpush1.msra.mxu0 %v662
  %1128 = vmatprep.subr.mxu0 0.0
  %1129 = vmatpush1.msra.mxu0 %v663
  %1130 = vmatprep.subr.mxu0 0.0
  %1131 = vmatpush1.msra.mxu0 0.0
  %1132 = vmatprep.subr.mxu0 0.0
  %1133 = vmatpush1.msra.mxu0 0.0
  %1134 = vmatprep.subr.mxu0 0.0
  %1135 = vmatpush1.msra.mxu0 0.0
  %1136 = vmatprep.subr.mxu0 0.0
  %1137 = vmatpush1.msra.mxu0 0.0
  %1138 = vmatprep.subr.mxu0 0.0
  %1139 = vmatpush1.msra.mxu0 0.0
  %1140 = vmatprep.subr.mxu0 0.0
  %1141 = vmatpush1.msra.mxu0 0.0
  %1142 = vmatprep.subr.mxu0 0.0
  %1143 = vmatpush1.msra.mxu0 0.0
  %1144 = vmatprep.subr.mxu0 0.0
  %1145 = vmatpush1.msra.mxu0 0.0
  %1146 = vmatprep.subr.mxu0 0.0
  %1147 = vmatpush1.msra.mxu0 0.0
  %1148 = vmatprep.subr.mxu0 0.0
  %1149 = vmatpush1.msra.mxu0 0.0
  %1150 = vmatprep.subr.mxu0 0.0
  %1151 = vmatpush1.msra.mxu0 0.0
  %1152 = vmatprep.subr.mxu0 0.0
  %1153 = vmatpush1.msra.mxu0 0.0
  %1154 = vmatprep.subr.mxu0 0.0
  %1155 = vmatpush1.msra.mxu0 0.0
  %1156 = vmatprep.subr.mxu0 0.0
  %1157 = vmatpush1.msra.mxu0 0.0
  %1158 = vmatprep.subr.mxu0 0.0
  %1159 = vmatpush1.msra.mxu0 0.0
  %1160 = vmatprep.subr.mxu0 0.0
  %1161 = vmatpush1.msra.mxu0 0.0
  %1162 = vmatprep.subr.mxu0 0.0
  %1163 = vmatpush1.msra.mxu0 0.0
  %1164 = vmatprep.subr.mxu0 0.0
  %1165 = vmatpush1.msra.mxu0 0.0
  %1166 = vmatprep.subr.mxu0 0.0
  %1167 = vmatpush1.msra.mxu0 0.0
  %1168 = vmatprep.subr.mxu0 0.0
  %1169 = vmatpush1.msra.mxu0 0.0
  %1170 = vmatprep.subr.mxu0 0.0
  %1171 = vmatpush1.msra.mxu0 0.0
  %1172 = vmatprep.subr.mxu0 0.0
  %1173 = vmatpush1.msra.mxu0 0.0
  %1174 = vmatprep.subr.mxu0 0.0
  %1175 = vmatpush1.msra.mxu0 0.0
  %1176 = vmatprep.subr.mxu0 0.0
  %1177 = vmatpush1.msra.mxu0 0.0
  %1178 = vmatprep.subr.mxu0 0.0
  %1179 = vmatpush1.msra.mxu0 0.0
  %1180 = vmatprep.subr.mxu0 0.0
  %1181 = vmatpush1.msra.mxu0 0.0
  %1182 = vmatprep.subr.mxu0 0.0
  %1183 = vmatpush1.msra.mxu0 0.0
  %1184 = vmatprep.subr.mxu0 0.0
  %1185 = vmatpush1.msra.mxu0 0.0
  %1186 = vmatprep.mubr.f32.mxu0 0.0
  %1187 = vmatmul.mubr.f32.gmra.mrb[0].mxu0 %v1120
  %v1188 = vpop.f32.mrb[0].mxu0
  %v1189 = vadd.f32 0.0, %v1188
  %v1190 = vpop.f32.mrb[0].mxu0
  %1191 = vdwg.mxu0
  %v1192 = vadd.f32 %v1114, %v1189
  %v1193 = vtanh.pop %v1192
  %v1194 = vxor.u32 %v1192, 2147483648
  %v1195 = vmul.f32 %v1194, 1.442695
  %v1196 = vpow.pop %v1195
  %v1197 = vadd.f32 %v1196, 1.0
  %v1198 = vrcp.pop %v1197
  %v1199 = vmul.f32 1.0, %v1198
  %v1200 = vsel %vm36, %v1193, %v1199
  %v1201 = vmul.f32 %v1200, %v939
  %1203 = vrot.lane.b32.xlu0 %v1200, 64
  %v1204 = vpop.permute.xlu0 %1203
  %v1206 = vmul.f32 %v1200, %v1204
  %1208 = vrot.lane.b32.xlu0 %v1206, 32
  %v1209 = vpop.permute.xlu0 %1208
  %v1211 = vadd.f32 %v1201, %v1209
  %v1212 = vtanh.pop %v1211
  %1214 = vrot.lane.b32.xlu0 %v1212, 64
  %v1215 = vpop.permute.xlu0 %1214
  %v1217 = vmul.f32 %v1200, %v1215
  %1218 = vmatprep.subr.mxu0 0.0
  %1219 = vmatpush1.msra.mxu0 %v656
  %1220 = vmatprep.subr.mxu0 0.0
  %1221 = vmatpush1.msra.mxu0 %v657
  %1222 = vmatprep.subr.mxu0 0.0
  %1223 = vmatpush1.msra.mxu0 %v658
  %1224 = vmatprep.subr.mxu0 0.0
  %1225 = vmatpush1.msra.mxu0 %v659
  %1226 = vmatprep.subr.mxu0 0.0
  %1227 = vmatpush1.msra.mxu0 0.0
  %1228 = vmatprep.subr.mxu0 0.0
  %1229 = vmatpush1.msra.mxu0 0.0
  %1230 = vmatprep.subr.mxu0 0.0
  %1231 = vmatpush1.msra.mxu0 0.0
  %1232 = vmatprep.subr.mxu0 0.0
  %1233 = vmatpush1.msra.mxu0 0.0
  %1234 = vmatprep.subr.mxu0 0.0
  %1235 = vmatpush1.msra.mxu0 0.0
  %1236 = vmatprep.subr.mxu0 0.0
  %1237 = vmatpush1.msra.mxu0 0.0
  %1238 = vmatprep.subr.mxu0 0.0
  %1239 = vmatpush1.msra.mxu0 0.0
  %1240 = vmatprep.subr.mxu0 0.0
  %1241 = vmatpush1.msra.mxu0 0.0
  %1242 = vmatprep.subr.mxu0 0.0
  %1243 = vmatpush1.msra.mxu0 0.0
  %1244 = vmatprep.subr.mxu0 0.0
  %1245 = vmatpush1.msra.mxu0 0.0
  %1246 = vmatprep.subr.mxu0 0.0
  %1247 = vmatpush1.msra.mxu0 0.0
  %1248 = vmatprep.subr.mxu0 0.0
  %1249 = vmatpush1.msra.mxu0 0.0
  %1250 = vmatprep.subr.mxu0 0.0
  %1251 = vmatpush1.msra.mxu0 0.0
  %1252 = vmatprep.subr.mxu0 0.0
  %1253 = vmatpush1.msra.mxu0 0.0
  %1254 = vmatprep.subr.mxu0 0.0
  %1255 = vmatpush1.msra.mxu0 0.0
  %1256 = vmatprep.subr.mxu0 0.0
  %1257 = vmatpush1.msra.mxu0 0.0
  %1258 = vmatprep.subr.mxu0 0.0
  %1259 = vmatpush1.msra.mxu0 0.0
  %1260 = vmatprep.subr.mxu0 0.0
  %1261 = vmatpush1.msra.mxu0 0.0
  %1262 = vmatprep.subr.mxu0 0.0
  %1263 = vmatpush1.msra.mxu0 0.0
  %1264 = vmatprep.subr.mxu0 0.0
  %1265 = vmatpush1.msra.mxu0 0.0
  %1266 = vmatprep.subr.mxu0 0.0
  %1267 = vmatpush1.msra.mxu0 0.0
  %1268 = vmatprep.subr.mxu0 0.0
  %1269 = vmatpush1.msra.mxu0 0.0
  %1270 = vmatprep.subr.mxu0 0.0
  %1271 = vmatpush1.msra.mxu0 0.0
  %1272 = vmatprep.subr.mxu0 0.0
  %1273 = vmatpush1.msra.mxu0 0.0
  %1274 = vmatprep.subr.mxu0 0.0
  %1275 = vmatpush1.msra.mxu0 0.0
  %1276 = vmatprep.subr.mxu0 0.0
  %1277 = vmatpush1.msra.mxu0 0.0
  %1278 = vmatprep.subr.mxu0 0.0
  %1279 = vmatpush1.msra.mxu0 0.0
  %1280 = vmatprep.subr.mxu0 0.0
  %1281 = vmatpush1.msra.mxu0 0.0
  %1282 = vmatprep.mubr.f32.mxu0 0.0
  %1283 = vmatmul.mubr.f32.gmra.mrb[0].mxu0 %v1045
  %v1284 = vpop.f32.mrb[0].mxu0
  %v1285 = vadd.f32 0.0, %v1284
  %v1286 = vpop.f32.mrb[0].mxu0
  %1287 = vdwg.mxu0
  %v1288 = vadd.f32 %v628, %v1285
  %v1289 = vtanh.pop %v1288
  %v1290 = vxor.u32 %v1288, 2147483648
  %v1291 = vmul.f32 %v1290, 1.442695
  %v1292 = vpow.pop %v1291
  %v1293 = vadd.f32 %v1292, 1.0
  %v1294 = vrcp.pop %v1293
  %v1295 = vmul.f32 1.0, %v1294
  %v1296 = vsel %vm36, %v1289, %v1295
  %v1297 = vmul.f32 %v1296, %v1035
  %1299 = vrot.lane.b32.xlu0 %v1296, 64
  %v1300 = vpop.permute.xlu0 %1299
  %v1302 = vmul.f32 %v1296, %v1300
  %1304 = vrot.lane.b32.xlu0 %v1302, 32
  %v1305 = vpop.permute.xlu0 %1304
  %v1307 = vadd.f32 %v1297, %v1305
  %v1308 = vtanh.pop %v1307
  %1310 = vrot.lane.b32.xlu0 %v1308, 64
  %v1311 = vpop.permute.xlu0 %1310
  %v1313 = vmul.f32 %v1296, %v1311
  %1315 = vrot.lane.b32.xlu0 %v1313, 32
  %v1316 = vpop.permute.xlu0 %1315
  %v1317 = vsel %vm669, %v1316, 0
  %1319 = vmatprep.subr.mxu0 0.0
  %1320 = vmatpush1.msra.mxu0 %v664
  %1321 = vmatprep.subr.mxu0 0.0
  %1322 = vmatpush1.msra.mxu0 %v665
  %1323 = vmatprep.subr.mxu0 0.0
  %1324 = vmatpush1.msra.mxu0 %v666
  %1325 = vmatprep.subr.mxu0 0.0
  %1326 = vmatpush1.msra.mxu0 %v667
  %1327 = vmatprep.subr.mxu0 0.0
  %1328 = vmatpush1.msra.mxu0 0.0
  %1329 = vmatprep.subr.mxu0 0.0
  %1330 = vmatpush1.msra.mxu0 0.0
  %1331 = vmatprep.subr.mxu0 0.0
  %1332 = vmatpush1.msra.mxu0 0.0
  %1333 = vmatprep.subr.mxu0 0.0
  %1334 = vmatpush1.msra.mxu0 0.0
  %1335 = vmatprep.subr.mxu0 0.0
  %1336 = vmatpush1.msra.mxu0 0.0
  %1337 = vmatprep.subr.mxu0 0.0
  %1338 = vmatpush1.msra.mxu0 0.0
  %1339 = vmatprep.subr.mxu0 0.0
  %1340 = vmatpush1.msra.mxu0 0.0
  %1341 = vmatprep.subr.mxu0 0.0
  %1342 = vmatpush1.msra.mxu0 0.0
  %1343 = vmatprep.subr.mxu0 0.0
  %1344 = vmatpush1.msra.mxu0 0.0
  %1345 = vmatprep.subr.mxu0 0.0
  %1346 = vmatpush1.msra.mxu0 0.0
  %1347 = vmatprep.subr.mxu0 0.0
  %1348 = vmatpush1.msra.mxu0 0.0
  %1349 = vmatprep.subr.mxu0 0.0
  %1350 = vmatpush1.msra.mxu0 0.0
  %1351 = vmatprep.subr.mxu0 0.0
  %1352 = vmatpush1.msra.mxu0 0.0
  %1353 = vmatprep.subr.mxu0 0.0
  %1354 = vmatpush1.msra.mxu0 0.0
  %1355 = vmatprep.subr.mxu0 0.0
  %1356 = vmatpush1.msra.mxu0 0.0
  %1357 = vmatprep.subr.mxu0 0.0
  %1358 = vmatpush1.msra.mxu0 0.0
  %1359 = vmatprep.subr.mxu0 0.0
  %1360 = vmatpush1.msra.mxu0 0.0
  %1361 = vmatprep.subr.mxu0 0.0
  %1362 = vmatpush1.msra.mxu0 0.0
  %1363 = vmatprep.subr.mxu0 0.0
  %1364 = vmatpush1.msra.mxu0 0.0
  %1365 = vmatprep.subr.mxu0 0.0
  %1366 = vmatpush1.msra.mxu0 0.0
  %1367 = vmatprep.subr.mxu0 0.0
  %1368 = vmatpush1.msra.mxu0 0.0
  %1369 = vmatprep.subr.mxu0 0.0
  %1370 = vmatpush1.msra.mxu0 0.0
  %1371 = vmatprep.subr.mxu0 0.0
  %1372 = vmatpush1.msra.mxu0 0.0
  %1373 = vmatprep.subr.mxu0 0.0
  %1374 = vmatpush1.msra.mxu0 0.0
  %1375 = vmatprep.subr.mxu0 0.0
  %1376 = vmatpush1.msra.mxu0 0.0
  %1377 = vmatprep.subr.mxu0 0.0
  %1378 = vmatpush1.msra.mxu0 0.0
  %1379 = vmatprep.subr.mxu0 0.0
  %1380 = vmatpush1.msra.mxu0 0.0
  %1381 = vmatprep.subr.mxu0 0.0
  %1382 = vmatpush1.msra.mxu0 0.0
  %1383 = vmatprep.mubr.f32.mxu0 0.0
  %1384 = vmatmul.mubr.f32.gmra.mrb[0].mxu0 %v1317
  %v1385 = vpop.f32.mrb[0].mxu0
  %v1386 = vadd.f32 %v773, %v1385
  %v1387 = vpop.f32.mrb[0].mxu0
  %1388 = vdwg.mxu0
  %1390 = vrot.lane.b32.xlu0 %v1217, 32
  %v1391 = vpop.permute.xlu0 %1390
  %v1392 = vsel %vm669, %v1391, 0
  %1394 = vmatprep.subr.mxu0 0.0
  %1395 = vmatpush1.msra.mxu0 %v660
  %1396 = vmatprep.subr.mxu0 0.0
  %1397 = vmatpush1.msra.mxu0 %v661
  %1398 = vmatprep.subr.mxu0 0.0
  %1399 = vmatpush1.msra.mxu0 %v662
  %1400 = vmatprep.subr.mxu0 0.0
  %1401 = vmatpush1.msra.mxu0 %v663
  %1402 = vmatprep.subr.mxu0 0.0
  %1403 = vmatpush1.msra.mxu0 0.0
  %1404 = vmatprep.subr.mxu0 0.0
  %1405 = vmatpush1.msra.mxu0 0.0
  %1406 = vmatprep.subr.mxu0 0.0
  %1407 = vmatpush1.msra.mxu0 0.0
  %1408 = vmatprep.subr.mxu0 0.0
  %1409 = vmatpush1.msra.mxu0 0.0
  %1410 = vmatprep.subr.mxu0 0.0
  %1411 = vmatpush1.msra.mxu0 0.0
  %1412 = vmatprep.subr.mxu0 0.0
  %1413 = vmatpush1.msra.mxu0 0.0
  %1414 = vmatprep.subr.mxu0 0.0
  %1415 = vmatpush1.msra.mxu0 0.0
  %1416 = vmatprep.subr.mxu0 0.0
  %1417 = vmatpush1.msra.mxu0 0.0
  %1418 = vmatprep.subr.mxu0 0.0
  %1419 = vmatpush1.msra.mxu0 0.0
  %1420 = vmatprep.subr.mxu0 0.0
  %1421 = vmatpush1.msra.mxu0 0.0
  %1422 = vmatprep.subr.mxu0 0.0
  %1423 = vmatpush1.msra.mxu0 0.0
  %1424 = vmatprep.subr.mxu0 0.0
  %1425 = vmatpush1.msra.mxu0 0.0
  %1426 = vmatprep.subr.mxu0 0.0
  %1427 = vmatpush1.msra.mxu0 0.0
  %1428 = vmatprep.subr.mxu0 0.0
  %1429 = vmatpush1.msra.mxu0 0.0
  %1430 = vmatprep.subr.mxu0 0.0
  %1431 = vmatpush1.msra.mxu0 0.0
  %1432 = vmatprep.subr.mxu0 0.0
  %1433 = vmatpush1.msra.mxu0 0.0
  %1434 = vmatprep.subr.mxu0 0.0
  %1435 = vmatpush1.msra.mxu0 0.0
  %1436 = vmatprep.subr.mxu0 0.0
  %1437 = vmatpush1.msra.mxu0 0.0
  %1438 = vmatprep.subr.mxu0 0.0
  %1439 = vmatpush1.msra.mxu0 0.0
  %1440 = vmatprep.subr.mxu0 0.0
  %1441 = vmatpush1.msra.mxu0 0.0
  %1442 = vmatprep.subr.mxu0 0.0
  %1443 = vmatpush1.msra.mxu0 0.0
  %1444 = vmatprep.subr.mxu0 0.0
  %1445 = vmatpush1.msra.mxu0 0.0
  %1446 = vmatprep.subr.mxu0 0.0
  %1447 = vmatpush1.msra.mxu0 0.0
  %1448 = vmatprep.subr.mxu0 0.0
  %1449 = vmatpush1.msra.mxu0 0.0
  %1450 = vmatprep.subr.mxu0 0.0
  %1451 = vmatpush1.msra.mxu0 0.0
  %1452 = vmatprep.subr.mxu0 0.0
  %1453 = vmatpush1.msra.mxu0 0.0
  %1454 = vmatprep.subr.mxu0 0.0
  %1455 = vmatpush1.msra.mxu0 0.0
  %1456 = vmatprep.subr.mxu0 0.0
  %1457 = vmatpush1.msra.mxu0 0.0
  %1458 = vmatprep.mubr.f32.mxu0 0.0
  %1459 = vmatmul.mubr.f32.gmra.mrb[0].mxu0 %v1392
  %v1460 = vpop.f32.mrb[0].mxu0
  %v1461 = vadd.f32 0.0, %v1460
  %v1462 = vpop.f32.mrb[0].mxu0
  %1463 = vdwg.mxu0
  %v1464 = vadd.f32 %v1386, %v1461
  %v1465 = vtanh.pop %v1464
  %v1466 = vxor.u32 %v1464, 2147483648
  %v1467 = vmul.f32 %v1466, 1.442695
  %v1468 = vpow.pop %v1467
  %v1469 = vadd.f32 %v1468, 1.0
  %v1470 = vrcp.pop %v1469
  %v1471 = vmul.f32 1.0, %v1470
  %v1472 = vsel %vm36, %v1465, %v1471
  %v1473 = vmul.f32 %v1472, %v1211
  %1475 = vrot.lane.b32.xlu0 %v1472, 64
  %v1476 = vpop.permute.xlu0 %1475
  %v1478 = vmul.f32 %v1472, %v1476
  %1480 = vrot.lane.b32.xlu0 %v1478, 32
  %v1481 = vpop.permute.xlu0 %1480
  %v1483 = vadd.f32 %v1473, %v1481
  %v1484 = vtanh.pop %v1483
  %1486 = vrot.lane.b32.xlu0 %v1484, 64
  %v1487 = vpop.permute.xlu0 %1486
  %v1489 = vmul.f32 %v1472, %v1487
  %1490 = vmatprep.subr.mxu0 0.0
  %1491 = vmatpush1.msra.mxu0 %v656
  %1492 = vmatprep.subr.mxu0 0.0
  %1493 = vmatpush1.msra.mxu0 %v657
  %1494 = vmatprep.subr.mxu0 0.0
  %1495 = vmatpush1.msra.mxu0 %v658
  %1496 = vmatprep.subr.mxu0 0.0
  %1497 = vmatpush1.msra.mxu0 %v659
  %1498 = vmatprep.subr.mxu0 0.0
  %1499 = vmatpush1.msra.mxu0 0.0
  %1500 = vmatprep.subr.mxu0 0.0
  %1501 = vmatpush1.msra.mxu0 0.0
  %1502 = vmatprep.subr.mxu0 0.0
  %1503 = vmatpush1.msra.mxu0 0.0
  %1504 = vmatprep.subr.mxu0 0.0
  %1505 = vmatpush1.msra.mxu0 0.0
  %1506 = vmatprep.subr.mxu0 0.0
  %1507 = vmatpush1.msra.mxu0 0.0
  %1508 = vmatprep.subr.mxu0 0.0
  %1509 = vmatpush1.msra.mxu0 0.0
  %1510 = vmatprep.subr.mxu0 0.0
  %1511 = vmatpush1.msra.mxu0 0.0
  %1512 = vmatprep.subr.mxu0 0.0
  %1513 = vmatpush1.msra.mxu0 0.0
  %1514 = vmatprep.subr.mxu0 0.0
  %1515 = vmatpush1.msra.mxu0 0.0
  %1516 = vmatprep.subr.mxu0 0.0
  %1517 = vmatpush1.msra.mxu0 0.0
  %1518 = vmatprep.subr.mxu0 0.0
  %1519 = vmatpush1.msra.mxu0 0.0
  %1520 = vmatprep.subr.mxu0 0.0
  %1521 = vmatpush1.msra.mxu0 0.0
  %1522 = vmatprep.subr.mxu0 0.0
  %1523 = vmatpush1.msra.mxu0 0.0
  %1524 = vmatprep.subr.mxu0 0.0
  %1525 = vmatpush1.msra.mxu0 0.0
  %1526 = vmatprep.subr.mxu0 0.0
  %1527 = vmatpush1.msra.mxu0 0.0
  %1528 = vmatprep.subr.mxu0 0.0
  %1529 = vmatpush1.msra.mxu0 0.0
  %1530 = vmatprep.subr.mxu0 0.0
  %1531 = vmatpush1.msra.mxu0 0.0
  %1532 = vmatprep.subr.mxu0 0.0
  %1533 = vmatpush1.msra.mxu0 0.0
  %1534 = vmatprep.subr.mxu0 0.0
  %1535 = vmatpush1.msra.mxu0 0.0
  %1536 = vmatprep.subr.mxu0 0.0
  %1537 = vmatpush1.msra.mxu0 0.0
  %1538 = vmatprep.subr.mxu0 0.0
  %1539 = vmatpush1.msra.mxu0 0.0
  %1540 = vmatprep.subr.mxu0 0.0
  %1541 = vmatpush1.msra.mxu0 0.0
  %1542 = vmatprep.subr.mxu0 0.0
  %1543 = vmatpush1.msra.mxu0 0.0
  %1544 = vmatprep.subr.mxu0 0.0
  %1545 = vmatpush1.msra.mxu0 0.0
  %1546 = vmatprep.subr.mxu0 0.0
  %1547 = vmatpush1.msra.mxu0 0.0
  %1548 = vmatprep.subr.mxu0 0.0
  %1549 = vmatpush1.msra.mxu0 0.0
  %1550 = vmatprep.subr.mxu0 0.0
  %1551 = vmatpush1.msra.mxu0 0.0
  %1552 = vmatprep.subr.mxu0 0.0
  %1553 = vmatpush1.msra.mxu0 0.0
  %1554 = vmatprep.mubr.f32.mxu0 0.0
  %1555 = vmatmul.mubr.f32.gmra.mrb[0].mxu0 %v1317
  %v1556 = vpop.f32.mrb[0].mxu0
  %v1557 = vadd.f32 0.0, %v1556
  %v1558 = vpop.f32.mrb[0].mxu0
  %1559 = vdwg.mxu0
  %v1560 = vadd.f32 %v633, %v1557
  %v1561 = vtanh.pop %v1560
  %v1562 = vxor.u32 %v1560, 2147483648
  %v1563 = vmul.f32 %v1562, 1.442695
  %v1564 = vpow.pop %v1563
  %v1565 = vadd.f32 %v1564, 1.0
  %v1566 = vrcp.pop %v1565
  %v1567 = vmul.f32 1.0, %v1566
  %v1568 = vsel %vm36, %v1561, %v1567
  %v1569 = vmul.f32 %v1568, %v1307
  %1571 = vrot.lane.b32.xlu0 %v1568, 64
  %v1572 = vpop.permute.xlu0 %1571
  %v1574 = vmul.f32 %v1568, %v1572
  %1576 = vrot.lane.b32.xlu0 %v1574, 32
  %v1577 = vpop.permute.xlu0 %1576
  %v1579 = vadd.f32 %v1569, %v1577
  %v1580 = vtanh.pop %v1579
  %1582 = vrot.lane.b32.xlu0 %v1580, 64
  %v1583 = vpop.permute.xlu0 %1582
  %v1585 = vmul.f32 %v1568, %v1583
  %1587 = vrot.lane.b32.xlu0 %v1585, 32
  %v1588 = vpop.permute.xlu0 %1587
  %v1589 = vsel %vm669, %v1588, 0
  %1591 = vmatprep.subr.mxu0 0.0
  %1592 = vmatpush1.msra.mxu0 %v664
  %1593 = vmatprep.subr.mxu0 0.0
  %1594 = vmatpush1.msra.mxu0 %v665
  %1595 = vmatprep.subr.mxu0 0.0
  %1596 = vmatpush1.msra.mxu0 %v666
  %1597 = vmatprep.subr.mxu0 0.0
  %1598 = vmatpush1.msra.mxu0 %v667
  %1599 = vmatprep.subr.mxu0 0.0
  %1600 = vmatpush1.msra.mxu0 0.0
  %1601 = vmatprep.subr.mxu0 0.0
  %1602 = vmatpush1.msra.mxu0 0.0
  %1603 = vmatprep.subr.mxu0 0.0
  %1604 = vmatpush1.msra.mxu0 0.0
  %1605 = vmatprep.subr.mxu0 0.0
  %1606 = vmatpush1.msra.mxu0 0.0
  %1607 = vmatprep.subr.mxu0 0.0
  %1608 = vmatpush1.msra.mxu0 0.0
  %1609 = vmatprep.subr.mxu0 0.0
  %1610 = vmatpush1.msra.mxu0 0.0
  %1611 = vmatprep.subr.mxu0 0.0
  %1612 = vmatpush1.msra.mxu0 0.0
  %1613 = vmatprep.subr.mxu0 0.0
  %1614 = vmatpush1.msra.mxu0 0.0
  %1615 = vmatprep.subr.mxu0 0.0
  %1616 = vmatpush1.msra.mxu0 0.0
  %1617 = vmatprep.subr.mxu0 0.0
  %1618 = vmatpush1.msra.mxu0 0.0
  %1619 = vmatprep.subr.mxu0 0.0
  %1620 = vmatpush1.msra.mxu0 0.0
  %1621 = vmatprep.subr.mxu0 0.0
  %1622 = vmatpush1.msra.mxu0 0.0
  %1623 = vmatprep.subr.mxu0 0.0
  %1624 = vmatpush1.msra.mxu0 0.0
  %1625 = vmatprep.subr.mxu0 0.0
  %1626 = vmatpush1.msra.mxu0 0.0
  %1627 = vmatprep.subr.mxu0 0.0
  %1628 = vmatpush1.msra.mxu0 0.0
  %1629 = vmatprep.subr.mxu0 0.0
  %1630 = vmatpush1.msra.mxu0 0.0
  %1631 = vmatprep.subr.mxu0 0.0
  %1632 = vmatpush1.msra.mxu0 0.0
  %1633 = vmatprep.subr.mxu0 0.0
  %1634 = vmatpush1.msra.mxu0 0.0
  %1635 = vmatprep.subr.mxu0 0.0
  %1636 = vmatpush1.msra.mxu0 0.0
  %1637 = vmatprep.subr.mxu0 0.0
  %1638 = vmatpush1.msra.mxu0 0.0
  %1639 = vmatprep.subr.mxu0 0.0
  %1640 = vmatpush1.msra.mxu0 0.0
  %1641 = vmatprep.subr.mxu0 0.0
  %1642 = vmatpush1.msra.mxu0 0.0
  %1643 = vmatprep.subr.mxu0 0.0
  %1644 = vmatpush1.msra.mxu0 0.0
  %1645 = vmatprep.subr.mxu0 0.0
  %1646 = vmatpush1.msra.mxu0 0.0
  %1647 = vmatprep.subr.mxu0 0.0
  %1648 = vmatpush1.msra.mxu0 0.0
  %1649 = vmatprep.subr.mxu0 0.0
  %1650 = vmatpush1.msra.mxu0 0.0
  %1651 = vmatprep.subr.mxu0 0.0
  %1652 = vmatpush1.msra.mxu0 0.0
  %1653 = vmatprep.subr.mxu0 0.0
  %1654 = vmatpush1.msra.mxu0 0.0
  %1655 = vmatprep.mubr.f32.mxu0 0.0
  %1656 = vmatmul.mubr.f32.gmra.mrb[0].mxu0 %v1589
  %v1657 = vpop.f32.mrb[0].mxu0
  %v1658 = vadd.f32 %v773, %v1657
  %v1659 = vpop.f32.mrb[0].mxu0
  %1660 = vdwg.mxu0
  %1662 = vrot.lane.b32.xlu0 %v1489, 32
  %v1663 = vpop.permute.xlu0 %1662
  %v1664 = vsel %vm669, %v1663, 0
  %1666 = vmatprep.subr.mxu0 0.0
  %1667 = vmatpush1.msra.mxu0 %v660
  %1668 = vmatprep.subr.mxu0 0.0
  %1669 = vmatpush1.msra.mxu0 %v661
  %1670 = vmatprep.subr.mxu0 0.0
  %1671 = vmatpush1.msra.mxu0 %v662
  %1672 = vmatprep.subr.mxu0 0.0
  %1673 = vmatpush1.msra.mxu0 %v663
  %1674 = vmatprep.subr.mxu0 0.0
  %1675 = vmatpush1.msra.mxu0 0.0
  %1676 = vmatprep.subr.mxu0 0.0
  %1677 = vmatpush1.msra.mxu0 0.0
  %1678 = vmatprep.subr.mxu0 0.0
  %1679 = vmatpush1.msra.mxu0 0.0
  %1680 = vmatprep.subr.mxu0 0.0
  %1681 = vmatpush1.msra.mxu0 0.0
  %1682 = vmatprep.subr.mxu0 0.0
  %1683 = vmatpush1.msra.mxu0 0.0
  %1684 = vmatprep.subr.mxu0 0.0
  %1685 = vmatpush1.msra.mxu0 0.0
  %1686 = vmatprep.subr.mxu0 0.0
  %1687 = vmatpush1.msra.mxu0 0.0
  %1688 = vmatprep.subr.mxu0 0.0
  %1689 = vmatpush1.msra.mxu0 0.0
  %1690 = vmatprep.subr.mxu0 0.0
  %1691 = vmatpush1.msra.mxu0 0.0
  %1692 = vmatprep.subr.mxu0 0.0
  %1693 = vmatpush1.msra.mxu0 0.0
  %1694 = vmatprep.subr.mxu0 0.0
  %1695 = vmatpush1.msra.mxu0 0.0
  %1696 = vmatprep.subr.mxu0 0.0
  %1697 = vmatpush1.msra.mxu0 0.0
  %1698 = vmatprep.subr.mxu0 0.0
  %1699 = vmatpush1.msra.mxu0 0.0
  %1700 = vmatprep.subr.mxu0 0.0
  %1701 = vmatpush1.msra.mxu0 0.0
  %1702 = vmatprep.subr.mxu0 0.0
  %1703 = vmatpush1.msra.mxu0 0.0
  %1704 = vmatprep.subr.mxu0 0.0
  %1705 = vmatpush1.msra.mxu0 0.0
  %1706 = vmatprep.subr.mxu0 0.0
  %1707 = vmatpush1.msra.mxu0 0.0
  %1708 = vmatprep.subr.mxu0 0.0
  %1709 = vmatpush1.msra.mxu0 0.0
  %1710 = vmatprep.subr.mxu0 0.0
  %1711 = vmatpush1.msra.mxu0 0.0
  %1712 = vmatprep.subr.mxu0 0.0
  %1713 = vmatpush1.msra.mxu0 0.0
  %1714 = vmatprep.subr.mxu0 0.0
  %1715 = vmatpush1.msra.mxu0 0.0
  %1716 = vmatprep.subr.mxu0 0.0
  %1717 = vmatpush1.msra.mxu0 0.0
  %1718 = vmatprep.subr.mxu0 0.0
  %1719 = vmatpush1.msra.mxu0 0.0
  %1720 = vmatprep.subr.mxu0 0.0
  %1721 = vmatpush1.msra.mxu0 0.0
  %1722 = vmatprep.subr.mxu0 0.0
  %1723 = vmatpush1.msra.mxu0 0.0
  %1724 = vmatprep.subr.mxu0 0.0
  %1725 = vmatpush1.msra.mxu0 0.0
  %1726 = vmatprep.subr.mxu0 0.0
  %1727 = vmatpush1.msra.mxu0 0.0
  %1728 = vmatprep.subr.mxu0 0.0
  %1729 = vmatpush1.msra.mxu0 0.0
  %1730 = vmatprep.mubr.f32.mxu0 0.0
  %1731 = vmatmul.mubr.f32.gmra.mrb[0].mxu0 %v1664
  %v1732 = vpop.f32.mrb[0].mxu0
  %v1733 = vadd.f32 0.0, %v1732
  %v1734 = vpop.f32.mrb[0].mxu0
  %1735 = vdwg.mxu0
  %v1736 = vadd.f32 %v1658, %v1733
  %v1737 = vtanh.pop %v1736
  %v1738 = vxor.u32 %v1736, 2147483648
  %v1739 = vmul.f32 %v1738, 1.442695
  %v1740 = vpow.pop %v1739
  %v1741 = vadd.f32 %v1740, 1.0
  %v1742 = vrcp.pop %v1741
  %v1743 = vmul.f32 1.0, %v1742
  %v1744 = vsel %vm36, %v1737, %v1743
  %v1745 = vmul.f32 %v1744, %v1483
  %1747 = vrot.lane.b32.xlu0 %v1744, 64
  %v1748 = vpop.permute.xlu0 %1747
  %v1750 = vmul.f32 %v1744, %v1748
  %1752 = vrot.lane.b32.xlu0 %v1750, 32
  %v1753 = vpop.permute.xlu0 %1752
  %v1755 = vadd.f32 %v1745, %v1753
  %v1756 = vtanh.pop %v1755
  %1758 = vrot.lane.b32.xlu0 %v1756, 64
  %v1759 = vpop.permute.xlu0 %1758
  %v1761 = vmul.f32 %v1744, %v1759
  %1762 = vmatprep.subr.mxu0 0.0
  %1763 = vmatpush1.msra.mxu0 %v656
  %1764 = vmatprep.subr.mxu0 0.0
  %1765 = vmatpush1.msra.mxu0 %v657
  %1766 = vmatprep.subr.mxu0 0.0
  %1767 = vmatpush1.msra.mxu0 %v658
  %1768 = vmatprep.subr.mxu0 0.0
  %1769 = vmatpush1.msra.mxu0 %v659
  %1770 = vmatprep.subr.mxu0 0.0
  %1771 = vmatpush1.msra.mxu0 0.0
  %1772 = vmatprep.subr.mxu0 0.0
  %1773 = vmatpush1.msra.mxu0 0.0
  %1774 = vmatprep.subr.mxu0 0.0
  %1775 = vmatpush1.msra.mxu0 0.0
  %1776 = vmatprep.subr.mxu0 0.0
  %1777 = vmatpush1.msra.mxu0 0.0
  %1778 = vmatprep.subr.mxu0 0.0
  %1779 = vmatpush1.msra.mxu0 0.0
  %1780 = vmatprep.subr.mxu0 0.0
  %1781 = vmatpush1.msra.mxu0 0.0
  %1782 = vmatprep.subr.mxu0 0.0
  %1783 = vmatpush1.msra.mxu0 0.0
  %1784 = vmatprep.subr.mxu0 0.0
  %1785 = vmatpush1.msra.mxu0 0.0
  %1786 = vmatprep.subr.mxu0 0.0
  %1787 = vmatpush1.msra.mxu0 0.0
  %1788 = vmatprep.subr.mxu0 0.0
  %1789 = vmatpush1.msra.mxu0 0.0
  %1790 = vmatprep.subr.mxu0 0.0
  %1791 = vmatpush1.msra.mxu0 0.0
  %1792 = vmatprep.subr.mxu0 0.0
  %1793 = vmatpush1.msra.mxu0 0.0
  %1794 = vmatprep.subr.mxu0 0.0
  %1795 = vmatpush1.msra.mxu0 0.0
  %1796 = vmatprep.subr.mxu0 0.0
  %1797 = vmatpush1.msra.mxu0 0.0
  %1798 = vmatprep.subr.mxu0 0.0
  %1799 = vmatpush1.msra.mxu0 0.0
  %1800 = vmatprep.subr.mxu0 0.0
  %1801 = vmatpush1.msra.mxu0 0.0
  %1802 = vmatprep.subr.mxu0 0.0
  %1803 = vmatpush1.msra.mxu0 0.0
  %1804 = vmatprep.subr.mxu0 0.0
  %1805 = vmatpush1.msra.mxu0 0.0
  %1806 = vmatprep.subr.mxu0 0.0
  %1807 = vmatpush1.msra.mxu0 0.0
  %1808 = vmatprep.subr.mxu0 0.0
  %1809 = vmatpush1.msra.mxu0 0.0
  %1810 = vmatprep.subr.mxu0 0.0
  %1811 = vmatpush1.msra.mxu0 0.0
  %1812 = vmatprep.subr.mxu0 0.0
  %1813 = vmatpush1.msra.mxu0 0.0
  %1814 = vmatprep.subr.mxu0 0.0
  %1815 = vmatpush1.msra.mxu0 0.0
  %1816 = vmatprep.subr.mxu0 0.0
  %1817 = vmatpush1.msra.mxu0 0.0
  %1818 = vmatprep.subr.mxu0 0.0
  %1819 = vmatpush1.msra.mxu0 0.0
  %1820 = vmatprep.subr.mxu0 0.0
  %1821 = vmatpush1.msra.mxu0 0.0
  %1822 = vmatprep.subr.mxu0 0.0
  %1823 = vmatpush1.msra.mxu0 0.0
  %1824 = vmatprep.subr.mxu0 0.0
  %1825 = vmatpush1.msra.mxu0 0.0
  %1826 = vmatprep.mubr.f32.mxu0 0.0
  %1827 = vmatmul.mubr.f32.gmra.mrb[0].mxu0 %v1589
  %v1828 = vpop.f32.mrb[0].mxu0
  %v1829 = vadd.f32 0.0, %v1828
  %v1830 = vpop.f32.mrb[0].mxu0
  %1831 = vdwg.mxu0
  %v1832 = vadd.f32 %v638, %v1829
  %v1833 = vtanh.pop %v1832
  %v1834 = vxor.u32 %v1832, 2147483648
  %v1835 = vmul.f32 %v1834, 1.442695
  %v1836 = vpow.pop %v1835
  %v1837 = vadd.f32 %v1836, 1.0
  %v1838 = vrcp.pop %v1837
  %v1839 = vmul.f32 1.0, %v1838
  %v1840 = vsel %vm36, %v1833, %v1839
  %v1841 = vmul.f32 %v1840, %v1579
  %1843 = vrot.lane.b32.xlu0 %v1840, 64
  %v1844 = vpop.permute.xlu0 %1843
  %v1846 = vmul.f32 %v1840, %v1844
  %1848 = vrot.lane.b32.xlu0 %v1846, 32
  %v1849 = vpop.permute.xlu0 %1848
  %v1851 = vadd.f32 %v1841, %v1849
  %v1852 = vtanh.pop %v1851
  %1854 = vrot.lane.b32.xlu0 %v1852, 64
  %v1855 = vpop.permute.xlu0 %1854
  %v1857 = vmul.f32 %v1840, %v1855
  %1859 = vrot.lane.b32.xlu0 %v1857, 32
  %v1860 = vpop.permute.xlu0 %1859
  %v1861 = vsel %vm669, %v1860, 0
  %1863 = vmatprep.subr.mxu0 0.0
  %1864 = vmatpush1.msra.mxu0 %v664
  %1865 = vmatprep.subr.mxu0 0.0
  %1866 = vmatpush1.msra.mxu0 %v665
  %1867 = vmatprep.subr.mxu0 0.0
  %1868 = vmatpush1.msra.mxu0 %v666
  %1869 = vmatprep.subr.mxu0 0.0
  %1870 = vmatpush1.msra.mxu0 %v667
  %1871 = vmatprep.subr.mxu0 0.0
  %1872 = vmatpush1.msra.mxu0 0.0
  %1873 = vmatprep.subr.mxu0 0.0
  %1874 = vmatpush1.msra.mxu0 0.0
  %1875 = vmatprep.subr.mxu0 0.0
  %1876 = vmatpush1.msra.mxu0 0.0
  %1877 = vmatprep.subr.mxu0 0.0
  %1878 = vmatpush1.msra.mxu0 0.0
  %1879 = vmatprep.subr.mxu0 0.0
  %1880 = vmatpush1.msra.mxu0 0.0
  %1881 = vmatprep.subr.mxu0 0.0
  %1882 = vmatpush1.msra.mxu0 0.0
  %1883 = vmatprep.subr.mxu0 0.0
  %1884 = vmatpush1.msra.mxu0 0.0
  %1885 = vmatprep.subr.mxu0 0.0
  %1886 = vmatpush1.msra.mxu0 0.0
  %1887 = vmatprep.subr.mxu0 0.0
  %1888 = vmatpush1.msra.mxu0 0.0
  %1889 = vmatprep.subr.mxu0 0.0
  %1890 = vmatpush1.msra.mxu0 0.0
  %1891 = vmatprep.subr.mxu0 0.0
  %1892 = vmatpush1.msra.mxu0 0.0
  %1893 = vmatprep.subr.mxu0 0.0
  %1894 = vmatpush1.msra.mxu0 0.0
  %1895 = vmatprep.subr.mxu0 0.0
  %1896 = vmatpush1.msra.mxu0 0.0
  %1897 = vmatprep.subr.mxu0 0.0
  %1898 = vmatpush1.msra.mxu0 0.0
  %1899 = vmatprep.subr.mxu0 0.0
  %1900 = vmatpush1.msra.mxu0 0.0
  %1901 = vmatprep.subr.mxu0 0.0
  %1902 = vmatpush1.msra.mxu0 0.0
  %1903 = vmatprep.subr.mxu0 0.0
  %1904 = vmatpush1.msra.mxu0 0.0
  %1905 = vmatprep.subr.mxu0 0.0
  %1906 = vmatpush1.msra.mxu0 0.0
  %1907 = vmatprep.subr.mxu0 0.0
  %1908 = vmatpush1.msra.mxu0 0.0
  %1909 = vmatprep.subr.mxu0 0.0
  %1910 = vmatpush1.msra.mxu0 0.0
  %1911 = vmatprep.subr.mxu0 0.0
  %1912 = vmatpush1.msra.mxu0 0.0
  %1913 = vmatprep.subr.mxu0 0.0
  %1914 = vmatpush1.msra.mxu0 0.0
  %1915 = vmatprep.subr.mxu0 0.0
  %1916 = vmatpush1.msra.mxu0 0.0
  %1917 = vmatprep.subr.mxu0 0.0
  %1918 = vmatpush1.msra.mxu0 0.0
  %1919 = vmatprep.subr.mxu0 0.0
  %1920 = vmatpush1.msra.mxu0 0.0
  %1921 = vmatprep.subr.mxu0 0.0
  %1922 = vmatpush1.msra.mxu0 0.0
  %1923 = vmatprep.subr.mxu0 0.0
  %1924 = vmatpush1.msra.mxu0 0.0
  %1925 = vmatprep.subr.mxu0 0.0
  %1926 = vmatpush1.msra.mxu0 0.0
  %1927 = vmatprep.mubr.f32.mxu0 0.0
  %1928 = vmatmul.mubr.f32.gmra.mrb[0].mxu0 %v1861
  %v1929 = vpop.f32.mrb[0].mxu0
  %v1930 = vadd.f32 %v773, %v1929
  %v1931 = vpop.f32.mrb[0].mxu0
  %1932 = vdwg.mxu0
  %1934 = vrot.lane.b32.xlu0 %v1761, 32
  %v1935 = vpop.permute.xlu0 %1934
  %v1936 = vsel %vm669, %v1935, 0
  %1938 = vmatprep.subr.mxu0 0.0
  %1939 = vmatpush1.msra.mxu0 %v660
  %1940 = vmatprep.subr.mxu0 0.0
  %1941 = vmatpush1.msra.mxu0 %v661
  %1942 = vmatprep.subr.mxu0 0.0
  %1943 = vmatpush1.msra.mxu0 %v662
  %1944 = vmatprep.subr.mxu0 0.0
  %1945 = vmatpush1.msra.mxu0 %v663
  %1946 = vmatprep.subr.mxu0 0.0
  %1947 = vmatpush1.msra.mxu0 0.0
  %1948 = vmatprep.subr.mxu0 0.0
  %1949 = vmatpush1.msra.mxu0 0.0
  %1950 = vmatprep.subr.mxu0 0.0
  %1951 = vmatpush1.msra.mxu0 0.0
  %1952 = vmatprep.subr.mxu0 0.0
  %1953 = vmatpush1.msra.mxu0 0.0
  %1954 = vmatprep.subr.mxu0 0.0
  %1955 = vmatpush1.msra.mxu0 0.0
  %1956 = vmatprep.subr.mxu0 0.0
  %1957 = vmatpush1.msra.mxu0 0.0
  %1958 = vmatprep.subr.mxu0 0.0
  %1959 = vmatpush1.msra.mxu0 0.0
  %1960 = vmatprep.subr.mxu0 0.0
  %1961 = vmatpush1.msra.mxu0 0.0
  %1962 = vmatprep.subr.mxu0 0.0
  %1963 = vmatpush1.msra.mxu0 0.0
  %1964 = vmatprep.subr.mxu0 0.0
  %1965 = vmatpush1.msra.mxu0 0.0
  %1966 = vmatprep.subr.mxu0 0.0
  %1967 = vmatpush1.msra.mxu0 0.0
  %1968 = vmatprep.subr.mxu0 0.0
  %1969 = vmatpush1.msra.mxu0 0.0
  %1970 = vmatprep.subr.mxu0 0.0
  %1971 = vmatpush1.msra.mxu0 0.0
  %1972 = vmatprep.subr.mxu0 0.0
  %1973 = vmatpush1.msra.mxu0 0.0
  %1974 = vmatprep.subr.mxu0 0.0
  %1975 = vmatpush1.msra.mxu0 0.0
  %1976 = vmatprep.subr.mxu0 0.0
  %1977 = vmatpush1.msra.mxu0 0.0
  %1978 = vmatprep.subr.mxu0 0.0
  %1979 = vmatpush1.msra.mxu0 0.0
  %1980 = vmatprep.subr.mxu0 0.0
  %1981 = vmatpush1.msra.mxu0 0.0
  %1982 = vmatprep.subr.mxu0 0.0
  %1983 = vmatpush1.msra.mxu0 0.0
  %1984 = vmatprep.subr.mxu0 0.0
  %1985 = vmatpush1.msra.mxu0 0.0
  %1986 = vmatprep.subr.mxu0 0.0
  %1987 = vmatpush1.msra.mxu0 0.0
  %1988 = vmatprep.subr.mxu0 0.0
  %1989 = vmatpush1.msra.mxu0 0.0
  %1990 = vmatprep.subr.mxu0 0.0
  %1991 = vmatpush1.msra.mxu0 0.0
  %1992 = vmatprep.subr.mxu0 0.0
  %1993 = vmatpush1.msra.mxu0 0.0
  %1994 = vmatprep.subr.mxu0 0.0
  %1995 = vmatpush1.msra.mxu0 0.0
  %1996 = vmatprep.subr.mxu0 0.0
  %1997 = vmatpush1.msra.mxu0 0.0
  %1998 = vmatprep.subr.mxu0 0.0
  %1999 = vmatpush1.msra.mxu0 0.0
  %2000 = vmatprep.subr.mxu0 0.0
  %2001 = vmatpush1.msra.mxu0 0.0
  %2002 = vmatprep.mubr.f32.mxu0 0.0
  %2003 = vmatmul.mubr.f32.gmra.mrb[0].mxu0 %v1936
  %v2004 = vpop.f32.mrb[0].mxu0
  %v2005 = vadd.f32 0.0, %v2004
  %v2006 = vpop.f32.mrb[0].mxu0
  %2007 = vdwg.mxu0
  %v2008 = vadd.f32 %v1930, %v2005
  %v2009 = vtanh.pop %v2008
  %v2010 = vxor.u32 %v2008, 2147483648
  %v2011 = vmul.f32 %v2010, 1.442695
  %v2012 = vpow.pop %v2011
  %v2013 = vadd.f32 %v2012, 1.0
  %v2014 = vrcp.pop %v2013
  %v2015 = vmul.f32 1.0, %v2014
  %v2016 = vsel %vm36, %v2009, %v2015
  %v2017 = vmul.f32 %v2016, %v1755
  %2019 = vrot.lane.b32.xlu0 %v2016, 64
  %v2020 = vpop.permute.xlu0 %2019
  %v2022 = vmul.f32 %v2016, %v2020
  %2024 = vrot.lane.b32.xlu0 %v2022, 32
  %v2025 = vpop.permute.xlu0 %2024
  %v2027 = vadd.f32 %v2017, %v2025
  %v2028 = vtanh.pop %v2027
  %2030 = vrot.lane.b32.xlu0 %v2028, 64
  %v2031 = vpop.permute.xlu0 %2030
  %v2033 = vmul.f32 %v2016, %v2031
  %2034 = vmatprep.subr.mxu0 0.0
  %2035 = vmatpush1.msra.mxu0 %v656
  %2036 = vmatprep.subr.mxu0 0.0
  %2037 = vmatpush1.msra.mxu0 %v657
  %2038 = vmatprep.subr.mxu0 0.0
  %2039 = vmatpush1.msra.mxu0 %v658
  %2040 = vmatprep.subr.mxu0 0.0
  %2041 = vmatpush1.msra.mxu0 %v659
  %2042 = vmatprep.subr.mxu0 0.0
  %2043 = vmatpush1.msra.mxu0 0.0
  %2044 = vmatprep.subr.mxu0 0.0
  %2045 = vmatpush1.msra.mxu0 0.0
  %2046 = vmatprep.subr.mxu0 0.0
  %2047 = vmatpush1.msra.mxu0 0.0
  %2048 = vmatprep.subr.mxu0 0.0
  %2049 = vmatpush1.msra.mxu0 0.0
  %2050 = vmatprep.subr.mxu0 0.0
  %2051 = vmatpush1.msra.mxu0 0.0
  %2052 = vmatprep.subr.mxu0 0.0
  %2053 = vmatpush1.msra.mxu0 0.0
  %2054 = vmatprep.subr.mxu0 0.0
  %2055 = vmatpush1.msra.mxu0 0.0
  %2056 = vmatprep.subr.mxu0 0.0
  %2057 = vmatpush1.msra.mxu0 0.0
  %2058 = vmatprep.subr.mxu0 0.0
  %2059 = vmatpush1.msra.mxu0 0.0
  %2060 = vmatprep.subr.mxu0 0.0
  %2061 = vmatpush1.msra.mxu0 0.0
  %2062 = vmatprep.subr.mxu0 0.0
  %2063 = vmatpush1.msra.mxu0 0.0
  %2064 = vmatprep.subr.mxu0 0.0
  %2065 = vmatpush1.msra.mxu0 0.0
  %2066 = vmatprep.subr.mxu0 0.0
  %2067 = vmatpush1.msra.mxu0 0.0
  %2068 = vmatprep.subr.mxu0 0.0
  %2069 = vmatpush1.msra.mxu0 0.0
  %2070 = vmatprep.subr.mxu0 0.0
  %2071 = vmatpush1.msra.mxu0 0.0
  %2072 = vmatprep.subr.mxu0 0.0
  %2073 = vmatpush1.msra.mxu0 0.0
  %2074 = vmatprep.subr.mxu0 0.0
  %2075 = vmatpush1.msra.mxu0 0.0
  %2076 = vmatprep.subr.mxu0 0.0
  %2077 = vmatpush1.msra.mxu0 0.0
  %2078 = vmatprep.subr.mxu0 0.0
  %2079 = vmatpush1.msra.mxu0 0.0
  %2080 = vmatprep.subr.mxu0 0.0
  %2081 = vmatpush1.msra.mxu0 0.0
  %2082 = vmatprep.subr.mxu0 0.0
  %2083 = vmatpush1.msra.mxu0 0.0
  %2084 = vmatprep.subr.mxu0 0.0
  %2085 = vmatpush1.msra.mxu0 0.0
  %2086 = vmatprep.subr.mxu0 0.0
  %2087 = vmatpush1.msra.mxu0 0.0
  %2088 = vmatprep.subr.mxu0 0.0
  %2089 = vmatpush1.msra.mxu0 0.0
  %2090 = vmatprep.subr.mxu0 0.0
  %2091 = vmatpush1.msra.mxu0 0.0
  %2092 = vmatprep.subr.mxu0 0.0
  %2093 = vmatpush1.msra.mxu0 0.0
  %2094 = vmatprep.subr.mxu0 0.0
  %2095 = vmatpush1.msra.mxu0 0.0
  %2096 = vmatprep.subr.mxu0 0.0
  %2097 = vmatpush1.msra.mxu0 0.0
  %2098 = vmatprep.mubr.f32.mxu0 0.0
  %2099 = vmatmul.mubr.f32.gmra.mrb[0].mxu0 %v1861
  %v2100 = vpop.f32.mrb[0].mxu0
  %v2101 = vadd.f32 0.0, %v2100
  %v2102 = vpop.f32.mrb[0].mxu0
  %2103 = vdwg.mxu0
  %v2104 = vadd.f32 %v643, %v2101
  %v2105 = vtanh.pop %v2104
  %v2106 = vxor.u32 %v2104, 2147483648
  %v2107 = vmul.f32 %v2106, 1.442695
  %v2108 = vpow.pop %v2107
  %v2109 = vadd.f32 %v2108, 1.0
  %v2110 = vrcp.pop %v2109
  %v2111 = vmul.f32 1.0, %v2110
  %v2112 = vsel %vm36, %v2105, %v2111
  %v2113 = vmul.f32 %v2112, %v1851
  %2115 = vrot.lane.b32.xlu0 %v2112, 64
  %v2116 = vpop.permute.xlu0 %2115
  %v2118 = vmul.f32 %v2112, %v2116
  %2120 = vrot.lane.b32.xlu0 %v2118, 32
  %v2121 = vpop.permute.xlu0 %2120
  %v2123 = vadd.f32 %v2113, %v2121
  %v2124 = vtanh.pop %v2123
  %2126 = vrot.lane.b32.xlu0 %v2124, 64
  %v2127 = vpop.permute.xlu0 %2126
  %v2129 = vmul.f32 %v2112, %v2127
  %2131 = vrot.lane.b32.xlu0 %v2129, 32
  %v2132 = vpop.permute.xlu0 %2131
  %v2133 = vsel %vm669, %v2132, 0
  %2135 = vmatprep.subr.mxu0 0.0
  %2136 = vmatpush1.msra.mxu0 %v664
  %2137 = vmatprep.subr.mxu0 0.0
  %2138 = vmatpush1.msra.mxu0 %v665
  %2139 = vmatprep.subr.mxu0 0.0
  %2140 = vmatpush1.msra.mxu0 %v666
  %2141 = vmatprep.subr.mxu0 0.0
  %2142 = vmatpush1.msra.mxu0 %v667
  %2143 = vmatprep.subr.mxu0 0.0
  %2144 = vmatpush1.msra.mxu0 0.0
  %2145 = vmatprep.subr.mxu0 0.0
  %2146 = vmatpush1.msra.mxu0 0.0
  %2147 = vmatprep.subr.mxu0 0.0
  %2148 = vmatpush1.msra.mxu0 0.0
  %2149 = vmatprep.subr.mxu0 0.0
  %2150 = vmatpush1.msra.mxu0 0.0
  %2151 = vmatprep.subr.mxu0 0.0
  %2152 = vmatpush1.msra.mxu0 0.0
  %2153 = vmatprep.subr.mxu0 0.0
  %2154 = vmatpush1.msra.mxu0 0.0
  %2155 = vmatprep.subr.mxu0 0.0
  %2156 = vmatpush1.msra.mxu0 0.0
  %2157 = vmatprep.subr.mxu0 0.0
  %2158 = vmatpush1.msra.mxu0 0.0
  %2159 = vmatprep.subr.mxu0 0.0
  %2160 = vmatpush1.msra.mxu0 0.0
  %2161 = vmatprep.subr.mxu0 0.0
  %2162 = vmatpush1.msra.mxu0 0.0
  %2163 = vmatprep.subr.mxu0 0.0
  %2164 = vmatpush1.msra.mxu0 0.0
  %2165 = vmatprep.subr.mxu0 0.0
  %2166 = vmatpush1.msra.mxu0 0.0
  %2167 = vmatprep.subr.mxu0 0.0
  %2168 = vmatpush1.msra.mxu0 0.0
  %2169 = vmatprep.subr.mxu0 0.0
  %2170 = vmatpush1.msra.mxu0 0.0
  %2171 = vmatprep.subr.mxu0 0.0
  %2172 = vmatpush1.msra.mxu0 0.0
  %2173 = vmatprep.subr.mxu0 0.0
  %2174 = vmatpush1.msra.mxu0 0.0
  %2175 = vmatprep.subr.mxu0 0.0
  %2176 = vmatpush1.msra.mxu0 0.0
  %2177 = vmatprep.subr.mxu0 0.0
  %2178 = vmatpush1.msra.mxu0 0.0
  %2179 = vmatprep.subr.mxu0 0.0
  %2180 = vmatpush1.msra.mxu0 0.0
  %2181 = vmatprep.subr.mxu0 0.0
  %2182 = vmatpush1.msra.mxu0 0.0
  %2183 = vmatprep.subr.mxu0 0.0
  %2184 = vmatpush1.msra.mxu0 0.0
  %2185 = vmatprep.subr.mxu0 0.0
  %2186 = vmatpush1.msra.mxu0 0.0
  %2187 = vmatprep.subr.mxu0 0.0
  %2188 = vmatpush1.msra.mxu0 0.0
  %2189 = vmatprep.subr.mxu0 0.0
  %2190 = vmatpush1.msra.mxu0 0.0
  %2191 = vmatprep.subr.mxu0 0.0
  %2192 = vmatpush1.msra.mxu0 0.0
  %2193 = vmatprep.subr.mxu0 0.0
  %2194 = vmatpush1.msra.mxu0 0.0
  %2195 = vmatprep.subr.mxu0 0.0
  %2196 = vmatpush1.msra.mxu0 0.0
  %2197 = vmatprep.subr.mxu0 0.0
  %2198 = vmatpush1.msra.mxu0 0.0
  %2199 = vmatprep.mubr.f32.mxu0 0.0
  %2200 = vmatmul.mubr.f32.gmra.mrb[0].mxu0 %v2133
  %v2201 = vpop.f32.mrb[0].mxu0
  %v2202 = vadd.f32 %v773, %v2201
  %v2203 = vpop.f32.mrb[0].mxu0
  %2204 = vdwg.mxu0
  %2206 = vrot.lane.b32.xlu0 %v2033, 32
  %v2207 = vpop.permute.xlu0 %2206
  %v2208 = vsel %vm669, %v2207, 0
  %2210 = vmatprep.subr.mxu0 0.0
  %2211 = vmatpush1.msra.mxu0 %v660
  %2212 = vmatprep.subr.mxu0 0.0
  %2213 = vmatpush1.msra.mxu0 %v661
  %2214 = vmatprep.subr.mxu0 0.0
  %2215 = vmatpush1.msra.mxu0 %v662
  %2216 = vmatprep.subr.mxu0 0.0
  %2217 = vmatpush1.msra.mxu0 %v663
  %2218 = vmatprep.subr.mxu0 0.0
  %2219 = vmatpush1.msra.mxu0 0.0
  %2220 = vmatprep.subr.mxu0 0.0
  %2221 = vmatpush1.msra.mxu0 0.0
  %2222 = vmatprep.subr.mxu0 0.0
  %2223 = vmatpush1.msra.mxu0 0.0
  %2224 = vmatprep.subr.mxu0 0.0
  %2225 = vmatpush1.msra.mxu0 0.0
  %2226 = vmatprep.subr.mxu0 0.0
  %2227 = vmatpush1.msra.mxu0 0.0
  %2228 = vmatprep.subr.mxu0 0.0
  %2229 = vmatpush1.msra.mxu0 0.0
  %2230 = vmatprep.subr.mxu0 0.0
  %2231 = vmatpush1.msra.mxu0 0.0
  %2232 = vmatprep.subr.mxu0 0.0
  %2233 = vmatpush1.msra.mxu0 0.0
  %2234 = vmatprep.subr.mxu0 0.0
  %2235 = vmatpush1.msra.mxu0 0.0
  %2236 = vmatprep.subr.mxu0 0.0
  %2237 = vmatpush1.msra.mxu0 0.0
  %2238 = vmatprep.subr.mxu0 0.0
  %2239 = vmatpush1.msra.mxu0 0.0
  %2240 = vmatprep.subr.mxu0 0.0
  %2241 = vmatpush1.msra.mxu0 0.0
  %2242 = vmatprep.subr.mxu0 0.0
  %2243 = vmatpush1.msra.mxu0 0.0
  %2244 = vmatprep.subr.mxu0 0.0
  %2245 = vmatpush1.msra.mxu0 0.0
  %2246 = vmatprep.subr.mxu0 0.0
  %2247 = vmatpush1.msra.mxu0 0.0
  %2248 = vmatprep.subr.mxu0 0.0
  %2249 = vmatpush1.msra.mxu0 0.0
  %2250 = vmatprep.subr.mxu0 0.0
  %2251 = vmatpush1.msra.mxu0 0.0
  %2252 = vmatprep.subr.mxu0 0.0
  %2253 = vmatpush1.msra.mxu0 0.0
  %2254 = vmatprep.subr.mxu0 0.0
  %2255 = vmatpush1.msra.mxu0 0.0
  %2256 = vmatprep.subr.mxu0 0.0
  %2257 = vmatpush1.msra.mxu0 0.0
  %2258 = vmatprep.subr.mxu0 0.0
  %2259 = vmatpush1.msra.mxu0 0.0
  %2260 = vmatprep.subr.mxu0 0.0
  %2261 = vmatpush1.msra.mxu0 0.0
  %2262 = vmatprep.subr.mxu0 0.0
  %2263 = vmatpush1.msra.mxu0 0.0
  %2264 = vmatprep.subr.mxu0 0.0
  %2265 = vmatpush1.msra.mxu0 0.0
  %2266 = vmatprep.subr.mxu0 0.0
  %2267 = vmatpush1.msra.mxu0 0.0
  %2268 = vmatprep.subr.mxu0 0.0
  %2269 = vmatpush1.msra.mxu0 0.0
  %2270 = vmatprep.subr.mxu0 0.0
  %2271 = vmatpush1.msra.mxu0 0.0
  %2272 = vmatprep.subr.mxu0 0.0
  %2273 = vmatpush1.msra.mxu0 0.0
  %2274 = vmatprep.mubr.f32.mxu0 0.0
  %2275 = vmatmul.mubr.f32.gmra.mrb[0].mxu0 %v2208
  %v2276 = vpop.f32.mrb[0].mxu0
  %v2277 = vadd.f32 0.0, %v2276
  %v2278 = vpop.f32.mrb[0].mxu0
  %2279 = vdwg.mxu0
  %v2280 = vadd.f32 %v2202, %v2277
  %v2281 = vtanh.pop %v2280
  %v2282 = vxor.u32 %v2280, 2147483648
  %v2283 = vmul.f32 %v2282, 1.442695
  %v2284 = vpow.pop %v2283
  %v2285 = vadd.f32 %v2284, 1.0
  %v2286 = vrcp.pop %v2285
  %v2287 = vmul.f32 1.0, %v2286
  %v2288 = vsel %vm36, %v2281, %v2287
  %v2289 = vmul.f32 %v2288, %v2027
  %2291 = vrot.lane.b32.xlu0 %v2288, 64
  %v2292 = vpop.permute.xlu0 %2291
  %v2294 = vmul.f32 %v2288, %v2292
  %2296 = vrot.lane.b32.xlu0 %v2294, 32
  %v2297 = vpop.permute.xlu0 %2296
  %v2299 = vadd.f32 %v2289, %v2297
  %v2300 = vtanh.pop %v2299
  %2302 = vrot.lane.b32.xlu0 %v2300, 64
  %v2303 = vpop.permute.xlu0 %2302
  %v2305 = vmul.f32 %v2288, %v2303
  %2306 = vmatprep.subr.mxu0 0.0
  %2307 = vmatpush1.msra.mxu0 %v656
  %2308 = vmatprep.subr.mxu0 0.0
  %2309 = vmatpush1.msra.mxu0 %v657
  %2310 = vmatprep.subr.mxu0 0.0
  %2311 = vmatpush1.msra.mxu0 %v658
  %2312 = vmatprep.subr.mxu0 0.0
  %2313 = vmatpush1.msra.mxu0 %v659
  %2314 = vmatprep.subr.mxu0 0.0
  %2315 = vmatpush1.msra.mxu0 0.0
  %2316 = vmatprep.subr.mxu0 0.0
  %2317 = vmatpush1.msra.mxu0 0.0
  %2318 = vmatprep.subr.mxu0 0.0
  %2319 = vmatpush1.msra.mxu0 0.0
  %2320 = vmatprep.subr.mxu0 0.0
  %2321 = vmatpush1.msra.mxu0 0.0
  %2322 = vmatprep.subr.mxu0 0.0
  %2323 = vmatpush1.msra.mxu0 0.0
  %2324 = vmatprep.subr.mxu0 0.0
  %2325 = vmatpush1.msra.mxu0 0.0
  %2326 = vmatprep.subr.mxu0 0.0
  %2327 = vmatpush1.msra.mxu0 0.0
  %2328 = vmatprep.subr.mxu0 0.0
  %2329 = vmatpush1.msra.mxu0 0.0
  %2330 = vmatprep.subr.mxu0 0.0
  %2331 = vmatpush1.msra.mxu0 0.0
  %2332 = vmatprep.subr.mxu0 0.0
  %2333 = vmatpush1.msra.mxu0 0.0
  %2334 = vmatprep.subr.mxu0 0.0
  %2335 = vmatpush1.msra.mxu0 0.0
  %2336 = vmatprep.subr.mxu0 0.0
  %2337 = vmatpush1.msra.mxu0 0.0
  %2338 = vmatprep.subr.mxu0 0.0
  %2339 = vmatpush1.msra.mxu0 0.0
  %2340 = vmatprep.subr.mxu0 0.0
  %2341 = vmatpush1.msra.mxu0 0.0
  %2342 = vmatprep.subr.mxu0 0.0
  %2343 = vmatpush1.msra.mxu0 0.0
  %2344 = vmatprep.subr.mxu0 0.0
  %2345 = vmatpush1.msra.mxu0 0.0
  %2346 = vmatprep.subr.mxu0 0.0
  %2347 = vmatpush1.msra.mxu0 0.0
  %2348 = vmatprep.subr.mxu0 0.0
  %2349 = vmatpush1.msra.mxu0 0.0
  %2350 = vmatprep.subr.mxu0 0.0
  %2351 = vmatpush1.msra.mxu0 0.0
  %2352 = vmatprep.subr.mxu0 0.0
  %2353 = vmatpush1.msra.mxu0 0.0
  %2354 = vmatprep.subr.mxu0 0.0
  %2355 = vmatpush1.msra.mxu0 0.0
  %2356 = vmatprep.subr.mxu0 0.0
  %2357 = vmatpush1.msra.mxu0 0.0
  %2358 = vmatprep.subr.mxu0 0.0
  %2359 = vmatpush1.msra.mxu0 0.0
  %2360 = vmatprep.subr.mxu0 0.0
  %2361 = vmatpush1.msra.mxu0 0.0
  %2362 = vmatprep.subr.mxu0 0.0
  %2363 = vmatpush1.msra.mxu0 0.0
  %2364 = vmatprep.subr.mxu0 0.0
  %2365 = vmatpush1.msra.mxu0 0.0
  %2366 = vmatprep.subr.mxu0 0.0
  %2367 = vmatpush1.msra.mxu0 0.0
  %2368 = vmatprep.subr.mxu0 0.0
  %2369 = vmatpush1.msra.mxu0 0.0
  %2370 = vmatprep.mubr.f32.mxu0 0.0
  %2371 = vmatmul.mubr.f32.gmra.mrb[0].mxu0 %v2133
  %v2372 = vpop.f32.mrb[0].mxu0
  %v2373 = vadd.f32 0.0, %v2372
  %v2374 = vpop.f32.mrb[0].mxu0
  %2375 = vdwg.mxu0
  %v2376 = vadd.f32 %v648, %v2373
  %v2377 = vtanh.pop %v2376
  %v2378 = vxor.u32 %v2376, 2147483648
  %v2379 = vmul.f32 %v2378, 1.442695
  %v2380 = vpow.pop %v2379
  %v2381 = vadd.f32 %v2380, 1.0
  %v2382 = vrcp.pop %v2381
  %v2383 = vmul.f32 1.0, %v2382
  %v2384 = vsel %vm36, %v2377, %v2383
  %v2385 = vmul.f32 %v2384, %v2123
  %2387 = vrot.lane.b32.xlu0 %v2384, 64
  %v2388 = vpop.permute.xlu0 %2387
  %v2390 = vmul.f32 %v2384, %v2388
  %2392 = vrot.lane.b32.xlu0 %v2390, 32
  %v2393 = vpop.permute.xlu0 %2392
  %v2395 = vadd.f32 %v2385, %v2393
  %v2396 = vtanh.pop %v2395
  %2398 = vrot.lane.b32.xlu0 %v2396, 64
  %v2399 = vpop.permute.xlu0 %2398
  %v2401 = vmul.f32 %v2384, %v2399
  %2403 = vrot.lane.b32.xlu0 %v2401, 32
  %v2404 = vpop.permute.xlu0 %2403
  %v2405 = vsel %vm669, %v2404, 0
  %2407 = vmatprep.subr.mxu0 0.0
  %2408 = vmatpush1.msra.mxu0 %v664
  %2409 = vmatprep.subr.mxu0 0.0
  %2410 = vmatpush1.msra.mxu0 %v665
  %2411 = vmatprep.subr.mxu0 0.0
  %2412 = vmatpush1.msra.mxu0 %v666
  %2413 = vmatprep.subr.mxu0 0.0
  %2414 = vmatpush1.msra.mxu0 %v667
  %2415 = vmatprep.subr.mxu0 0.0
  %2416 = vmatpush1.msra.mxu0 0.0
  %2417 = vmatprep.subr.mxu0 0.0
  %2418 = vmatpush1.msra.mxu0 0.0
  %2419 = vmatprep.subr.mxu0 0.0
  %2420 = vmatpush1.msra.mxu0 0.0
  %2421 = vmatprep.subr.mxu0 0.0
  %2422 = vmatpush1.msra.mxu0 0.0
  %2423 = vmatprep.subr.mxu0 0.0
  %2424 = vmatpush1.msra.mxu0 0.0
  %2425 = vmatprep.subr.mxu0 0.0
  %2426 = vmatpush1.msra.mxu0 0.0
  %2427 = vmatprep.subr.mxu0 0.0
  %2428 = vmatpush1.msra.mxu0 0.0
  %2429 = vmatprep.subr.mxu0 0.0
  %2430 = vmatpush1.msra.mxu0 0.0
  %2431 = vmatprep.subr.mxu0 0.0
  %2432 = vmatpush1.msra.mxu0 0.0
  %2433 = vmatprep.subr.mxu0 0.0
  %2434 = vmatpush1.msra.mxu0 0.0
  %2435 = vmatprep.subr.mxu0 0.0
  %2436 = vmatpush1.msra.mxu0 0.0
  %2437 = vmatprep.subr.mxu0 0.0
  %2438 = vmatpush1.msra.mxu0 0.0
  %2439 = vmatprep.subr.mxu0 0.0
  %2440 = vmatpush1.msra.mxu0 0.0
  %2441 = vmatprep.subr.mxu0 0.0
  %2442 = vmatpush1.msra.mxu0 0.0
  %2443 = vmatprep.subr.mxu0 0.0
  %2444 = vmatpush1.msra.mxu0 0.0
  %2445 = vmatprep.subr.mxu0 0.0
  %2446 = vmatpush1.msra.mxu0 0.0
  %2447 = vmatprep.subr.mxu0 0.0
  %2448 = vmatpush1.msra.mxu0 0.0
  %2449 = vmatprep.subr.mxu0 0.0
  %2450 = vmatpush1.msra.mxu0 0.0
  %2451 = vmatprep.subr.mxu0 0.0
  %2452 = vmatpush1.msra.mxu0 0.0
  %2453 = vmatprep.subr.mxu0 0.0
  %2454 = vmatpush1.msra.mxu0 0.0
  %2455 = vmatprep.subr.mxu0 0.0
  %2456 = vmatpush1.msra.mxu0 0.0
  %2457 = vmatprep.subr.mxu0 0.0
  %2458 = vmatpush1.msra.mxu0 0.0
  %2459 = vmatprep.subr.mxu0 0.0
  %2460 = vmatpush1.msra.mxu0 0.0
  %2461 = vmatprep.subr.mxu0 0.0
  %2462 = vmatpush1.msra.mxu0 0.0
  %2463 = vmatprep.subr.mxu0 0.0
  %2464 = vmatpush1.msra.mxu0 0.0
  %2465 = vmatprep.subr.mxu0 0.0
  %2466 = vmatpush1.msra.mxu0 0.0
  %2467 = vmatprep.subr.mxu0 0.0
  %2468 = vmatpush1.msra.mxu0 0.0
  %2469 = vmatprep.subr.mxu0 0.0
  %2470 = vmatpush1.msra.mxu0 0.0
  %2471 = vmatprep.mubr.f32.mxu0 0.0
  %2472 = vmatmul.mubr.f32.gmra.mrb[0].mxu0 %v2405
  %v2473 = vpop.f32.mrb[0].mxu0
  %v2474 = vadd.f32 %v773, %v2473
  %v2475 = vpop.f32.mrb[0].mxu0
  %2476 = vdwg.mxu0
  %2478 = vrot.lane.b32.xlu0 %v2305, 32
  %v2479 = vpop.permute.xlu0 %2478
  %v2480 = vsel %vm669, %v2479, 0
  %2482 = vmatprep.subr.mxu0 0.0
  %2483 = vmatpush1.msra.mxu0 %v660
  %2484 = vmatprep.subr.mxu0 0.0
  %2485 = vmatpush1.msra.mxu0 %v661
  %2486 = vmatprep.subr.mxu0 0.0
  %2487 = vmatpush1.msra.mxu0 %v662
  %2488 = vmatprep.subr.mxu0 0.0
  %2489 = vmatpush1.msra.mxu0 %v663
  %2490 = vmatprep.subr.mxu0 0.0
  %2491 = vmatpush1.msra.mxu0 0.0
  %2492 = vmatprep.subr.mxu0 0.0
  %2493 = vmatpush1.msra.mxu0 0.0
  %2494 = vmatprep.subr.mxu0 0.0
  %2495 = vmatpush1.msra.mxu0 0.0
  %2496 = vmatprep.subr.mxu0 0.0
  %2497 = vmatpush1.msra.mxu0 0.0
  %2498 = vmatprep.subr.mxu0 0.0
  %2499 = vmatpush1.msra.mxu0 0.0
  %2500 = vmatprep.subr.mxu0 0.0
  %2501 = vmatpush1.msra.mxu0 0.0
  %2502 = vmatprep.subr.mxu0 0.0
  %2503 = vmatpush1.msra.mxu0 0.0
  %2504 = vmatprep.subr.mxu0 0.0
  %2505 = vmatpush1.msra.mxu0 0.0
  %2506 = vmatprep.subr.mxu0 0.0
  %2507 = vmatpush1.msra.mxu0 0.0
  %2508 = vmatprep.subr.mxu0 0.0
  %2509 = vmatpush1.msra.mxu0 0.0
  %2510 = vmatprep.subr.mxu0 0.0
  %2511 = vmatpush1.msra.mxu0 0.0
  %2512 = vmatprep.subr.mxu0 0.0
  %2513 = vmatpush1.msra.mxu0 0.0
  %2514 = vmatprep.subr.mxu0 0.0
  %2515 = vmatpush1.msra.mxu0 0.0
  %2516 = vmatprep.subr.mxu0 0.0
  %2517 = vmatpush1.msra.mxu0 0.0
  %2518 = vmatprep.subr.mxu0 0.0
  %2519 = vmatpush1.msra.mxu0 0.0
  %2520 = vmatprep.subr.mxu0 0.0
  %2521 = vmatpush1.msra.mxu0 0.0
  %2522 = vmatprep.subr.mxu0 0.0
  %2523 = vmatpush1.msra.mxu0 0.0
  %2524 = vmatprep.subr.mxu0 0.0
  %2525 = vmatpush1.msra.mxu0 0.0
  %2526 = vmatprep.subr.mxu0 0.0
  %2527 = vmatpush1.msra.mxu0 0.0
  %2528 = vmatprep.subr.mxu0 0.0
  %2529 = vmatpush1.msra.mxu0 0.0
  %2530 = vmatprep.subr.mxu0 0.0
  %2531 = vmatpush1.msra.mxu0 0.0
  %2532 = vmatprep.subr.mxu0 0.0
  %2533 = vmatpush1.msra.mxu0 0.0
  %2534 = vmatprep.subr.mxu0 0.0
  %2535 = vmatpush1.msra.mxu0 0.0
  %2536 = vmatprep.subr.mxu0 0.0
  %2537 = vmatpush1.msra.mxu0 0.0
  %2538 = vmatprep.subr.mxu0 0.0
  %2539 = vmatpush1.msra.mxu0 0.0
  %2540 = vmatprep.subr.mxu0 0.0
  %2541 = vmatpush1.msra.mxu0 0.0
  %2542 = vmatprep.subr.mxu0 0.0
  %2543 = vmatpush1.msra.mxu0 0.0
  %2544 = vmatprep.subr.mxu0 0.0
  %2545 = vmatpush1.msra.mxu0 0.0
  %2546 = vmatprep.mubr.f32.mxu0 0.0
  %2547 = vmatmul.mubr.f32.gmra.mrb[0].mxu0 %v2480
  %v2548 = vpop.f32.mrb[0].mxu0
  %v2549 = vadd.f32 0.0, %v2548
  %v2550 = vpop.f32.mrb[0].mxu0
  %2551 = vdwg.mxu0
  %v2552 = vadd.f32 %v2474, %v2549
  %v2553 = vtanh.pop %v2552
  %v2554 = vxor.u32 %v2552, 2147483648
  %v2555 = vmul.f32 %v2554, 1.442695
  %v2556 = vpow.pop %v2555
  %v2557 = vadd.f32 %v2556, 1.0
  %v2558 = vrcp.pop %v2557
  %v2559 = vmul.f32 1.0, %v2558
  %v2560 = vsel %vm36, %v2553, %v2559
  %v2561 = vmul.f32 %v2560, %v2299
  %2563 = vrot.lane.b32.xlu0 %v2560, 64
  %v2564 = vpop.permute.xlu0 %2563
  %v2566 = vmul.f32 %v2560, %v2564
  %2568 = vrot.lane.b32.xlu0 %v2566, 32
  %v2569 = vpop.permute.xlu0 %2568
  %v2571 = vadd.f32 %v2561, %v2569
  %v2572 = vtanh.pop %v2571
  %2574 = vrot.lane.b32.xlu0 %v2572, 64
  %v2575 = vpop.permute.xlu0 %2574
  %v2577 = vmul.f32 %v2560, %v2575
  %2578 = vmatprep.subr.mxu0 0.0
  %2579 = vmatpush1.msra.mxu0 %v656
  %2580 = vmatprep.subr.mxu0 0.0
  %2581 = vmatpush1.msra.mxu0 %v657
  %2582 = vmatprep.subr.mxu0 0.0
  %2583 = vmatpush1.msra.mxu0 %v658
  %2584 = vmatprep.subr.mxu0 0.0
  %2585 = vmatpush1.msra.mxu0 %v659
  %2586 = vmatprep.subr.mxu0 0.0
  %2587 = vmatpush1.msra.mxu0 0.0
  %2588 = vmatprep.subr.mxu0 0.0
  %2589 = vmatpush1.msra.mxu0 0.0
  %2590 = vmatprep.subr.mxu0 0.0
  %2591 = vmatpush1.msra.mxu0 0.0
  %2592 = vmatprep.subr.mxu0 0.0
  %2593 = vmatpush1.msra.mxu0 0.0
  %2594 = vmatprep.subr.mxu0 0.0
  %2595 = vmatpush1.msra.mxu0 0.0
  %2596 = vmatprep.subr.mxu0 0.0
  %2597 = vmatpush1.msra.mxu0 0.0
  %2598 = vmatprep.subr.mxu0 0.0
  %2599 = vmatpush1.msra.mxu0 0.0
  %2600 = vmatprep.subr.mxu0 0.0
  %2601 = vmatpush1.msra.mxu0 0.0
  %2602 = vmatprep.subr.mxu0 0.0
  %2603 = vmatpush1.msra.mxu0 0.0
  %2604 = vmatprep.subr.mxu0 0.0
  %2605 = vmatpush1.msra.mxu0 0.0
  %2606 = vmatprep.subr.mxu0 0.0
  %2607 = vmatpush1.msra.mxu0 0.0
  %2608 = vmatprep.subr.mxu0 0.0
  %2609 = vmatpush1.msra.mxu0 0.0
  %2610 = vmatprep.subr.mxu0 0.0
  %2611 = vmatpush1.msra.mxu0 0.0
  %2612 = vmatprep.subr.mxu0 0.0
  %2613 = vmatpush1.msra.mxu0 0.0
  %2614 = vmatprep.subr.mxu0 0.0
  %2615 = vmatpush1.msra.mxu0 0.0
  %2616 = vmatprep.subr.mxu0 0.0
  %2617 = vmatpush1.msra.mxu0 0.0
  %2618 = vmatprep.subr.mxu0 0.0
  %2619 = vmatpush1.msra.mxu0 0.0
  %2620 = vmatprep.subr.mxu0 0.0
  %2621 = vmatpush1.msra.mxu0 0.0
  %2622 = vmatprep.subr.mxu0 0.0
  %2623 = vmatpush1.msra.mxu0 0.0
  %2624 = vmatprep.subr.mxu0 0.0
  %2625 = vmatpush1.msra.mxu0 0.0
  %2626 = vmatprep.subr.mxu0 0.0
  %2627 = vmatpush1.msra.mxu0 0.0
  %2628 = vmatprep.subr.mxu0 0.0
  %2629 = vmatpush1.msra.mxu0 0.0
  %2630 = vmatprep.subr.mxu0 0.0
  %2631 = vmatpush1.msra.mxu0 0.0
  %2632 = vmatprep.subr.mxu0 0.0
  %2633 = vmatpush1.msra.mxu0 0.0
  %2634 = vmatprep.subr.mxu0 0.0
  %2635 = vmatpush1.msra.mxu0 0.0
  %2636 = vmatprep.subr.mxu0 0.0
  %2637 = vmatpush1.msra.mxu0 0.0
  %2638 = vmatprep.subr.mxu0 0.0
  %2639 = vmatpush1.msra.mxu0 0.0
  %2640 = vmatprep.subr.mxu0 0.0
  %2641 = vmatpush1.msra.mxu0 0.0
  %2642 = vmatprep.mubr.f32.mxu0 0.0
  %2643 = vmatmul.mubr.f32.gmra.mrb[0].mxu0 %v2405
  %v2644 = vpop.f32.mrb[0].mxu0
  %v2645 = vadd.f32 0.0, %v2644
  %v2646 = vpop.f32.mrb[0].mxu0
  %2647 = vdwg.mxu0
  %v2648 = vadd.f32 %v653, %v2645
  %v2649 = vtanh.pop %v2648
  %v2650 = vxor.u32 %v2648, 2147483648
  %v2651 = vmul.f32 %v2650, 1.442695
  %v2652 = vpow.pop %v2651
  %v2653 = vadd.f32 %v2652, 1.0
  %v2654 = vrcp.pop %v2653
  %v2655 = vmul.f32 1.0, %v2654
  %v2656 = vsel %vm36, %v2649, %v2655
  %v2657 = vmul.f32 %v2656, %v2395
  %2659 = vrot.lane.b32.xlu0 %v2656, 64
  %v2660 = vpop.permute.xlu0 %2659
  %v2662 = vmul.f32 %v2656, %v2660
  %2664 = vrot.lane.b32.xlu0 %v2662, 32
  %v2665 = vpop.permute.xlu0 %2664
  %v2667 = vadd.f32 %v2657, %v2665
  %v2668 = vtanh.pop %v2667
  %2670 = vrot.lane.b32.xlu0 %v2668, 64
  %v2671 = vpop.permute.xlu0 %2670
  %v2673 = vmul.f32 %v2656, %v2671
  %2675 = vrot.lane.b32.xlu0 %v2673, 32
  %v2676 = vpop.permute.xlu0 %2675
  %v2677 = vsel %vm669, %v2676, 0
  %2679 = vmatprep.subr.mxu0 0.0
  %2680 = vmatpush1.msra.mxu0 %v664
  %2681 = vmatprep.subr.mxu0 0.0
  %2682 = vmatpush1.msra.mxu0 %v665
  %2683 = vmatprep.subr.mxu0 0.0
  %2684 = vmatpush1.msra.mxu0 %v666
  %2685 = vmatprep.subr.mxu0 0.0
  %2686 = vmatpush1.msra.mxu0 %v667
  %2687 = vmatprep.subr.mxu0 0.0
  %2688 = vmatpush1.msra.mxu0 0.0
  %2689 = vmatprep.subr.mxu0 0.0
  %2690 = vmatpush1.msra.mxu0 0.0
  %2691 = vmatprep.subr.mxu0 0.0
  %2692 = vmatpush1.msra.mxu0 0.0
  %2693 = vmatprep.subr.mxu0 0.0
  %2694 = vmatpush1.msra.mxu0 0.0
  %2695 = vmatprep.subr.mxu0 0.0
  %2696 = vmatpush1.msra.mxu0 0.0
  %2697 = vmatprep.subr.mxu0 0.0
  %2698 = vmatpush1.msra.mxu0 0.0
  %2699 = vmatprep.subr.mxu0 0.0
  %2700 = vmatpush1.msra.mxu0 0.0
  %2701 = vmatprep.subr.mxu0 0.0
  %2702 = vmatpush1.msra.mxu0 0.0
  %2703 = vmatprep.subr.mxu0 0.0
  %2704 = vmatpush1.msra.mxu0 0.0
  %2705 = vmatprep.subr.mxu0 0.0
  %2706 = vmatpush1.msra.mxu0 0.0
  %2707 = vmatprep.subr.mxu0 0.0
  %2708 = vmatpush1.msra.mxu0 0.0
  %2709 = vmatprep.subr.mxu0 0.0
  %2710 = vmatpush1.msra.mxu0 0.0
  %2711 = vmatprep.subr.mxu0 0.0
  %2712 = vmatpush1.msra.mxu0 0.0
  %2713 = vmatprep.subr.mxu0 0.0
  %2714 = vmatpush1.msra.mxu0 0.0
  %2715 = vmatprep.subr.mxu0 0.0
  %2716 = vmatpush1.msra.mxu0 0.0
  %2717 = vmatprep.subr.mxu0 0.0
  %2718 = vmatpush1.msra.mxu0 0.0
  %2719 = vmatprep.subr.mxu0 0.0
  %2720 = vmatpush1.msra.mxu0 0.0
  %2721 = vmatprep.subr.mxu0 0.0
  %2722 = vmatpush1.msra.mxu0 0.0
  %2723 = vmatprep.subr.mxu0 0.0
  %2724 = vmatpush1.msra.mxu0 0.0
  %2725 = vmatprep.subr.mxu0 0.0
  %2726 = vmatpush1.msra.mxu0 0.0
  %2727 = vmatprep.subr.mxu0 0.0
  %2728 = vmatpush1.msra.mxu0 0.0
  %2729 = vmatprep.subr.mxu0 0.0
  %2730 = vmatpush1.msra.mxu0 0.0
  %2731 = vmatprep.subr.mxu0 0.0
  %2732 = vmatpush1.msra.mxu0 0.0
  %2733 = vmatprep.subr.mxu0 0.0
  %2734 = vmatpush1.msra.mxu0 0.0
  %2735 = vmatprep.subr.mxu0 0.0
  %2736 = vmatpush1.msra.mxu0 0.0
  %2737 = vmatprep.subr.mxu0 0.0
  %2738 = vmatpush1.msra.mxu0 0.0
  %2739 = vmatprep.subr.mxu0 0.0
  %2740 = vmatpush1.msra.mxu0 0.0
  %2741 = vmatprep.subr.mxu0 0.0
  %2742 = vmatpush1.msra.mxu0 0.0
  %2743 = vmatprep.mubr.f32.mxu0 0.0
  %2744 = vmatmul.mubr.f32.gmra.mrb[0].mxu0 %v2677
  %v2745 = vpop.f32.mrb[0].mxu0
  %v2746 = vadd.f32 %v773, %v2745
  %v2747 = vpop.f32.mrb[0].mxu0
  %2748 = vdwg.mxu0
  %2750 = vrot.lane.b32.xlu0 %v2577, 32
  %v2751 = vpop.permute.xlu0 %2750
  %v2752 = vsel %vm669, %v2751, 0
  %2754 = vmatprep.subr.mxu0 0.0
  %2755 = vmatpush1.msra.mxu0 %v660
  %2756 = vmatprep.subr.mxu0 0.0
  %2757 = vmatpush1.msra.mxu0 %v661
  %2758 = vmatprep.subr.mxu0 0.0
  %2759 = vmatpush1.msra.mxu0 %v662
  %2760 = vmatprep.subr.mxu0 0.0
  %2761 = vmatpush1.msra.mxu0 %v663
  %2762 = vmatprep.subr.mxu0 0.0
  %2763 = vmatpush1.msra.mxu0 0.0
  %2764 = vmatprep.subr.mxu0 0.0
  %2765 = vmatpush1.msra.mxu0 0.0
  %2766 = vmatprep.subr.mxu0 0.0
  %2767 = vmatpush1.msra.mxu0 0.0
  %2768 = vmatprep.subr.mxu0 0.0
  %2769 = vmatpush1.msra.mxu0 0.0
  %2770 = vmatprep.subr.mxu0 0.0
  %2771 = vmatpush1.msra.mxu0 0.0
  %2772 = vmatprep.subr.mxu0 0.0
  %2773 = vmatpush1.msra.mxu0 0.0
  %2774 = vmatprep.subr.mxu0 0.0
  %2775 = vmatpush1.msra.mxu0 0.0
  %2776 = vmatprep.subr.mxu0 0.0
  %2777 = vmatpush1.msra.mxu0 0.0
  %2778 = vmatprep.subr.mxu0 0.0
  %2779 = vmatpush1.msra.mxu0 0.0
  %2780 = vmatprep.subr.mxu0 0.0
  %2781 = vmatpush1.msra.mxu0 0.0
  %2782 = vmatprep.subr.mxu0 0.0
  %2783 = vmatpush1.msra.mxu0 0.0
  %2784 = vmatprep.subr.mxu0 0.0
  %2785 = vmatpush1.msra.mxu0 0.0
  %2786 = vmatprep.subr.mxu0 0.0
  %2787 = vmatpush1.msra.mxu0 0.0
  %2788 = vmatprep.subr.mxu0 0.0
  %2789 = vmatpush1.msra.mxu0 0.0
  %2790 = vmatprep.subr.mxu0 0.0
  %2791 = vmatpush1.msra.mxu0 0.0
  %2792 = vmatprep.subr.mxu0 0.0
  %2793 = vmatpush1.msra.mxu0 0.0
  %2794 = vmatprep.subr.mxu0 0.0
  %2795 = vmatpush1.msra.mxu0 0.0
  %2796 = vmatprep.subr.mxu0 0.0
  %2797 = vmatpush1.msra.mxu0 0.0
  %2798 = vmatprep.subr.mxu0 0.0
  %2799 = vmatpush1.msra.mxu0 0.0
  %2800 = vmatprep.subr.mxu0 0.0
  %2801 = vmatpush1.msra.mxu0 0.0
  %2802 = vmatprep.subr.mxu0 0.0
  %2803 = vmatpush1.msra.mxu0 0.0
  %2804 = vmatprep.subr.mxu0 0.0
  %2805 = vmatpush1.msra.mxu0 0.0
  %2806 = vmatprep.subr.mxu0 0.0
  %2807 = vmatpush1.msra.mxu0 0.0
  %2808 = vmatprep.subr.mxu0 0.0
  %2809 = vmatpush1.msra.mxu0 0.0
  %2810 = vmatprep.subr.mxu0 0.0
  %2811 = vmatpush1.msra.mxu0 0.0
  %2812 = vmatprep.subr.mxu0 0.0
  %2813 = vmatpush1.msra.mxu0 0.0
  %2814 = vmatprep.subr.mxu0 0.0
  %2815 = vmatpush1.msra.mxu0 0.0
  %2816 = vmatprep.subr.mxu0 0.0
  %2817 = vmatpush1.msra.mxu0 0.0
  %2818 = vmatprep.mubr.f32.mxu0 0.0
  %2819 = vmatmul.mubr.f32.gmra.mrb[0].mxu0 %v2752
  %v2820 = vpop.f32.mrb[0].mxu0
  %v2821 = vadd.f32 0.0, %v2820
  %v2822 = vpop.f32.mrb[0].mxu0
  %2823 = vdwg.mxu0
  %v2824 = vadd.f32 %v2746, %v2821
  %v2825 = vtanh.pop %v2824
  %v2826 = vxor.u32 %v2824, 2147483648
  %v2827 = vmul.f32 %v2826, 1.442695
  %v2828 = vpow.pop %v2827
  %v2829 = vadd.f32 %v2828, 1.0
  %v2830 = vrcp.pop %v2829
  %v2831 = vmul.f32 1.0, %v2830
  %v2832 = vsel %vm36, %v2825, %v2831
  %v2833 = vmul.f32 %v2832, %v2571
  %2835 = vrot.lane.b32.xlu0 %v2832, 64
  %v2836 = vpop.permute.xlu0 %2835
  %v2838 = vmul.f32 %v2832, %v2836
  %2840 = vrot.lane.b32.xlu0 %v2838, 32
  %v2841 = vpop.permute.xlu0 %2840
  %v2843 = vadd.f32 %v2833, %v2841
  %v2844 = vtanh.pop %v2843
  %2846 = vrot.lane.b32.xlu0 %v2844, 64
  %v2847 = vpop.permute.xlu0 %2846
  %v2849 = vmul.f32 %v2832, %v2847
  %v2850 = vld [vmem:[%s8] sm:$0xf]
  %v2851 = vld [vmem:[%s7] sm:$0xff]
  %v2852 = vld [vmem:[%s7 + $0x8] sm:$0xff]
  %v2853 = vld [vmem:[%s7 + $0x10] sm:$0xff]
  %v2854 = vld [vmem:[%s7 + $0x18] sm:$0xff]
  %v2855 = vld [vmem:[%s7 + $0x20] sm:$0xff]
  %v2856 = vld [vmem:[%s7 + $0x28] sm:$0xff]
  %v2857 = vld [vmem:[%s7 + $0x30] sm:$0xff]
  %v2858 = vld [vmem:[%s7 + $0x38] sm:$0xff]
  %v2859 = vld [vmem:[%s7 + $0x40] sm:$0xff]
  %v2860 = vld [vmem:[%s7 + $0x48] sm:$0xff]
  %v2861 = vld [vmem:[%s7 + $0x50] sm:$0xff]
  %v2862 = vld [vmem:[%s7 + $0x58] sm:$0xff]
  %v2863 = vld [vmem:[%s7 + $0x60] sm:$0xff]
  %v2864 = vld [vmem:[%s7 + $0x68] sm:$0xff]
  %v2865 = vld [vmem:[%s7 + $0x70] sm:$0xff]
  %v2866 = vld [vmem:[%s7 + $0x78] sm:$0xff]
  %2867 = vmatprep.subr.mxu0 %v2852
  %2868 = vmatpush1.msra.mxu0 %v2851
  %2869 = vmatprep.subr.mxu0 %v2856
  %2870 = vmatpush1.msra.mxu0 %v2855
  %2871 = vmatprep.subr.mxu0 %v2860
  %2872 = vmatpush1.msra.mxu0 %v2859
  %2873 = vmatprep.subr.mxu0 %v2864
  %2874 = vmatpush1.msra.mxu0 %v2863
  %2875 = vmatprep.subr.mxu0 0.0
  %2876 = vmatpush1.msra.mxu0 0.0
  %2877 = vmatprep.subr.mxu0 0.0
  %2878 = vmatpush1.msra.mxu0 0.0
  %2879 = vmatprep.subr.mxu0 0.0
  %2880 = vmatpush1.msra.mxu0 0.0
  %2881 = vmatprep.subr.mxu0 0.0
  %2882 = vmatpush1.msra.mxu0 0.0
  %2883 = vmatprep.subr.mxu0 0.0
  %2884 = vmatpush1.msra.mxu0 0.0
  %2885 = vmatprep.subr.mxu0 0.0
  %2886 = vmatpush1.msra.mxu0 0.0
  %2887 = vmatprep.subr.mxu0 0.0
  %2888 = vmatpush1.msra.mxu0 0.0
  %2889 = vmatprep.subr.mxu0 0.0
  %2890 = vmatpush1.msra.mxu0 0.0
  %2891 = vmatprep.subr.mxu0 0.0
  %2892 = vmatpush1.msra.mxu0 0.0
  %2893 = vmatprep.subr.mxu0 0.0
  %2894 = vmatpush1.msra.mxu0 0.0
  %2895 = vmatprep.subr.mxu0 0.0
  %2896 = vmatpush1.msra.mxu0 0.0
  %2897 = vmatprep.subr.mxu0 0.0
  %2898 = vmatpush1.msra.mxu0 0.0
  %2899 = vmatprep.subr.mxu0 0.0
  %2900 = vmatpush1.msra.mxu0 0.0
  %2901 = vmatprep.subr.mxu0 0.0
  %2902 = vmatpush1.msra.mxu0 0.0
  %2903 = vmatprep.subr.mxu0 0.0
  %2904 = vmatpush1.msra.mxu0 0.0
  %2905 = vmatprep.subr.mxu0 0.0
  %2906 = vmatpush1.msra.mxu0 0.0
  %2907 = vmatprep.subr.mxu0 0.0
  %2908 = vmatpush1.msra.mxu0 0.0
  %2909 = vmatprep.subr.mxu0 0.0
  %2910 = vmatpush1.msra.mxu0 0.0
  %2911 = vmatprep.subr.mxu0 0.0
  %2912 = vmatpush1.msra.mxu0 0.0
  %2913 = vmatprep.subr.mxu0 0.0
  %2914 = vmatpush1.msra.mxu0 0.0
  %2915 = vmatprep.subr.mxu0 0.0
  %2916 = vmatpush1.msra.mxu0 0.0
  %2917 = vmatprep.subr.mxu0 0.0
  %2918 = vmatpush1.msra.mxu0 0.0
  %2919 = vmatprep.subr.mxu0 0.0
  %2920 = vmatpush1.msra.mxu0 0.0
  %2921 = vmatprep.subr.mxu0 0.0
  %2922 = vmatpush1.msra.mxu0 0.0
  %2923 = vmatprep.subr.mxu0 0.0
  %2924 = vmatpush1.msra.mxu0 0.0
  %2925 = vmatprep.subr.mxu0 0.0
  %2926 = vmatpush1.msra.mxu0 0.0
  %2927 = vmatprep.subr.mxu0 0.0
  %2928 = vmatpush1.msra.mxu0 0.0
  %2929 = vmatprep.subr.mxu0 0.0
  %2930 = vmatpush1.msra.mxu0 0.0
  %2931 = vmatprep.mubr.f32.mxu0 0.0
  %2932 = vmatmul.mubr.f32.gmra.mrb[0].mxu0 %v2677
  %v2933 = vpop.f32.mrb[0].mxu0
  %v2934 = vadd.f32 0.0, %v2933
  %v2935 = vpop.f32.mrb[0].mxu0
  %v2936 = vadd.f32 0.0, %v2935
  %2937 = vdwg.mxu0
  %2938 = vmatprep.subr.mxu0 %v2854
  %2939 = vmatpush1.msra.mxu0 %v2853
  %2940 = vmatprep.subr.mxu0 %v2858
  %2941 = vmatpush1.msra.mxu0 %v2857
  %2942 = vmatprep.subr.mxu0 %v2862
  %2943 = vmatpush1.msra.mxu0 %v2861
  %2944 = vmatprep.subr.mxu0 %v2866
  %2945 = vmatpush1.msra.mxu0 %v2865
  %2946 = vmatprep.subr.mxu0 0.0
  %2947 = vmatpush1.msra.mxu0 0.0
  %2948 = vmatprep.subr.mxu0 0.0
  %2949 = vmatpush1.msra.mxu0 0.0
  %2950 = vmatprep.subr.mxu0 0.0
  %2951 = vmatpush1.msra.mxu0 0.0
  %2952 = vmatprep.subr.mxu0 0.0
  %2953 = vmatpush1.msra.mxu0 0.0
  %2954 = vmatprep.subr.mxu0 0.0
  %2955 = vmatpush1.msra.mxu0 0.0
  %2956 = vmatprep.subr.mxu0 0.0
  %2957 = vmatpush1.msra.mxu0 0.0
  %2958 = vmatprep.subr.mxu0 0.0
  %2959 = vmatpush1.msra.mxu0 0.0
  %2960 = vmatprep.subr.mxu0 0.0
  %2961 = vmatpush1.msra.mxu0 0.0
  %2962 = vmatprep.subr.mxu0 0.0
  %2963 = vmatpush1.msra.mxu0 0.0
  %2964 = vmatprep.subr.mxu0 0.0
  %2965 = vmatpush1.msra.mxu0 0.0
  %2966 = vmatprep.subr.mxu0 0.0
  %2967 = vmatpush1.msra.mxu0 0.0
  %2968 = vmatprep.subr.mxu0 0.0
  %2969 = vmatpush1.msra.mxu0 0.0
  %2970 = vmatprep.subr.mxu0 0.0
  %2971 = vmatpush1.msra.mxu0 0.0
  %2972 = vmatprep.subr.mxu0 0.0
  %2973 = vmatpush1.msra.mxu0 0.0
  %2974 = vmatprep.subr.mxu0 0.0
  %2975 = vmatpush1.msra.mxu0 0.0
  %2976 = vmatprep.subr.mxu0 0.0
  %2977 = vmatpush1.msra.mxu0 0.0
  %2978 = vmatprep.subr.mxu0 0.0
  %2979 = vmatpush1.msra.mxu0 0.0
  %2980 = vmatprep.subr.mxu0 0.0
  %2981 = vmatpush1.msra.mxu0 0.0
  %2982 = vmatprep.subr.mxu0 0.0
  %2983 = vmatpush1.msra.mxu0 0.0
  %2984 = vmatprep.subr.mxu0 0.0
  %2985 = vmatpush1.msra.mxu0 0.0
  %2986 = vmatprep.subr.mxu0 0.0
  %2987 = vmatpush1.msra.mxu0 0.0
  %2988 = vmatprep.subr.mxu0 0.0
  %2989 = vmatpush1.msra.mxu0 0.0
  %2990 = vmatprep.subr.mxu0 0.0
  %2991 = vmatpush1.msra.mxu0 0.0
  %2992 = vmatprep.subr.mxu0 0.0
  %2993 = vmatpush1.msra.mxu0 0.0
  %2994 = vmatprep.subr.mxu0 0.0
  %2995 = vmatpush1.msra.mxu0 0.0
  %2996 = vmatprep.subr.mxu0 0.0
  %2997 = vmatpush1.msra.mxu0 0.0
  %2998 = vmatprep.subr.mxu0 0.0
  %2999 = vmatpush1.msra.mxu0 0.0
  %3000 = vmatprep.subr.mxu0 0.0
  %3001 = vmatpush1.msra.mxu0 0.0
  %3002 = vmatprep.mubr.f32.mxu0 0.0
  %3003 = vmatmul.mubr.f32.gmra.mrb[0].mxu0 %v2677
  %v3004 = vpop.f32.mrb[0].mxu0
  %v3005 = vadd.f32 0.0, %v3004
  %v3006 = vpop.f32.mrb[0].mxu0
  %v3007 = vadd.f32 0.0, %v3006
  %3008 = vdwg.mxu0
  %v3010 = vlaneseq
  %v3011 = vshrl.u32 %v3010, 7
  %v3012 = vsub.s32 0, %v3011
  %v3013 = vrot.slane %v2850, %v3012
  %v3014 = vlaneseq
  %v3015 = vshrl.u32 %v3014, 7
  %v3016 = vsub.s32 1, %v3015
  %v3017 = vrot.slane %v2850, %v3016
  %v3018 = vlaneseq
  %v3019 = vshrl.u32 %v3018, 7
  %v3020 = vsub.s32 2, %v3019
  %v3021 = vrot.slane %v2850, %v3020
  %v3022 = vlaneseq
  %v3023 = vshrl.u32 %v3022, 7
  %v3024 = vsub.s32 3, %v3023
  %v3025 = vrot.slane %v2850, %v3024
  %v3030 = vadd.f32 %v3013, %v2934
  %v3031 = vadd.f32 %v3017, %v2936
  %v3032 = vadd.f32 %v3021, %v3005
  %v3033 = vadd.f32 %v3025, %v3007
  %v3034 = vld [vmem:[%s7 + $0x80] sm:$0xff]
  %v3035 = vld [vmem:[%s7 + $0x88] sm:$0xff]
  %v3036 = vld [vmem:[%s7 + $0x90] sm:$0xff]
  %v3037 = vld [vmem:[%s7 + $0x98] sm:$0xff]
  %v3038 = vld [vmem:[%s7 + $0xa0] sm:$0xff]
  %v3039 = vld [vmem:[%s7 + $0xa8] sm:$0xff]
  %v3040 = vld [vmem:[%s7 + $0xb0] sm:$0xff]
  %v3041 = vld [vmem:[%s7 + $0xb8] sm:$0xff]
  %v3042 = vld [vmem:[%s7 + $0xc0] sm:$0xff]
  %v3043 = vld [vmem:[%s7 + $0xc8] sm:$0xff]
  %v3044 = vld [vmem:[%s7 + $0xd0] sm:$0xff]
  %v3045 = vld [vmem:[%s7 + $0xd8] sm:$0xff]
  %v3046 = vld [vmem:[%s7 + $0xe0] sm:$0xff]
  %v3047 = vld [vmem:[%s7 + $0xe8] sm:$0xff]
  %v3048 = vld [vmem:[%s7 + $0xf0] sm:$0xff]
  %v3049 = vld [vmem:[%s7 + $0xf8] sm:$0xff]
  %3051 = vrot.lane.b32.xlu0 %v2849, 32
  %v3052 = vpop.permute.xlu0 %3051
  %v3053 = vsel %vm669, %v3052, 0
  %3055 = vmatprep.subr.mxu0 %v3035
  %3056 = vmatpush1.msra.mxu0 %v3034
  %3057 = vmatprep.subr.mxu0 %v3039
  %3058 = vmatpush1.msra.mxu0 %v3038
  %3059 = vmatprep.subr.mxu0 %v3043
  %3060 = vmatpush1.msra.mxu0 %v3042
  %3061 = vmatprep.subr.mxu0 %v3047
  %3062 = vmatpush1.msra.mxu0 %v3046
  %3063 = vmatprep.subr.mxu0 0.0
  %3064 = vmatpush1.msra.mxu0 0.0
  %3065 = vmatprep.subr.mxu0 0.0
  %3066 = vmatpush1.msra.mxu0 0.0
  %3067 = vmatprep.subr.mxu0 0.0
  %3068 = vmatpush1.msra.mxu0 0.0
  %3069 = vmatprep.subr.mxu0 0.0
  %3070 = vmatpush1.msra.mxu0 0.0
  %3071 = vmatprep.subr.mxu0 0.0
  %3072 = vmatpush1.msra.mxu0 0.0
  %3073 = vmatprep.subr.mxu0 0.0
  %3074 = vmatpush1.msra.mxu0 0.0
  %3075 = vmatprep.subr.mxu0 0.0
  %3076 = vmatpush1.msra.mxu0 0.0
  %3077 = vmatprep.subr.mxu0 0.0
  %3078 = vmatpush1.msra.mxu0 0.0
  %3079 = vmatprep.subr.mxu0 0.0
  %3080 = vmatpush1.msra.mxu0 0.0
  %3081 = vmatprep.subr.mxu0 0.0
  %3082 = vmatpush1.msra.mxu0 0.0
  %3083 = vmatprep.subr.mxu0 0.0
  %3084 = vmatpush1.msra.mxu0 0.0
  %3085 = vmatprep.subr.mxu0 0.0
  %3086 = vmatpush1.msra.mxu0 0.0
  %3087 = vmatprep.subr.mxu0 0.0
  %3088 = vmatpush1.msra.mxu0 0.0
  %3089 = vmatprep.subr.mxu0 0.0
  %3090 = vmatpush1.msra.mxu0 0.0
  %3091 = vmatprep.subr.mxu0 0.0
  %3092 = vmatpush1.msra.mxu0 0.0
  %3093 = vmatprep.subr.mxu0 0.0
  %3094 = vmatpush1.msra.mxu0 0.0
  %3095 = vmatprep.subr.mxu0 0.0
  %3096 = vmatpush1.msra.mxu0 0.0
  %3097 = vmatprep.subr.mxu0 0.0
  %3098 = vmatpush1.msra.mxu0 0.0
  %3099 = vmatprep.subr.mxu0 0.0
  %3100 = vmatpush1.msra.mxu0 0.0
  %3101 = vmatprep.subr.mxu0 0.0
  %3102 = vmatpush1.msra.mxu0 0.0
  %3103 = vmatprep.subr.mxu0 0.0
  %3104 = vmatpush1.msra.mxu0 0.0
  %3105 = vmatprep.subr.mxu0 0.0
  %3106 = vmatpush1.msra.mxu0 0.0
  %3107 = vmatprep.subr.mxu0 0.0
  %3108 = vmatpush1.msra.mxu0 0.0
  %3109 = vmatprep.subr.mxu0 0.0
  %3110 = vmatpush1.msra.mxu0 0.0
  %3111 = vmatprep.subr.mxu0 0.0
  %3112 = vmatpush1.msra.mxu0 0.0
  %3113 = vmatprep.subr.mxu0 0.0
  %3114 = vmatpush1.msra.mxu0 0.0
  %3115 = vmatprep.subr.mxu0 0.0
  %3116 = vmatpush1.msra.mxu0 0.0
  %3117 = vmatprep.subr.mxu0 0.0
  %3118 = vmatpush1.msra.mxu0 0.0
  %3119 = vmatprep.mubr.f32.mxu0 0.0
  %3120 = vmatmul.mubr.f32.gmra.mrb[0].mxu0 %v3053
  %v3121 = vpop.f32.mrb[0].mxu0
  %v3122 = vadd.f32 0.0, %v3121
  %v3123 = vpop.f32.mrb[0].mxu0
  %v3124 = vadd.f32 0.0, %v3123
  %3125 = vdwg.mxu0
  %3126 = vmatprep.subr.mxu0 %v3037
  %3127 = vmatpush1.msra.mxu0 %v3036
  %3128 = vmatprep.subr.mxu0 %v3041
  %3129 = vmatpush1.msra.mxu0 %v3040
  %3130 = vmatprep.subr.mxu0 %v3045
  %3131 = vmatpush1.msra.mxu0 %v3044
  %3132 = vmatprep.subr.mxu0 %v3049
  %3133 = vmatpush1.msra.mxu0 %v3048
  %3134 = vmatprep.subr.mxu0 0.0
  %3135 = vmatpush1.msra.mxu0 0.0
  %3136 = vmatprep.subr.mxu0 0.0
  %3137 = vmatpush1.msra.mxu0 0.0
  %3138 = vmatprep.subr.mxu0 0.0
  %3139 = vmatpush1.msra.mxu0 0.0
  %3140 = vmatprep.subr.mxu0 0.0
  %3141 = vmatpush1.msra.mxu0 0.0
  %3142 = vmatprep.subr.mxu0 0.0
  %3143 = vmatpush1.msra.mxu0 0.0
  %3144 = vmatprep.subr.mxu0 0.0
  %3145 = vmatpush1.msra.mxu0 0.0
  %3146 = vmatprep.subr.mxu0 0.0
  %3147 = vmatpush1.msra.mxu0 0.0
  %3148 = vmatprep.subr.mxu0 0.0
  %3149 = vmatpush1.msra.mxu0 0.0
  %3150 = vmatprep.subr.mxu0 0.0
  %3151 = vmatpush1.msra.mxu0 0.0
  %3152 = vmatprep.subr.mxu0 0.0
  %3153 = vmatpush1.msra.mxu0 0.0
  %3154 = vmatprep.subr.mxu0 0.0
  %3155 = vmatpush1.msra.mxu0 0.0
  %3156 = vmatprep.subr.mxu0 0.0
  %3157 = vmatpush1.msra.mxu0 0.0
  %3158 = vmatprep.subr.mxu0 0.0
  %3159 = vmatpush1.msra.mxu0 0.0
  %3160 = vmatprep.subr.mxu0 0.0
  %3161 = vmatpush1.msra.mxu0 0.0
  %3162 = vmatprep.subr.mxu0 0.0
  %3163 = vmatpush1.msra.mxu0 0.0
  %3164 = vmatprep.subr.mxu0 0.0
  %3165 = vmatpush1.msra.mxu0 0.0
  %3166 = vmatprep.subr.mxu0 0.0
  %3167 = vmatpush1.msra.mxu0 0.0
  %3168 = vmatprep.subr.mxu0 0.0
  %3169 = vmatpush1.msra.mxu0 0.0
  %3170 = vmatprep.subr.mxu0 0.0
  %3171 = vmatpush1.msra.mxu0 0.0
  %3172 = vmatprep.subr.mxu0 0.0
  %3173 = vmatpush1.msra.mxu0 0.0
  %3174 = vmatprep.subr.mxu0 0.0
  %3175 = vmatpush1.msra.mxu0 0.0
  %3176 = vmatprep.subr.mxu0 0.0
  %3177 = vmatpush1.msra.mxu0 0.0
  %3178 = vmatprep.subr.mxu0 0.0
  %3179 = vmatpush1.msra.mxu0 0.0
  %3180 = vmatprep.subr.mxu0 0.0
  %3181 = vmatpush1.msra.mxu0 0.0
  %3182 = vmatprep.subr.mxu0 0.0
  %3183 = vmatpush1.msra.mxu0 0.0
  %3184 = vmatprep.subr.mxu0 0.0
  %3185 = vmatpush1.msra.mxu0 0.0
  %3186 = vmatprep.subr.mxu0 0.0
  %3187 = vmatpush1.msra.mxu0 0.0
  %3188 = vmatprep.subr.mxu0 0.0
  %3189 = vmatpush1.msra.mxu0 0.0
  %3190 = vmatprep.mubr.f32.mxu0 0.0
  %3191 = vmatmul.mubr.f32.gmra.mrb[0].mxu0 %v3053
  %v3192 = vpop.f32.mrb[0].mxu0
  %v3193 = vadd.f32 0.0, %v3192
  %v3194 = vpop.f32.mrb[0].mxu0
  %v3195 = vadd.f32 0.0, %v3194
  %3196 = vdwg.mxu0
  %v3197 = vadd.f32 %v3030, %v3122
  %v3198 = vadd.f32 %v3031, %v3124
  %v3199 = vadd.f32 %v3032, %v3193
  %v3200 = vadd.f32 %v3033, %v3195
  %v3201 = vmax.f32 %v3197, %v3198
  %v3202 = vmax.f32 %v3199, %v3200
  %v3203 = vmax.f32 %v3201, %v3202
  %3204 = vmax.xlane.f32.xlu0 %v3203
  %v3205 = vpop.xlane.xlu0 %3204
  %v3206 = vsub.f32 %v3197, %v3205
  %v3207 = vsub.f32 %v3198, %v3205
  %v3208 = vsub.f32 %v3199, %v3205
  %v3209 = vsub.f32 %v3200, %v3205
  %v3210 = vmul.f32 %v3206, 1.442695
  %v3211 = vpow.pop %v3210
  %v3212 = vmul.f32 %v3207, 1.442695
  %v3213 = vpow.pop %v3212
  %v3214 = vmul.f32 %v3208, 1.442695
  %v3215 = vpow.pop %v3214
  %v3216 = vmul.f32 %v3209, 1.442695
  %v3217 = vpow.pop %v3216
  %v3218 = vadd.f32 %v3211, %v3213
  %v3219 = vadd.f32 %v3218, %v3215
  %v3220 = vadd.f32 %v3219, %v3217
  %3221 = vadd.xlane.f32.xlu0 %v3220
  %v3222 = vpop.xlane.xlu0 %3221
  %v3223 = vrcp.pop %v3222
  %v3224 = vmul.f32 %v3211, %v3223
  %v3225 = vmul.f32 %v3213, %v3223
  %v3226 = vmul.f32 %v3215, %v3223
  %v3227 = vmul.f32 %v3217, %v3223
  %v3228 = vlaneseq
  %v3229 = vshrl.u32 %v3228, 7
  %vm3230 = vcmp.lt.s32.totalorder %v3229, 2
  %v3231 = vsel %vm3230, %v3224, 0.0
  %v3232 = vsel %vm3230, %v3225, 0.0
  %v3233 = vsel %vm3230, %v3226, 0.0
  %v3234 = vsel %vm3230, %v3227, 0.0
  %v3235 = vadd.f32 %v3231, %v3232
  %v3236 = vadd.f32 %v3235, %v3233
  %v3237 = vadd.f32 %v3236, %v3234
  %3238 = vadd.xlane.f32.xlu0 %v3237
  %v3239 = vpop.xlane.xlu0 %3238
  %v3240 = vrot.slane %v3239, 4
  %v3241 = vadd.f32 %v3239, %v3240
  %v3242 = vrot.slane %v3241, 2
  %v3243 = vadd.f32 %v3241, %v3242
  %v3244 = vrot.slane %v3243, 1
  %v3245 = vadd.f32 %v3243, %v3244
  %s3246 = vtos %v3245
  %p3247 = scmp.gt.f32.partialorder %s3246, 1.0
  %s3248 = scalar_select %p3247, %s3246, 1.0
  %v3249 = vstv %s3248
  %v3250 = vrcp.pop %v3249
  %v3251 = vmul.f32 %v3224, %v3250
  %v3252 = vmul.f32 %v3225, %v3250
  %v3253 = vmul.f32 %v3226, %v3250
  %v3254 = vmul.f32 %v3227, %v3250
  %v3255 = vsel %vm3230, %v3251, 0.0
  %v3256 = vsel %vm3230, %v3252, 0.0
  %v3257 = vsel %vm3230, %v3253, 0.0
  %v3258 = vsel %vm3230, %v3254, 0.0
  %v3259 = vadd.f32 %v3255, %v3256
  %v3260 = vadd.f32 %v3259, %v3257
  %v3261 = vadd.f32 %v3260, %v3258
  %3262 = vadd.xlane.f32.xlu0 %v3261
  %v3263 = vpop.xlane.xlu0 %3262
  %v3264 = vrot.slane %v3263, 4
  %v3265 = vadd.f32 %v3263, %v3264
  %v3266 = vrot.slane %v3265, 2
  %v3267 = vadd.f32 %v3265, %v3266
  %v3268 = vrot.slane %v3267, 1
  %v3269 = vadd.f32 %v3267, %v3268
  %s3270 = vtos %v3269
  %p3271 = scmp.gt.f32.partialorder %s3270, 1.0
  %s3272 = scalar_select %p3271, %s3270, 1.0
  %v3273 = vstv %s3272
  %v3274 = vrcp.pop %v3273
  %v3275 = vmul.f32 %v3251, %v3274
  %v3276 = vmul.f32 %v3252, %v3274
  %v3277 = vmul.f32 %v3253, %v3274
  %v3278 = vmul.f32 %v3254, %v3274
  %v3279 = vsel %vm3230, %v3275, 0.0
  %v3280 = vsel %vm3230, %v3276, 0.0
  %v3281 = vsel %vm3230, %v3277, 0.0
  %v3282 = vsel %vm3230, %v3278, 0.0
  %v3283 = vadd.f32 %v3279, %v3280
  %v3284 = vadd.f32 %v3283, %v3281
  %v3285 = vadd.f32 %v3284, %v3282
  %3286 = vadd.xlane.f32.xlu0 %v3285
  %v3287 = vpop.xlane.xlu0 %3286
  %v3288 = vrot.slane %v3287, 4
  %v3289 = vadd.f32 %v3287, %v3288
  %v3290 = vrot.slane %v3289, 2
  %v3291 = vadd.f32 %v3289, %v3290
  %v3292 = vrot.slane %v3291, 1
  %v3293 = vadd.f32 %v3291, %v3292
  %s3294 = vtos %v3293
  %p3295 = scmp.gt.f32.partialorder %s3294, 1.0
  %s3296 = scalar_select %p3295, %s3294, 1.0
  %v3297 = vstv %s3296
  %v3298 = vrcp.pop %v3297
  %v3299 = vmul.f32 %v3275, %v3298
  %v3300 = vmul.f32 %v3276, %v3298
  %v3301 = vmul.f32 %v3277, %v3298
  %v3302 = vmul.f32 %v3278, %v3298
  %3303 = vst [vmem:[%s9] sm:$0xff] %v3299
  %3304 = vst [vmem:[%s9 + $0x8] sm:$0xff] %v3300
  %3305 = vst [vmem:[%s9 + $0x10] sm:$0xff] %v3301
  %3306 = vst [vmem:[%s9 + $0x18] sm:$0xff] %v3302
  // Predicated region
  $region38: #{deep_portfolio_forward.1} parent=0 // pred_check
    _
  $region39: #{deep_portfolio_forward.1} parent=0 // pred_check_branch
    %3308 = sbr.rel (0) target = $region41
  $region40: #{deep_portfolio_forward.1} parent=0 // pred_region
    _
  $region41: #{deep_portfolio_forward.1} parent=0 // pred_fallthru
    _
  // Predicated region
  $region42: #{deep_portfolio_forward.1} parent=0 // pred_check
    _
  $region43: #{deep_portfolio_forward.1} parent=0 // pred_check_branch
    %3310 = sbr.rel (0) target = $region45
  $region44: #{deep_portfolio_forward.1} parent=0 // pred_region
    _
  $region45: #{deep_portfolio_forward.1} parent=0 // pred_fallthru
    _

</llo_original>
